<compile_context>
chip_gen: v5e
topology: v5e:2x2
jax: 0.10.0
libtpu: 0.0.40
codegen_flags: <defaults>
</compile_context>

<pallas_src>
import functools

import jax
import jax.numpy as jnp
from jax.experimental import pallas as pl
from jax.experimental.pallas import tpu as pltpu


def _pad2d(x, pad):
    """Zero-pad the last two dims of a (C, H, W) value inside the kernel (VMEM only)."""
    if pad == 0:
        return x
    c, h, w = x.shape
    zw = jnp.zeros((c, h, pad), x.dtype)
    x = jnp.concatenate([zw, x, zw], axis=2)
    zh = jnp.zeros((c, pad, w + 2 * pad), x.dtype)
    return jnp.concatenate([zh, x, zh], axis=1)


def _conv_block_kernel(*refs, KH, KW, Ho, Wo, stride, padding, dilation,
                       is_skip, is_norm, eps, mxu_dtype, batch_block):
    if is_skip:
        xt_ref, xo_ref, w_ref, b_ref, o_ref = refs
    else:
        xt_ref, w_ref, b_ref, o_ref = refs
        xo_ref = None

    hw = Ho * Wo
    inv_hw = 1.0 / float(hw)

    w_mat = w_ref[...]                               # (Cout, KH*KW*Cin), mxu_dtype
    bias = b_ref[...].astype(jnp.float32)            # (Cout, 1)

    for b in range(batch_block):                     # static unroll; batch_block is small
        x = xt_ref[b].astype(jnp.float32)            # (Cin, H, W)
        if is_skip:
            x = x + xo_ref[b].astype(jnp.float32)    # skip-add in f32
        xp = _pad2d(x, padding)                      # (Cin, Hp, Wp)

        # im2col: K = KH*KW*Cin rows, each row a shifted input plane flattened to lanes.
        cols = []
        for kh in range(KH):
            for kw in range(KW):
                h0 = kh * dilation
                w0 = kw * dilation
                win = xp[:, h0:h0 + stride * (Ho - 1) + 1:stride,
                            w0:w0 + stride * (Wo - 1) + 1:stride]     # (Cin, Ho, Wo)
                cols.append(win.reshape(win.shape[0], hw))
        patches = jnp.concatenate(cols, axis=0).astype(mxu_dtype)     # (K, Ho*Wo)

        # Single MXU contraction: (Cout, K) x (K, Ho*Wo) -> (Cout, Ho*Wo), f32 accumulate.
        acc = jax.lax.dot_general(
            w_mat, patches, dimension_numbers=(((1,), (0,)), ((), ())),
            preferred_element_type=jnp.float32)
        acc = acc + bias                                              # lane-dense add

        if is_norm:
            # InstanceNorm2d (affine=False, biased variance), single-pass statistics.
            s = jnp.sum(acc, axis=1, keepdims=True)
            ss = jnp.sum(acc * acc, axis=1, keepdims=True)
            mean = s * inv_hw
            var = jnp.maximum(ss * inv_hw - mean * mean, 0.0)
            scale = jax.lax.rsqrt(var + eps)                          # (Cout, 1), EUP
            shift = -mean * scale
            acc = acc * scale + shift                                 # one per-channel affine

        acc = jnp.maximum(acc, 0.0)  # TODO(synk): select_act_func unknown; ReLU assumed.

        o_ref[b] = acc.astype(o_ref.dtype)                            # lane-dense store


def _pick_batch_block(n, bytes_per_image, budget_bytes=4 * 1024 * 1024, cap=8):
    bb = max(1, min(n, cap, budget_bytes // max(bytes_per_image, 1)))
    while n % bb:
        bb -= 1
    return bb


def conv_block(x_top, x_old, weight, bias, *, stride=1, padding=1, dilation=1,
               groups=1, is_skip=True, is_norm=True, eps=1e-5,
               mxu_dtype=None, batch_block=None):
    """ConvBlock forward. x_top/x_old are NCHW, weight is OIHW (PyTorch layout)."""
    assert groups == 1, "TODO(synk): grouped conv not implemented"
    N, Cin, H, W = x_top.shape
    Cout, Cin_w, KH, KW = weight.shape
    assert Cin_w == Cin

    Ho = (H + 2 * padding - dilation * (KH - 1) - 1) // stride + 1
    Wo = (W + 2 * padding - dilation * (KW - 1) - 1) // stride + 1

    if mxu_dtype is None:
        mxu_dtype = x_top.dtype
    if bias is None:
        bias = jnp.zeros((Cout,), x_top.dtype)

    # Weight as a single im2col matmul matrix: (Cout, KH*KW*Cin), tap-major / cin-minor
    # (matches the in-kernel patch row ordering).  Bias as a (Cout, 1) column.
    w_mat = jnp.transpose(weight, (0, 2, 3, 1)).reshape(Cout, KH * KW * Cin)
    w_mat = w_mat.astype(mxu_dtype)
    b_col = bias.reshape(Cout, 1).astype(jnp.float32)

    itemsize = jnp.dtype(x_top.dtype).itemsize
    per_image = ((2 if is_skip else 1) * Cin * H * W + Cout * Ho * Wo) * itemsize
    if batch_block is None:
        batch_block = _pick_batch_block(N, per_image)
    assert N % batch_block == 0

    kernel = functools.partial(
        _conv_block_kernel, KH=KH, KW=KW, Ho=Ho, Wo=Wo, stride=stride,
        padding=padding, dilation=dilation, is_skip=is_skip, is_norm=is_norm,
        eps=eps, mxu_dtype=mxu_dtype, batch_block=batch_block)

    x_spec = pl.BlockSpec((batch_block, Cin, H, W), lambda n: (n, 0, 0, 0))
    in_specs = [x_spec]
    inputs = [x_top]
    if is_skip:
        in_specs.append(x_spec)
        inputs.append(x_old)
    in_specs += [
        pl.BlockSpec((Cout, KH * KW * Cin), lambda n: (0, 0)),
        pl.BlockSpec((Cout, 1), lambda n: (0, 0)),
    ]
    inputs += [w_mat, b_col]

    out_flat = pl.pallas_call(
        kernel,
        out_shape=jax.ShapeDtypeStruct((N, Cout, Ho * Wo), x_top.dtype),
        grid_spec=pltpu.PrefetchScalarGridSpec(
            num_scalar_prefetch=0,
            grid=(N // batch_block,),
            in_specs=in_specs,
            out_specs=pl.BlockSpec((batch_block, Cout, Ho * Wo),
                                   lambda n: (n, 0, 0)),
        ),
        compiler_params=pltpu.CompilerParams(
            dimension_semantics=("parallel",),
            vmem_limit_bytes=32 * 1024 * 1024),
    )(*inputs)

    # Free (contiguous) reshape back to NCHW.
    return out_flat.reshape(N, Cout, Ho, Wo)


def _reference(x_top, x_old, weight, bias, *, stride=1, padding=1, dilation=1,
               is_skip=True, is_norm=True, eps=1e-5):
    x = x_top + x_old if is_skip else x_top
    y = jax.lax.conv_general_dilated(
        x, weight, window_strides=(stride, stride),
        padding=((padding, padding), (padding, padding)),
        rhs_dilation=(dilation, dilation),
        dimension_numbers=("NCHW", "OIHW", "NCHW"))
    y = y + bias[None, :, None, None]
    if is_norm:
        m = y.mean(axis=(2, 3), keepdims=True)
        v = ((y - m) ** 2).mean(axis=(2, 3), keepdims=True)
        y = (y - m) * jax.lax.rsqrt(v + eps)
    return jnp.maximum(y, 0.0)


if __name__ == "__main__":
    key = jax.random.PRNGKey(0)
    k1, k2, k3, k4 = jax.random.split(key, 4)

    N, Cin, H, W = 2, 4, 16, 16
    Cout, KH, KW = 8, 3, 3

    x_top = jax.random.normal(k1, (N, Cin, H, W), jnp.float32)
    x_old = jax.random.normal(k2, (N, Cin, H, W), jnp.float32)
    weight = jax.random.normal(k3, (Cout, Cin, KH, KW), jnp.float32) * 0.1
    bias0 = jnp.zeros((Cout,), jnp.float32)                 # nn.init.constant_(bias, 0.0)
    bias_nz = jax.random.normal(k4, (Cout,), jnp.float32) * 0.1

    # 1) f32 path, skip + InstanceNorm (matches the reference config).
    out = conv_block(x_top, x_old, weight, bias0,
                     stride=1, padding=1, is_skip=True, is_norm=True)
    out = jax.block_until_ready(out)
    assert out.shape == (N, Cout, H, W), out.shape
    ref = _reference(x_top, x_old, weight, bias0, is_skip=True, is_norm=True)
    assert bool(jnp.allclose(out, ref, atol=1e-4, rtol=1e-4)), "f32 skip+norm mismatch"

    # 2) f32 path, no skip (x_old never DMA'd), no norm, non-zero bias.
    out2 = conv_block(x_top, None, weight, bias_nz,
                      stride=1, padding=1, is_skip=False, is_norm=False)
    out2 = jax.block_until_ready(out2)
    ref2 = _reference(x_top, None, weight, bias_nz, is_skip=False, is_norm=False)
    assert bool(jnp.allclose(out2, ref2, atol=1e-4, rtol=1e-4)), "f32 no-skip mismatch"

    # 3) bf16 MXU operands (f32 accumulation / stats), loose tolerance.
    out3 = conv_block(x_top, x_old, weight, bias0,
                      stride=1, padding=1, is_skip=True, is_norm=True,
                      mxu_dtype=jnp.bfloat16)
    out3 = jax.block_until_ready(out3)
    assert bool(jnp.allclose(out3, ref, atol=1e-1, rtol=1e-1)), "bf16 MXU path mismatch"

    print("KERNEL_OK")
</pallas_src>

<mosaic_0001>
module attributes {stable_mosaic.version = 11 : i64} {
  func.func @_conv_block_kernel(%arg0: i32, %arg1: memref<2x4x16x16xf32, #tpu.memory_space<vmem>>, %arg2: memref<2x4x16x16xf32, #tpu.memory_space<vmem>>, %arg3: memref<8x36xf32, #tpu.memory_space<vmem>>, %arg4: memref<8x1xf32, #tpu.memory_space<vmem>>, %arg5: memref<2x8x256xf32, #tpu.memory_space<vmem>>) attributes {dimension_semantics = [#tpu.dimension_semantics<parallel>], iteration_bounds = array<i64: 1>, scalar_prefetch = 0 : i64, scratch_operands = 0 : i64, tpu.core_type = #tpu.core_type<tc>, window_params = [{transform_indices = @transform_0, window_bounds = array<i64: 2, 4, 16, 16>}, {transform_indices = @transform_1, window_bounds = array<i64: 2, 4, 16, 16>}, {pipeline_mode = #tpu.pipeline_mode<synchronous>, transform_indices = @transform_2, window_bounds = array<i64: 8, 36>}, {pipeline_mode = #tpu.pipeline_mode<synchronous>, transform_indices = @transform_3, window_bounds = array<i64: 8, 1>}, {transform_indices = @transform_4, window_bounds = array<i64: 2, 8, 256>}]} {
    %c0 = arith.constant 0 : index
    %c0_0 = arith.constant 0 : index
    %0 = vector.load %arg3[%c0, %c0_0] : memref<8x36xf32, #tpu.memory_space<vmem>>, vector<8x36xf32>
    %c0_1 = arith.constant 0 : index
    %c0_2 = arith.constant 0 : index
    %1 = vector.load %arg4[%c0_1, %c0_2] : memref<8x1xf32, #tpu.memory_space<vmem>>, vector<8x1xf32>
    %c0_3 = arith.constant 0 : index
    %c0_4 = arith.constant 0 : index
    %c0_5 = arith.constant 0 : index
    %c0_6 = arith.constant 0 : index
    %2 = vector.load %arg1[%c0_3, %c0_4, %c0_5, %c0_6] : memref<2x4x16x16xf32, #tpu.memory_space<vmem>>, vector<1x4x16x16xf32>
    %3 = vector.shape_cast %2 : vector<1x4x16x16xf32> to vector<4x16x16xf32>
    %c0_7 = arith.constant 0 : index
    %c0_8 = arith.constant 0 : index
    %c0_9 = arith.constant 0 : index
    %c0_10 = arith.constant 0 : index
    %4 = vector.load %arg2[%c0_7, %c0_8, %c0_9, %c0_10] : memref<2x4x16x16xf32, #tpu.memory_space<vmem>>, vector<1x4x16x16xf32>
    %5 = vector.shape_cast %4 : vector<1x4x16x16xf32> to vector<4x16x16xf32>
    %6 = arith.addf %3, %5 : vector<4x16x16xf32>
    %cst = arith.constant 0.000000e+00 : f32
    %7 = vector.broadcast %cst : f32 to vector<4x16x1xf32>
    %8 = tpu.concatenate %7, %6, %7 in 2 : vector<4x16x1xf32>, vector<4x16x16xf32>, vector<4x16x1xf32> -> vector<4x16x18xf32>
    %cst_11 = arith.constant 0.000000e+00 : f32
    %9 = vector.broadcast %cst_11 : f32 to vector<4x1x18xf32>
    %10 = tpu.concatenate %9, %8, %9 in 1 : vector<4x1x18xf32>, vector<4x16x18xf32>, vector<4x1x18xf32> -> vector<4x18x18xf32>
    %11 = vector.extract_strided_slice %10 {offsets = [0, 0, 0], sizes = [4, 16, 16], strides = [1, 1, 1]} : vector<4x18x18xf32> to vector<4x16x16xf32>
    %12 = vector.shape_cast %11 : vector<4x16x16xf32> to vector<4x256xf32>
    %13 = vector.extract_strided_slice %10 {offsets = [0, 0, 1], sizes = [4, 16, 16], strides = [1, 1, 1]} : vector<4x18x18xf32> to vector<4x16x16xf32>
    %14 = vector.shape_cast %13 : vector<4x16x16xf32> to vector<4x256xf32>
    %15 = vector.extract_strided_slice %10 {offsets = [0, 0, 2], sizes = [4, 16, 16], strides = [1, 1, 1]} : vector<4x18x18xf32> to vector<4x16x16xf32>
    %16 = vector.shape_cast %15 : vector<4x16x16xf32> to vector<4x256xf32>
    %17 = vector.extract_strided_slice %10 {offsets = [0, 1, 0], sizes = [4, 16, 16], strides = [1, 1, 1]} : vector<4x18x18xf32> to vector<4x16x16xf32>
    %18 = vector.shape_cast %17 : vector<4x16x16xf32> to vector<4x256xf32>
    %19 = vector.extract_strided_slice %10 {offsets = [0, 1, 1], sizes = [4, 16, 16], strides = [1, 1, 1]} : vector<4x18x18xf32> to vector<4x16x16xf32>
    %20 = vector.shape_cast %19 : vector<4x16x16xf32> to vector<4x256xf32>
    %21 = vector.extract_strided_slice %10 {offsets = [0, 1, 2], sizes = [4, 16, 16], strides = [1, 1, 1]} : vector<4x18x18xf32> to vector<4x16x16xf32>
    %22 = vector.shape_cast %21 : vector<4x16x16xf32> to vector<4x256xf32>
    %23 = vector.extract_strided_slice %10 {offsets = [0, 2, 0], sizes = [4, 16, 16], strides = [1, 1, 1]} : vector<4x18x18xf32> to vector<4x16x16xf32>
    %24 = vector.shape_cast %23 : vector<4x16x16xf32> to vector<4x256xf32>
    %25 = vector.extract_strided_slice %10 {offsets = [0, 2, 1], sizes = [4, 16, 16], strides = [1, 1, 1]} : vector<4x18x18xf32> to vector<4x16x16xf32>
    %26 = vector.shape_cast %25 : vector<4x16x16xf32> to vector<4x256xf32>
    %27 = vector.extract_strided_slice %10 {offsets = [0, 2, 2], sizes = [4, 16, 16], strides = [1, 1, 1]} : vector<4x18x18xf32> to vector<4x16x16xf32>
    %28 = vector.shape_cast %27 : vector<4x16x16xf32> to vector<4x256xf32>
    %29 = tpu.concatenate %12, %14, %16, %18, %20, %22, %24, %26, %28 in 0 : vector<4x256xf32>, vector<4x256xf32>, vector<4x256xf32>, vector<4x256xf32>, vector<4x256xf32>, vector<4x256xf32>, vector<4x256xf32>, vector<4x256xf32>, vector<4x256xf32> -> vector<36x256xf32>
    %cst_12 = arith.constant dense<0.000000e+00> : vector<8x256xf32>
    %30 = tpu.matmul %0, %29, %cst_12 {dimension_numbers = #tpu.dot_dimension_numbers<[1], [0], [0], [1], [0, 0, 1, 1], [], []>} : vector<8x36xf32>, vector<36x256xf32>, vector<8x256xf32> -> vector<8x256xf32>
    %31 = vector.broadcast %1 : vector<8x1xf32> to vector<8x256xf32>
    %32 = arith.addf %30, %31 : vector<8x256xf32>
    %cst_13 = arith.constant dense<0.000000e+00> : vector<8xf32>
    %33 = vector.multi_reduction <add>, %32, %cst_13 [1] : vector<8x256xf32> to vector<8xf32>
    %34 = vector.shape_cast %33 : vector<8xf32> to vector<8x1xf32>
    %35 = arith.mulf %32, %32 : vector<8x256xf32>
    %cst_14 = arith.constant dense<0.000000e+00> : vector<8xf32>
    %36 = vector.multi_reduction <add>, %35, %cst_14 [1] : vector<8x256xf32> to vector<8xf32>
    %37 = vector.shape_cast %36 : vector<8xf32> to vector<8x1xf32>
    %cst_15 = arith.constant 3.906250e-03 : f32
    %38 = vector.broadcast %cst_15 : f32 to vector<8x1xf32>
    %39 = arith.mulf %34, %38 : vector<8x1xf32>
    %cst_16 = arith.constant 3.906250e-03 : f32
    %40 = vector.broadcast %cst_16 : f32 to vector<8x1xf32>
    %41 = arith.mulf %37, %40 : vector<8x1xf32>
    %42 = arith.mulf %39, %39 : vector<8x1xf32>
    %43 = arith.subf %41, %42 : vector<8x1xf32>
    %cst_17 = arith.constant 0.000000e+00 : f32
    %44 = vector.broadcast %cst_17 : f32 to vector<8x1xf32>
    %45 = arith.maximumf %43, %44 : vector<8x1xf32>
    %cst_18 = arith.constant 9.99999974E-6 : f32
    %46 = vector.broadcast %cst_18 : f32 to vector<8x1xf32>
    %47 = arith.addf %45, %46 : vector<8x1xf32>
    %48 = math.rsqrt %47 : vector<8x1xf32>
    %cst_19 = arith.constant 0.000000e+00 : f32
    %49 = vector.broadcast %cst_19 : f32 to vector<8x1xf32>
    %50 = arith.subf %49, %39 : vector<8x1xf32>
    %51 = arith.mulf %50, %48 : vector<8x1xf32>
    %52 = vector.broadcast %48 : vector<8x1xf32> to vector<8x256xf32>
    %53 = arith.mulf %32, %52 : vector<8x256xf32>
    %54 = vector.broadcast %51 : vector<8x1xf32> to vector<8x256xf32>
    %55 = arith.addf %53, %54 : vector<8x256xf32>
    %cst_20 = arith.constant 0.000000e+00 : f32
    %56 = vector.broadcast %cst_20 : f32 to vector<8x256xf32>
    %57 = arith.maximumf %55, %56 : vector<8x256xf32>
    %c0_21 = arith.constant 0 : index
    %c0_22 = arith.constant 0 : index
    %c0_23 = arith.constant 0 : index
    %58 = vector.load %arg5[%c0_21, %c0_22, %c0_23] : memref<2x8x256xf32, #tpu.memory_space<vmem>>, vector<1x8x256xf32>
    %59 = vector.shape_cast %58 : vector<1x8x256xf32> to vector<8x256xf32>
    %60 = vector.shape_cast %57 : vector<8x256xf32> to vector<1x8x256xf32>
    tpu.vector_store %arg5[%c0_21, %c0_22, %c0_23], %60 {strides = array<i32>} : memref<2x8x256xf32, #tpu.memory_space<vmem>>, vector<1x8x256xf32>,
    %c1 = arith.constant 1 : index
    %c0_24 = arith.constant 0 : index
    %c0_25 = arith.constant 0 : index
    %c0_26 = arith.constant 0 : index
    %61 = vector.load %arg1[%c1, %c0_24, %c0_25, %c0_26] : memref<2x4x16x16xf32, #tpu.memory_space<vmem>>, vector<1x4x16x16xf32>
    %62 = vector.shape_cast %61 : vector<1x4x16x16xf32> to vector<4x16x16xf32>
    %c1_27 = arith.constant 1 : index
    %c0_28 = arith.constant 0 : index
    %c0_29 = arith.constant 0 : index
    %c0_30 = arith.constant 0 : index
    %63 = vector.load %arg2[%c1_27, %c0_28, %c0_29, %c0_30] : memref<2x4x16x16xf32, #tpu.memory_space<vmem>>, vector<1x4x16x16xf32>
    %64 = vector.shape_cast %63 : vector<1x4x16x16xf32> to vector<4x16x16xf32>
    %65 = arith.addf %62, %64 : vector<4x16x16xf32>
    %cst_31 = arith.constant 0.000000e+00 : f32
    %66 = vector.broadcast %cst_31 : f32 to vector<4x16x1xf32>
    %67 = tpu.concatenate %66, %65, %66 in 2 : vector<4x16x1xf32>, vector<4x16x16xf32>, vector<4x16x1xf32> -> vector<4x16x18xf32>
    %cst_32 = arith.constant 0.000000e+00 : f32
    %68 = vector.broadcast %cst_32 : f32 to vector<4x1x18xf32>
    %69 = tpu.concatenate %68, %67, %68 in 1 : vector<4x1x18xf32>, vector<4x16x18xf32>, vector<4x1x18xf32> -> vector<4x18x18xf32>
    %70 = vector.extract_strided_slice %69 {offsets = [0, 0, 0], sizes = [4, 16, 16], strides = [1, 1, 1]} : vector<4x18x18xf32> to vector<4x16x16xf32>
    %71 = vector.shape_cast %70 : vector<4x16x16xf32> to vector<4x256xf32>
    %72 = vector.extract_strided_slice %69 {offsets = [0, 0, 1], sizes = [4, 16, 16], strides = [1, 1, 1]} : vector<4x18x18xf32> to vector<4x16x16xf32>
    %73 = vector.shape_cast %72 : vector<4x16x16xf32> to vector<4x256xf32>
    %74 = vector.extract_strided_slice %69 {offsets = [0, 0, 2], sizes = [4, 16, 16], strides = [1, 1, 1]} : vector<4x18x18xf32> to vector<4x16x16xf32>
    %75 = vector.shape_cast %74 : vector<4x16x16xf32> to vector<4x256xf32>
    %76 = vector.extract_strided_slice %69 {offsets = [0, 1, 0], sizes = [4, 16, 16], strides = [1, 1, 1]} : vector<4x18x18xf32> to vector<4x16x16xf32>
    %77 = vector.shape_cast %76 : vector<4x16x16xf32> to vector<4x256xf32>
    %78 = vector.extract_strided_slice %69 {offsets = [0, 1, 1], sizes = [4, 16, 16], strides = [1, 1, 1]} : vector<4x18x18xf32> to vector<4x16x16xf32>
    %79 = vector.shape_cast %78 : vector<4x16x16xf32> to vector<4x256xf32>
    %80 = vector.extract_strided_slice %69 {offsets = [0, 1, 2], sizes = [4, 16, 16], strides = [1, 1, 1]} : vector<4x18x18xf32> to vector<4x16x16xf32>
    %81 = vector.shape_cast %80 : vector<4x16x16xf32> to vector<4x256xf32>
    %82 = vector.extract_strided_slice %69 {offsets = [0, 2, 0], sizes = [4, 16, 16], strides = [1, 1, 1]} : vector<4x18x18xf32> to vector<4x16x16xf32>
    %83 = vector.shape_cast %82 : vector<4x16x16xf32> to vector<4x256xf32>
    %84 = vector.extract_strided_slice %69 {offsets = [0, 2, 1], sizes = [4, 16, 16], strides = [1, 1, 1]} : vector<4x18x18xf32> to vector<4x16x16xf32>
    %85 = vector.shape_cast %84 : vector<4x16x16xf32> to vector<4x256xf32>
    %86 = vector.extract_strided_slice %69 {offsets = [0, 2, 2], sizes = [4, 16, 16], strides = [1, 1, 1]} : vector<4x18x18xf32> to vector<4x16x16xf32>
    %87 = vector.shape_cast %86 : vector<4x16x16xf32> to vector<4x256xf32>
    %88 = tpu.concatenate %71, %73, %75, %77, %79, %81, %83, %85, %87 in 0 : vector<4x256xf32>, vector<4x256xf32>, vector<4x256xf32>, vector<4x256xf32>, vector<4x256xf32>, vector<4x256xf32>, vector<4x256xf32>, vector<4x256xf32>, vector<4x256xf32> -> vector<36x256xf32>
    %cst_33 = arith.constant dense<0.000000e+00> : vector<8x256xf32>
    %89 = tpu.matmul %0, %88, %cst_33 {dimension_numbers = #tpu.dot_dimension_numbers<[1], [0], [0], [1], [0, 0, 1, 1], [], []>} : vector<8x36xf32>, vector<36x256xf32>, vector<8x256xf32> -> vector<8x256xf32>
    %90 = vector.broadcast %1 : vector<8x1xf32> to vector<8x256xf32>
    %91 = arith.addf %89, %90 : vector<8x256xf32>
    %cst_34 = arith.constant dense<0.000000e+00> : vector<8xf32>
    %92 = vector.multi_reduction <add>, %91, %cst_34 [1] : vector<8x256xf32> to vector<8xf32>
    %93 = vector.shape_cast %92 : vector<8xf32> to vector<8x1xf32>
    %94 = arith.mulf %91, %91 : vector<8x256xf32>
    %cst_35 = arith.constant dense<0.000000e+00> : vector<8xf32>
    %95 = vector.multi_reduction <add>, %94, %cst_35 [1] : vector<8x256xf32> to vector<8xf32>
    %96 = vector.shape_cast %95 : vector<8xf32> to vector<8x1xf32>
    %cst_36 = arith.constant 3.906250e-03 : f32
    %97 = vector.broadcast %cst_36 : f32 to vector<8x1xf32>
    %98 = arith.mulf %93, %97 : vector<8x1xf32>
    %cst_37 = arith.constant 3.906250e-03 : f32
    %99 = vector.broadcast %cst_37 : f32 to vector<8x1xf32>
    %100 = arith.mulf %96, %99 : vector<8x1xf32>
    %101 = arith.mulf %98, %98 : vector<8x1xf32>
    %102 = arith.subf %100, %101 : vector<8x1xf32>
    %cst_38 = arith.constant 0.000000e+00 : f32
    %103 = vector.broadcast %cst_38 : f32 to vector<8x1xf32>
    %104 = arith.maximumf %102, %103 : vector<8x1xf32>
    %cst_39 = arith.constant 9.99999974E-6 : f32
    %105 = vector.broadcast %cst_39 : f32 to vector<8x1xf32>
    %106 = arith.addf %104, %105 : vector<8x1xf32>
    %107 = math.rsqrt %106 : vector<8x1xf32>
    %cst_40 = arith.constant 0.000000e+00 : f32
    %108 = vector.broadcast %cst_40 : f32 to vector<8x1xf32>
    %109 = arith.subf %108, %98 : vector<8x1xf32>
    %110 = arith.mulf %109, %107 : vector<8x1xf32>
    %111 = vector.broadcast %107 : vector<8x1xf32> to vector<8x256xf32>
    %112 = arith.mulf %91, %111 : vector<8x256xf32>
    %113 = vector.broadcast %110 : vector<8x1xf32> to vector<8x256xf32>
    %114 = arith.addf %112, %113 : vector<8x256xf32>
    %cst_41 = arith.constant 0.000000e+00 : f32
    %115 = vector.broadcast %cst_41 : f32 to vector<8x256xf32>
    %116 = arith.maximumf %114, %115 : vector<8x256xf32>
    %c1_42 = arith.constant 1 : index
    %c0_43 = arith.constant 0 : index
    %c0_44 = arith.constant 0 : index
    %117 = vector.load %arg5[%c1_42, %c0_43, %c0_44] : memref<2x8x256xf32, #tpu.memory_space<vmem>>, vector<1x8x256xf32>
    %118 = vector.shape_cast %117 : vector<1x8x256xf32> to vector<8x256xf32>
    %119 = vector.shape_cast %116 : vector<8x256xf32> to vector<1x8x256xf32>
    tpu.vector_store %arg5[%c1_42, %c0_43, %c0_44], %119 {strides = array<i32>} : memref<2x8x256xf32, #tpu.memory_space<vmem>>, vector<1x8x256xf32>,
    return
  }
  func.func @transform_0(%arg0: i32) -> (i32, i32, i32, i32) {
    %c0_i32 = arith.constant 0 : i32
    %c0_i32_0 = arith.constant 0 : i32
    %c0_i32_1 = arith.constant 0 : i32
    %c0_i32_2 = arith.constant 0 : i32
    return %arg0, %c0_i32, %c0_i32_0, %c0_i32_1 : i32, i32, i32, i32
  }
  func.func @transform_1(%arg0: i32) -> (i32, i32, i32, i32) {
    %c0_i32 = arith.constant 0 : i32
    %c0_i32_0 = arith.constant 0 : i32
    %c0_i32_1 = arith.constant 0 : i32
    %c0_i32_2 = arith.constant 0 : i32
    return %arg0, %c0_i32, %c0_i32_0, %c0_i32_1 : i32, i32, i32, i32
  }
  func.func @transform_2(%arg0: i32) -> (i32, i32) {
    %c0_i32 = arith.constant 0 : i32
    %c0_i32_0 = arith.constant 0 : i32
    %c0_i32_1 = arith.constant 0 : i32
    return %c0_i32, %c0_i32_0 : i32, i32
  }
  func.func @transform_3(%arg0: i32) -> (i32, i32) {
    %c0_i32 = arith.constant 0 : i32
    %c0_i32_0 = arith.constant 0 : i32
    %c0_i32_1 = arith.constant 0 : i32
    return %c0_i32, %c0_i32_0 : i32, i32
  }
  func.func @transform_4(%arg0: i32) -> (i32, i32, i32) {
    %c0_i32 = arith.constant 0 : i32
    %c0_i32_0 = arith.constant 0 : i32
    %c0_i32_1 = arith.constant 0 : i32
    return %arg0, %c0_i32, %c0_i32_0 : i32, i32, i32
  }
}

</mosaic_0001>

<llo_original>
// kernel: tpu_custom_call.1
$region0: #{tpu_custom_call.1}
  #allocation0 [shape = 'u32[]', space=smem, size = 0x4, offset = 0x4, fixed_abs, tag = 'smem constant byte address 0x4 - core index']
  #allocation1 [shape = 'u32[72,128]{1,0:T(1,128)}', space=vmem, size = 0x9000, scoped, tag = 'internal scratch']
  %s0 = inlined_call_operand.hbm [shape: f32[2,4,16,16], index: 0, kind: input, shape index: {}]
  %s1 = inlined_call_operand.hbm [shape: f32[2,4,16,16], index: 1, kind: input, shape index: {}]
  %s2 = inlined_call_operand.vmem [shape: f32[8,36], index: 2, kind: input, shape index: {}]
  %s3 = inlined_call_operand.vmem [shape: f32[8,1], index: 3, kind: input, shape index: {}]
  %s4 = inlined_call_operand.hbm [shape: f32[2,8,256], index: 4, kind: output, shape index: {}]
  %s5 = sld [smem:[#allocation0]]
  $region34: #{tpu_custom_call.1} parent=0
    _
  %s7 = ssub.s32 1, %s5
  %s8 = scalar_select 0, %s7, %s5
  $region1: #{tpu_custom_call.1} parent=0
    #allocation2 [shape = 'u8[65536]{0}', space=vmem, size = 0x10000, scoped, tag = 'input window, operand 0, single buffered']
    #allocation3 [shape = 's32[1]{0}', space=sflag, size = 0x4, scoped, tag = 'scoped memory for tpu_custom_call.1']
    #allocation4 [shape = 's32[1]{0}', space=sflag, size = 0x4, scoped, tag = 'scoped memory for tpu_custom_call.1']
    #allocation5 [shape = 'u8[65536]{0}', space=vmem, size = 0x10000, scoped, tag = 'input window, operand 1, single buffered']
    #allocation6 [shape = 's32[1]{0}', space=sflag, size = 0x4, scoped, tag = 'scoped memory for tpu_custom_call.1']
    #allocation7 [shape = 'u8[16384]{0}', space=vmem, size = 0x4000, scoped, tag = 'output window, operand 0, single buffered']
    %9 = vsyncpa [#allocation3], 0
    %10 = vsyncpa [#allocation6], 0
    %11 = vsyncpa [#allocation4], 0
    // Predicated region
    $region2: #{tpu_custom_call.1} parent=1 // pred_check
      _
    $region3: #{tpu_custom_call.1} parent=1 // pred_check_branch
      %13 = sbr.rel (0) target = $region5
    $region4: #{tpu_custom_call.1} parent=1 // pred_region
      %15 = vsyncadd [#allocation3], 0
      %s16 = sshll.u32 %s0, 4
      %s17 = int_to_ptr.hbm [resolvable:$true] %s16
      %s18 = sshll.u32 [#allocation2], 4
      %s19 = int_to_ptr.vmem [resolvable:$true] %s18
      %24 = dma.hbm_to_vmem [thread:$0]  %s17, 2048, %s19, [#allocation3], 128, 128, 8
    $region5: #{tpu_custom_call.1} parent=1 // pred_fallthru
      _
    // Predicated region
    $region6: #{tpu_custom_call.1} parent=1 // pred_check
      _
    $region7: #{tpu_custom_call.1} parent=1 // pred_check_branch
      %26 = sbr.rel (0) target = $region9
    $region8: #{tpu_custom_call.1} parent=1 // pred_region
      %28 = vsyncadd [#allocation6], 0
      %s29 = sshll.u32 %s1, 4
      %s30 = int_to_ptr.hbm [resolvable:$true] %s29
      %s31 = sshll.u32 [#allocation5], 4
      %s32 = int_to_ptr.vmem [resolvable:$true] %s31
      %37 = dma.hbm_to_vmem [thread:$0]  %s30, 2048, %s32, [#allocation6], 128, 128, 8
    $region9: #{tpu_custom_call.1} parent=1 // pred_fallthru
      _
    // Predicated region
    $region10: #{tpu_custom_call.1} parent=1 // pred_check
      _
    $region11: #{tpu_custom_call.1} parent=1 // pred_check_branch
      %39 = sbr.rel (0) target = $region13
    $region12: #{tpu_custom_call.1} parent=1 // pred_region
      _
    $region13: #{tpu_custom_call.1} parent=1 // pred_fallthru
      _
    // Predicated region
    $region14: #{tpu_custom_call.1} parent=1 // pred_check
      _
    $region15: #{tpu_custom_call.1} parent=1 // pred_check_branch
      %41 = sbr.rel (0) target = $region17
    $region16: #{tpu_custom_call.1} parent=1 // pred_region
      _
    $region17: #{tpu_custom_call.1} parent=1 // pred_fallthru
      _
    // Predicated region
    $region18: #{tpu_custom_call.1} parent=1 // pred_check
      _
    $region19: #{tpu_custom_call.1} parent=1 // pred_check_branch
      %43 = sbr.rel (0) target = $region21
    $region20: #{tpu_custom_call.1} parent=1 // pred_region
      %45 = dma.done [#allocation3], 2048
    $region21: #{tpu_custom_call.1} parent=1 // pred_fallthru
      _
    // Predicated region
    $region22: #{tpu_custom_call.1} parent=1 // pred_check
      _
    $region23: #{tpu_custom_call.1} parent=1 // pred_check_branch
      %47 = sbr.rel (0) target = $region25
    $region24: #{tpu_custom_call.1} parent=1 // pred_region
      %49 = dma.done [#allocation6], 2048
    $region25: #{tpu_custom_call.1} parent=1 // pred_fallthru
      _
    %v50 = vld [vmem:[%s2] sm:$0xff]
    %v51 = vld [vmem:[%s3] sm:$0xff]
    %v52 = vld [vmem:[#allocation2] sm:$0xff]
    %v53 = vld [vmem:[#allocation2 + $0x8] sm:$0xff]
    %v54 = vld [vmem:[#allocation2 + $0x10] sm:$0xff]
    %v55 = vld [vmem:[#allocation2 + $0x18] sm:$0xff]
    %v56 = vld [vmem:[#allocation2 + $0x20] sm:$0xff]
    %v57 = vld [vmem:[#allocation2 + $0x28] sm:$0xff]
    %v58 = vld [vmem:[#allocation2 + $0x30] sm:$0xff]
    %v59 = vld [vmem:[#allocation2 + $0x38] sm:$0xff]
    %v60 = vld [vmem:[#allocation5] sm:$0xff]
    %v61 = vld [vmem:[#allocation5 + $0x8] sm:$0xff]
    %v62 = vld [vmem:[#allocation5 + $0x10] sm:$0xff]
    %v63 = vld [vmem:[#allocation5 + $0x18] sm:$0xff]
    %v64 = vld [vmem:[#allocation5 + $0x20] sm:$0xff]
    %v65 = vld [vmem:[#allocation5 + $0x28] sm:$0xff]
    %v66 = vld [vmem:[#allocation5 + $0x30] sm:$0xff]
    %v67 = vld [vmem:[#allocation5 + $0x38] sm:$0xff]
    %v68 = vadd.f32 %v52, %v60
    %v69 = vadd.f32 %v53, %v61
    %v70 = vadd.f32 %v54, %v62
    %v71 = vadd.f32 %v55, %v63
    %v72 = vadd.f32 %v56, %v64
    %v73 = vadd.f32 %v57, %v65
    %v74 = vadd.f32 %v58, %v66
    %v75 = vadd.f32 %v59, %v67
    %84 = vrot.lane.b32.xlu0 %v68, 1
    %v85 = vpop.permute.xlu0 %84
    %86 = vrot.lane.b32.xlu0 %v69, 1
    %v87 = vpop.permute.xlu0 %86
    %88 = vrot.lane.b32.xlu0 %v70, 1
    %v89 = vpop.permute.xlu0 %88
    %90 = vrot.lane.b32.xlu0 %v71, 1
    %v91 = vpop.permute.xlu0 %90
    %92 = vrot.lane.b32.xlu0 %v72, 1
    %v93 = vpop.permute.xlu0 %92
    %94 = vrot.lane.b32.xlu0 %v73, 1
    %v95 = vpop.permute.xlu0 %94
    %96 = vrot.lane.b32.xlu0 %v74, 1
    %v97 = vpop.permute.xlu0 %96
    %98 = vrot.lane.b32.xlu0 %v75, 1
    %v99 = vpop.permute.xlu0 %98
    %vm108 = vcmask 7168
    %v109 = vsel %vm108, 0.0, %v85
    %v110 = vsel %vm108, 0.0, %v87
    %v111 = vsel %vm108, 0.0, %v89
    %v112 = vsel %vm108, 0.0, %v91
    %v113 = vsel %vm108, 0.0, %v93
    %v114 = vsel %vm108, 0.0, %v95
    %v115 = vsel %vm108, 0.0, %v97
    %v116 = vsel %vm108, 0.0, %v99
    %vm117 = vcmask 138240
    %v118 = vsel %vm117, %v109, 0.0
    %v119 = vsel %vm117, %v110, 0.0
    %v120 = vsel %vm117, %v111, 0.0
    %v121 = vsel %vm117, %v112, 0.0
    %v122 = vsel %vm117, %v113, 0.0
    %v123 = vsel %vm117, %v114, 0.0
    %v124 = vsel %vm117, %v115, 0.0
    %v125 = vsel %vm117, %v116, 0.0
    %vm134 = vcmask 1040384
    %v135 = vrot.slane %v118, 7
    %v136 = vrot.slane %v119, 7
    %v137 = vsel %vm134, %v135, %v136
    %v138 = vrot.slane %v120, 7
    %v139 = vrot.slane %v121, 7
    %v140 = vsel %vm134, %v138, %v139
    %v141 = vrot.slane %v122, 7
    %v142 = vrot.slane %v123, 7
    %v143 = vsel %vm134, %v141, %v142
    %v144 = vrot.slane %v124, 7
    %v145 = vrot.slane %v125, 7
    %v146 = vsel %vm134, %v144, %v145
    %v159 = vsel %vm134, 0.0, %v135
    %v160 = vsel %vm134, 0.0, %v138
    %v161 = vsel %vm134, 0.0, %v141
    %v162 = vsel %vm134, 0.0, %v144
    %v163 = vsel %vm134, %v136, 0.0
    %v164 = vsel %vm134, %v139, 0.0
    %v165 = vsel %vm134, %v142, 0.0
    %v166 = vsel %vm134, %v145, 0.0
    %v167 = vrot.slane %v161, 4
    %vm168 = vcmask 1047556
    %v169 = vsel %vm168, %v167, %v159
    %v170 = vrot.slane %v159, 4
    %v171 = vsel %vm168, %v161, %v170
    %v173 = vunpack.c.l.s4 1983009808
    %v174 = vunpack.c.0.s8 %v173
    %v175 = vperm.slane %v169, %v174
    %v177 = vunpack.c.l.s4 1983009808
    %v178 = vunpack.c.0.s8 %v177
    %v179 = vperm.slane %v171, %v178
    %v180 = vrot.slane %v162, 4
    %v181 = vsel %vm168, %v180, %v160
    %v182 = vrot.slane %v160, 4
    %v183 = vsel %vm168, %v162, %v182
    %v185 = vunpack.c.l.s4 1983009808
    %v186 = vunpack.c.0.s8 %v185
    %v187 = vperm.slane %v181, %v186
    %v189 = vunpack.c.l.s4 1983009808
    %v190 = vunpack.c.0.s8 %v189
    %v191 = vperm.slane %v183, %v190
    %v192 = vrot.slane %v187, 4
    %v193 = vsel %vm168, %v192, %v175
    %v194 = vrot.slane %v175, 4
    %v195 = vsel %vm168, %v187, %v194
    %v197 = vunpack.c.l.s4 1934713408
    %v198 = vunpack.c.0.s8 %v197
    %v199 = vperm.slane %v193, %v198
    %v201 = vunpack.c.l.s4 1934713408
    %v202 = vunpack.c.0.s8 %v201
    %v203 = vperm.slane %v195, %v202
    %v204 = vrot.slane %v191, 4
    %v205 = vsel %vm168, %v204, %v179
    %v206 = vrot.slane %v179, 4
    %v207 = vsel %vm168, %v191, %v206
    %v209 = vunpack.c.l.s4 1934713408
    %v210 = vunpack.c.0.s8 %v209
    %v211 = vperm.slane %v205, %v210
    %v213 = vunpack.c.l.s4 1934713408
    %v214 = vunpack.c.0.s8 %v213
    %v215 = vperm.slane %v207, %v214
    %v216 = vrot.slane %v199, 4
    %v217 = vsel %vm168, 0.0, %v216
    %v218 = vrot.slane %v203, 4
    %v219 = vsel %vm168, 0.0, %v218
    %v220 = vrot.slane %v211, 4
    %v221 = vsel %vm168, 0.0, %v220
    %v222 = vrot.slane %v215, 4
    %v223 = vsel %vm168, 0.0, %v222
    %v224 = vrot.slane %v143, 4
    %v225 = vsel %vm168, %v224, %v137
    %v226 = vrot.slane %v137, 4
    %v227 = vsel %vm168, %v143, %v226
    %v229 = vunpack.c.l.s4 1983009808
    %v230 = vunpack.c.0.s8 %v229
    %v231 = vperm.slane %v225, %v230
    %v233 = vunpack.c.l.s4 1983009808
    %v234 = vunpack.c.0.s8 %v233
    %v235 = vperm.slane %v227, %v234
    %v236 = vrot.slane %v146, 4
    %v237 = vsel %vm168, %v236, %v140
    %v238 = vrot.slane %v140, 4
    %v239 = vsel %vm168, %v146, %v238
    %v241 = vunpack.c.l.s4 1983009808
    %v242 = vunpack.c.0.s8 %v241
    %v243 = vperm.slane %v237, %v242
    %v245 = vunpack.c.l.s4 1983009808
    %v246 = vunpack.c.0.s8 %v245
    %v247 = vperm.slane %v239, %v246
    %v248 = vrot.slane %v243, 4
    %v249 = vsel %vm168, %v248, %v231
    %v250 = vrot.slane %v231, 4
    %v251 = vsel %vm168, %v243, %v250
    %v253 = vunpack.c.l.s4 1934713408
    %v254 = vunpack.c.0.s8 %v253
    %v255 = vperm.slane %v249, %v254
    %v257 = vunpack.c.l.s4 1934713408
    %v258 = vunpack.c.0.s8 %v257
    %v259 = vperm.slane %v251, %v258
    %v260 = vrot.slane %v247, 4
    %v261 = vsel %vm168, %v260, %v235
    %v262 = vrot.slane %v235, 4
    %v263 = vsel %vm168, %v247, %v262
    %v265 = vunpack.c.l.s4 1934713408
    %v266 = vunpack.c.0.s8 %v265
    %v267 = vperm.slane %v261, %v266
    %v269 = vunpack.c.l.s4 1934713408
    %v270 = vunpack.c.0.s8 %v269
    %v271 = vperm.slane %v263, %v270
    %v272 = vrot.slane %v255, 4
    %v273 = vsel %vm168, 0.0, %v272
    %v274 = vrot.slane %v259, 4
    %v275 = vsel %vm168, 0.0, %v274
    %v276 = vrot.slane %v267, 4
    %v277 = vsel %vm168, 0.0, %v276
    %v278 = vrot.slane %v271, 4
    %v279 = vsel %vm168, 0.0, %v278
    %281 = vrot.lane.b32.xlu0 %v217, 16
    %v282 = vpop.permute.xlu0 %281
    %285 = vrot.lane.b32.xlu0 %v203, 32
    %v286 = vpop.permute.xlu0 %285
    %289 = vrot.lane.b32.xlu0 %v219, 48
    %v290 = vpop.permute.xlu0 %289
    %293 = vrot.lane.b32.xlu0 %v211, 64
    %v294 = vpop.permute.xlu0 %293
    %297 = vrot.lane.b32.xlu0 %v221, 80
    %v298 = vpop.permute.xlu0 %297
    %301 = vrot.lane.b32.xlu0 %v215, 96
    %v302 = vpop.permute.xlu0 %301
    %305 = vrot.lane.b32.xlu0 %v223, 112
    %v306 = vpop.permute.xlu0 %305
    %309 = vrot.lane.b32.xlu0 %v273, 16
    %v310 = vpop.permute.xlu0 %309
    %313 = vrot.lane.b32.xlu0 %v259, 32
    %v314 = vpop.permute.xlu0 %313
    %317 = vrot.lane.b32.xlu0 %v275, 48
    %v318 = vpop.permute.xlu0 %317
    %321 = vrot.lane.b32.xlu0 %v267, 64
    %v322 = vpop.permute.xlu0 %321
    %325 = vrot.lane.b32.xlu0 %v277, 80
    %v326 = vpop.permute.xlu0 %325
    %329 = vrot.lane.b32.xlu0 %v271, 96
    %v330 = vpop.permute.xlu0 %329
    %333 = vrot.lane.b32.xlu0 %v279, 112
    %v334 = vpop.permute.xlu0 %333
    %vm336 = vcmask 130048
    %v337 = vsel %vm336, %v199, %v282
    %vm338 = vcmask 261120
    %v339 = vsel %vm338, %v337, %v286
    %vm340 = vcmask 392192
    %v341 = vsel %vm340, %v339, %v290
    %vm342 = vcmask 523264
    %v343 = vsel %vm342, %v341, %v294
    %vm344 = vcmask 654336
    %v345 = vsel %vm344, %v343, %v298
    %vm346 = vcmask 785408
    %v347 = vsel %vm346, %v345, %v302
    %vm348 = vcmask 916480
    %v349 = vsel %vm348, %v347, %v306
    %v350 = vsel %vm336, %v255, %v310
    %v351 = vsel %vm338, %v350, %v314
    %v352 = vsel %vm340, %v351, %v318
    %v353 = vsel %vm342, %v352, %v322
    %v354 = vsel %vm344, %v353, %v326
    %v355 = vsel %vm346, %v354, %v330
    %v356 = vsel %vm348, %v355, %v334
    %361 = vrot.lane.b32.xlu0 %v159, 127
    %v362 = vpop.permute.xlu0 %361
    %363 = vrot.lane.b32.xlu0 %v137, 127
    %v364 = vpop.permute.xlu0 %363
    %365 = vrot.lane.b32.xlu0 %v160, 127
    %v366 = vpop.permute.xlu0 %365
    %367 = vrot.lane.b32.xlu0 %v140, 127
    %v368 = vpop.permute.xlu0 %367
    %369 = vrot.lane.b32.xlu0 %v161, 127
    %v370 = vpop.permute.xlu0 %369
    %371 = vrot.lane.b32.xlu0 %v143, 127
    %v372 = vpop.permute.xlu0 %371
    %373 = vrot.lane.b32.xlu0 %v162, 127
    %v374 = vpop.permute.xlu0 %373
    %375 = vrot.lane.b32.xlu0 %v146, 127
    %v376 = vpop.permute.xlu0 %375
    %v385 = vrot.slane %v370, 4
    %v386 = vsel %vm168, %v385, %v362
    %v387 = vrot.slane %v362, 4
    %v388 = vsel %vm168, %v370, %v387
    %v390 = vunpack.c.l.s4 1983009808
    %v391 = vunpack.c.0.s8 %v390
    %v392 = vperm.slane %v386, %v391
    %v394 = vunpack.c.l.s4 1983009808
    %v395 = vunpack.c.0.s8 %v394
    %v396 = vperm.slane %v388, %v395
    %v397 = vrot.slane %v374, 4
    %v398 = vsel %vm168, %v397, %v366
    %v399 = vrot.slane %v366, 4
    %v400 = vsel %vm168, %v374, %v399
    %v402 = vunpack.c.l.s4 1983009808
    %v403 = vunpack.c.0.s8 %v402
    %v404 = vperm.slane %v398, %v403
    %v406 = vunpack.c.l.s4 1983009808
    %v407 = vunpack.c.0.s8 %v406
    %v408 = vperm.slane %v400, %v407
    %v409 = vrot.slane %v404, 4
    %v410 = vsel %vm168, %v409, %v392
    %v411 = vrot.slane %v392, 4
    %v412 = vsel %vm168, %v404, %v411
    %v414 = vunpack.c.l.s4 1934713408
    %v415 = vunpack.c.0.s8 %v414
    %v416 = vperm.slane %v410, %v415
    %v418 = vunpack.c.l.s4 1934713408
    %v419 = vunpack.c.0.s8 %v418
    %v420 = vperm.slane %v412, %v419
    %v421 = vrot.slane %v408, 4
    %v422 = vsel %vm168, %v421, %v396
    %v423 = vrot.slane %v396, 4
    %v424 = vsel %vm168, %v408, %v423
    %v426 = vunpack.c.l.s4 1934713408
    %v427 = vunpack.c.0.s8 %v426
    %v428 = vperm.slane %v422, %v427
    %v430 = vunpack.c.l.s4 1934713408
    %v431 = vunpack.c.0.s8 %v430
    %v432 = vperm.slane %v424, %v431
    %v433 = vrot.slane %v416, 4
    %v434 = vsel %vm168, 0.0, %v433
    %v435 = vrot.slane %v420, 4
    %v436 = vsel %vm168, 0.0, %v435
    %v437 = vrot.slane %v428, 4
    %v438 = vsel %vm168, 0.0, %v437
    %v439 = vrot.slane %v432, 4
    %v440 = vsel %vm168, 0.0, %v439
    %v441 = vrot.slane %v372, 4
    %v442 = vsel %vm168, %v441, %v364
    %v443 = vrot.slane %v364, 4
    %v444 = vsel %vm168, %v372, %v443
    %v446 = vunpack.c.l.s4 1983009808
    %v447 = vunpack.c.0.s8 %v446
    %v448 = vperm.slane %v442, %v447
    %v450 = vunpack.c.l.s4 1983009808
    %v451 = vunpack.c.0.s8 %v450
    %v452 = vperm.slane %v444, %v451
    %v453 = vrot.slane %v376, 4
    %v454 = vsel %vm168, %v453, %v368
    %v455 = vrot.slane %v368, 4
    %v456 = vsel %vm168, %v376, %v455
    %v458 = vunpack.c.l.s4 1983009808
    %v459 = vunpack.c.0.s8 %v458
    %v460 = vperm.slane %v454, %v459
    %v462 = vunpack.c.l.s4 1983009808
    %v463 = vunpack.c.0.s8 %v462
    %v464 = vperm.slane %v456, %v463
    %v465 = vrot.slane %v460, 4
    %v466 = vsel %vm168, %v465, %v448
    %v467 = vrot.slane %v448, 4
    %v468 = vsel %vm168, %v460, %v467
    %v470 = vunpack.c.l.s4 1934713408
    %v471 = vunpack.c.0.s8 %v470
    %v472 = vperm.slane %v466, %v471
    %v474 = vunpack.c.l.s4 1934713408
    %v475 = vunpack.c.0.s8 %v474
    %v476 = vperm.slane %v468, %v475
    %v477 = vrot.slane %v464, 4
    %v478 = vsel %vm168, %v477, %v452
    %v479 = vrot.slane %v452, 4
    %v480 = vsel %vm168, %v464, %v479
    %v482 = vunpack.c.l.s4 1934713408
    %v483 = vunpack.c.0.s8 %v482
    %v484 = vperm.slane %v478, %v483
    %v486 = vunpack.c.l.s4 1934713408
    %v487 = vunpack.c.0.s8 %v486
    %v488 = vperm.slane %v480, %v487
    %v489 = vrot.slane %v472, 4
    %v490 = vsel %vm168, 0.0, %v489
    %v491 = vrot.slane %v476, 4
    %v492 = vsel %vm168, 0.0, %v491
    %v493 = vrot.slane %v484, 4
    %v494 = vsel %vm168, 0.0, %v493
    %v495 = vrot.slane %v488, 4
    %v496 = vsel %vm168, 0.0, %v495
    %498 = vrot.lane.b32.xlu0 %v434, 16
    %v499 = vpop.permute.xlu0 %498
    %502 = vrot.lane.b32.xlu0 %v420, 32
    %v503 = vpop.permute.xlu0 %502
    %506 = vrot.lane.b32.xlu0 %v436, 48
    %v507 = vpop.permute.xlu0 %506
    %510 = vrot.lane.b32.xlu0 %v428, 64
    %v511 = vpop.permute.xlu0 %510
    %514 = vrot.lane.b32.xlu0 %v438, 80
    %v515 = vpop.permute.xlu0 %514
    %518 = vrot.lane.b32.xlu0 %v432, 96
    %v519 = vpop.permute.xlu0 %518
    %522 = vrot.lane.b32.xlu0 %v440, 112
    %v523 = vpop.permute.xlu0 %522
    %526 = vrot.lane.b32.xlu0 %v490, 16
    %v527 = vpop.permute.xlu0 %526
    %530 = vrot.lane.b32.xlu0 %v476, 32
    %v531 = vpop.permute.xlu0 %530
    %534 = vrot.lane.b32.xlu0 %v492, 48
    %v535 = vpop.permute.xlu0 %534
    %538 = vrot.lane.b32.xlu0 %v484, 64
    %v539 = vpop.permute.xlu0 %538
    %542 = vrot.lane.b32.xlu0 %v494, 80
    %v543 = vpop.permute.xlu0 %542
    %546 = vrot.lane.b32.xlu0 %v488, 96
    %v547 = vpop.permute.xlu0 %546
    %550 = vrot.lane.b32.xlu0 %v496, 112
    %v551 = vpop.permute.xlu0 %550
    %v553 = vsel %vm336, %v416, %v499
    %v554 = vsel %vm338, %v553, %v503
    %v555 = vsel %vm340, %v554, %v507
    %v556 = vsel %vm342, %v555, %v511
    %v557 = vsel %vm344, %v556, %v515
    %v558 = vsel %vm346, %v557, %v519
    %v559 = vsel %vm348, %v558, %v523
    %v560 = vsel %vm336, %v472, %v527
    %v561 = vsel %vm338, %v560, %v531
    %v562 = vsel %vm340, %v561, %v535
    %v563 = vsel %vm342, %v562, %v539
    %v564 = vsel %vm344, %v563, %v543
    %v565 = vsel %vm346, %v564, %v547
    %v566 = vsel %vm348, %v565, %v551
    %567 = vrot.lane.b32.xlu0 %v159, 126
    %v568 = vpop.permute.xlu0 %567
    %569 = vrot.lane.b32.xlu0 %v137, 126
    %v570 = vpop.permute.xlu0 %569
    %571 = vrot.lane.b32.xlu0 %v160, 126
    %v572 = vpop.permute.xlu0 %571
    %573 = vrot.lane.b32.xlu0 %v140, 126
    %v574 = vpop.permute.xlu0 %573
    %575 = vrot.lane.b32.xlu0 %v161, 126
    %v576 = vpop.permute.xlu0 %575
    %577 = vrot.lane.b32.xlu0 %v143, 126
    %v578 = vpop.permute.xlu0 %577
    %579 = vrot.lane.b32.xlu0 %v162, 126
    %v580 = vpop.permute.xlu0 %579
    %581 = vrot.lane.b32.xlu0 %v146, 126
    %v582 = vpop.permute.xlu0 %581
    %v591 = vrot.slane %v576, 4
    %v592 = vsel %vm168, %v591, %v568
    %v593 = vrot.slane %v568, 4
    %v594 = vsel %vm168, %v576, %v593
    %v596 = vunpack.c.l.s4 1983009808
    %v597 = vunpack.c.0.s8 %v596
    %v598 = vperm.slane %v592, %v597
    %v600 = vunpack.c.l.s4 1983009808
    %v601 = vunpack.c.0.s8 %v600
    %v602 = vperm.slane %v594, %v601
    %v603 = vrot.slane %v580, 4
    %v604 = vsel %vm168, %v603, %v572
    %v605 = vrot.slane %v572, 4
    %v606 = vsel %vm168, %v580, %v605
    %v608 = vunpack.c.l.s4 1983009808
    %v609 = vunpack.c.0.s8 %v608
    %v610 = vperm.slane %v604, %v609
    %v612 = vunpack.c.l.s4 1983009808
    %v613 = vunpack.c.0.s8 %v612
    %v614 = vperm.slane %v606, %v613
    %v615 = vrot.slane %v610, 4
    %v616 = vsel %vm168, %v615, %v598
    %v617 = vrot.slane %v598, 4
    %v618 = vsel %vm168, %v610, %v617
    %v620 = vunpack.c.l.s4 1934713408
    %v621 = vunpack.c.0.s8 %v620
    %v622 = vperm.slane %v616, %v621
    %v624 = vunpack.c.l.s4 1934713408
    %v625 = vunpack.c.0.s8 %v624
    %v626 = vperm.slane %v618, %v625
    %v627 = vrot.slane %v614, 4
    %v628 = vsel %vm168, %v627, %v602
    %v629 = vrot.slane %v602, 4
    %v630 = vsel %vm168, %v614, %v629
    %v632 = vunpack.c.l.s4 1934713408
    %v633 = vunpack.c.0.s8 %v632
    %v634 = vperm.slane %v628, %v633
    %v636 = vunpack.c.l.s4 1934713408
    %v637 = vunpack.c.0.s8 %v636
    %v638 = vperm.slane %v630, %v637
    %v639 = vrot.slane %v622, 4
    %v640 = vsel %vm168, 0.0, %v639
    %v641 = vrot.slane %v626, 4
    %v642 = vsel %vm168, 0.0, %v641
    %v643 = vrot.slane %v634, 4
    %v644 = vsel %vm168, 0.0, %v643
    %v645 = vrot.slane %v638, 4
    %v646 = vsel %vm168, 0.0, %v645
    %v647 = vrot.slane %v578, 4
    %v648 = vsel %vm168, %v647, %v570
    %v649 = vrot.slane %v570, 4
    %v650 = vsel %vm168, %v578, %v649
    %v652 = vunpack.c.l.s4 1983009808
    %v653 = vunpack.c.0.s8 %v652
    %v654 = vperm.slane %v648, %v653
    %v656 = vunpack.c.l.s4 1983009808
    %v657 = vunpack.c.0.s8 %v656
    %v658 = vperm.slane %v650, %v657
    %v659 = vrot.slane %v582, 4
    %v660 = vsel %vm168, %v659, %v574
    %v661 = vrot.slane %v574, 4
    %v662 = vsel %vm168, %v582, %v661
    %v664 = vunpack.c.l.s4 1983009808
    %v665 = vunpack.c.0.s8 %v664
    %v666 = vperm.slane %v660, %v665
    %v668 = vunpack.c.l.s4 1983009808
    %v669 = vunpack.c.0.s8 %v668
    %v670 = vperm.slane %v662, %v669
    %v671 = vrot.slane %v666, 4
    %v672 = vsel %vm168, %v671, %v654
    %v673 = vrot.slane %v654, 4
    %v674 = vsel %vm168, %v666, %v673
    %v676 = vunpack.c.l.s4 1934713408
    %v677 = vunpack.c.0.s8 %v676
    %v678 = vperm.slane %v672, %v677
    %v680 = vunpack.c.l.s4 1934713408
    %v681 = vunpack.c.0.s8 %v680
    %v682 = vperm.slane %v674, %v681
    %v683 = vrot.slane %v670, 4
    %v684 = vsel %vm168, %v683, %v658
    %v685 = vrot.slane %v658, 4
    %v686 = vsel %vm168, %v670, %v685
    %v688 = vunpack.c.l.s4 1934713408
    %v689 = vunpack.c.0.s8 %v688
    %v690 = vperm.slane %v684, %v689
    %v692 = vunpack.c.l.s4 1934713408
    %v693 = vunpack.c.0.s8 %v692
    %v694 = vperm.slane %v686, %v693
    %v695 = vrot.slane %v678, 4
    %v696 = vsel %vm168, 0.0, %v695
    %v697 = vrot.slane %v682, 4
    %v698 = vsel %vm168, 0.0, %v697
    %v699 = vrot.slane %v690, 4
    %v700 = vsel %vm168, 0.0, %v699
    %v701 = vrot.slane %v694, 4
    %v702 = vsel %vm168, 0.0, %v701
    %704 = vrot.lane.b32.xlu0 %v640, 16
    %v705 = vpop.permute.xlu0 %704
    %708 = vrot.lane.b32.xlu0 %v626, 32
    %v709 = vpop.permute.xlu0 %708
    %712 = vrot.lane.b32.xlu0 %v642, 48
    %v713 = vpop.permute.xlu0 %712
    %716 = vrot.lane.b32.xlu0 %v634, 64
    %v717 = vpop.permute.xlu0 %716
    %720 = vrot.lane.b32.xlu0 %v644, 80
    %v721 = vpop.permute.xlu0 %720
    %724 = vrot.lane.b32.xlu0 %v638, 96
    %v725 = vpop.permute.xlu0 %724
    %728 = vrot.lane.b32.xlu0 %v646, 112
    %v729 = vpop.permute.xlu0 %728
    %732 = vrot.lane.b32.xlu0 %v696, 16
    %v733 = vpop.permute.xlu0 %732
    %736 = vrot.lane.b32.xlu0 %v682, 32
    %v737 = vpop.permute.xlu0 %736
    %740 = vrot.lane.b32.xlu0 %v698, 48
    %v741 = vpop.permute.xlu0 %740
    %744 = vrot.lane.b32.xlu0 %v690, 64
    %v745 = vpop.permute.xlu0 %744
    %748 = vrot.lane.b32.xlu0 %v700, 80
    %v749 = vpop.permute.xlu0 %748
    %752 = vrot.lane.b32.xlu0 %v694, 96
    %v753 = vpop.permute.xlu0 %752
    %756 = vrot.lane.b32.xlu0 %v702, 112
    %v757 = vpop.permute.xlu0 %756
    %v759 = vsel %vm336, %v622, %v705
    %v760 = vsel %vm338, %v759, %v709
    %v761 = vsel %vm340, %v760, %v713
    %v762 = vsel %vm342, %v761, %v717
    %v763 = vsel %vm344, %v762, %v721
    %v764 = vsel %vm346, %v763, %v725
    %v765 = vsel %vm348, %v764, %v729
    %v766 = vsel %vm336, %v678, %v733
    %v767 = vsel %vm338, %v766, %v737
    %v768 = vsel %vm340, %v767, %v741
    %v769 = vsel %vm342, %v768, %v745
    %v770 = vsel %vm344, %v769, %v749
    %v771 = vsel %vm346, %v770, %v753
    %v772 = vsel %vm348, %v771, %v757
    %vm777 = vcmask 1046528
    %v778 = vrot.slane %v159, 1
    %v779 = vrot.slane %v137, 1
    %v780 = vsel %vm777, %v778, %v779
    %v781 = vrot.slane %v163, 1
    %v782 = vsel %vm777, %v779, %v781
    %v783 = vrot.slane %v160, 1
    %v784 = vrot.slane %v140, 1
    %v785 = vsel %vm777, %v783, %v784
    %v786 = vrot.slane %v164, 1
    %v787 = vsel %vm777, %v784, %v786
    %v788 = vrot.slane %v161, 1
    %v789 = vrot.slane %v143, 1
    %v790 = vsel %vm777, %v788, %v789
    %v791 = vrot.slane %v165, 1
    %v792 = vsel %vm777, %v789, %v791
    %v793 = vrot.slane %v162, 1
    %v794 = vrot.slane %v146, 1
    %v795 = vsel %vm777, %v793, %v794
    %v796 = vrot.slane %v166, 1
    %v797 = vsel %vm777, %v794, %v796
    %v806 = vrot.slane %v790, 4
    %v807 = vsel %vm168, %v806, %v780
    %v808 = vrot.slane %v780, 4
    %v809 = vsel %vm168, %v790, %v808
    %v811 = vunpack.c.l.s4 1983009808
    %v812 = vunpack.c.0.s8 %v811
    %v813 = vperm.slane %v807, %v812
    %v815 = vunpack.c.l.s4 1983009808
    %v816 = vunpack.c.0.s8 %v815
    %v817 = vperm.slane %v809, %v816
    %v818 = vrot.slane %v795, 4
    %v819 = vsel %vm168, %v818, %v785
    %v820 = vrot.slane %v785, 4
    %v821 = vsel %vm168, %v795, %v820
    %v823 = vunpack.c.l.s4 1983009808
    %v824 = vunpack.c.0.s8 %v823
    %v825 = vperm.slane %v819, %v824
    %v827 = vunpack.c.l.s4 1983009808
    %v828 = vunpack.c.0.s8 %v827
    %v829 = vperm.slane %v821, %v828
    %v830 = vrot.slane %v825, 4
    %v831 = vsel %vm168, %v830, %v813
    %v832 = vrot.slane %v813, 4
    %v833 = vsel %vm168, %v825, %v832
    %v835 = vunpack.c.l.s4 1934713408
    %v836 = vunpack.c.0.s8 %v835
    %v837 = vperm.slane %v831, %v836
    %v839 = vunpack.c.l.s4 1934713408
    %v840 = vunpack.c.0.s8 %v839
    %v841 = vperm.slane %v833, %v840
    %v842 = vrot.slane %v829, 4
    %v843 = vsel %vm168, %v842, %v817
    %v844 = vrot.slane %v817, 4
    %v845 = vsel %vm168, %v829, %v844
    %v847 = vunpack.c.l.s4 1934713408
    %v848 = vunpack.c.0.s8 %v847
    %v849 = vperm.slane %v843, %v848
    %v851 = vunpack.c.l.s4 1934713408
    %v852 = vunpack.c.0.s8 %v851
    %v853 = vperm.slane %v845, %v852
    %v854 = vrot.slane %v837, 4
    %v855 = vsel %vm168, 0.0, %v854
    %v856 = vrot.slane %v841, 4
    %v857 = vsel %vm168, 0.0, %v856
    %v858 = vrot.slane %v849, 4
    %v859 = vsel %vm168, 0.0, %v858
    %v860 = vrot.slane %v853, 4
    %v861 = vsel %vm168, 0.0, %v860
    %v862 = vrot.slane %v792, 4
    %v863 = vsel %vm168, %v862, %v782
    %v864 = vrot.slane %v782, 4
    %v865 = vsel %vm168, %v792, %v864
    %v867 = vunpack.c.l.s4 1983009808
    %v868 = vunpack.c.0.s8 %v867
    %v869 = vperm.slane %v863, %v868
    %v871 = vunpack.c.l.s4 1983009808
    %v872 = vunpack.c.0.s8 %v871
    %v873 = vperm.slane %v865, %v872
    %v874 = vrot.slane %v797, 4
    %v875 = vsel %vm168, %v874, %v787
    %v876 = vrot.slane %v787, 4
    %v877 = vsel %vm168, %v797, %v876
    %v879 = vunpack.c.l.s4 1983009808
    %v880 = vunpack.c.0.s8 %v879
    %v881 = vperm.slane %v875, %v880
    %v883 = vunpack.c.l.s4 1983009808
    %v884 = vunpack.c.0.s8 %v883
    %v885 = vperm.slane %v877, %v884
    %v886 = vrot.slane %v881, 4
    %v887 = vsel %vm168, %v886, %v869
    %v888 = vrot.slane %v869, 4
    %v889 = vsel %vm168, %v881, %v888
    %v891 = vunpack.c.l.s4 1934713408
    %v892 = vunpack.c.0.s8 %v891
    %v893 = vperm.slane %v887, %v892
    %v895 = vunpack.c.l.s4 1934713408
    %v896 = vunpack.c.0.s8 %v895
    %v897 = vperm.slane %v889, %v896
    %v898 = vrot.slane %v885, 4
    %v899 = vsel %vm168, %v898, %v873
    %v900 = vrot.slane %v873, 4
    %v901 = vsel %vm168, %v885, %v900
    %v903 = vunpack.c.l.s4 1934713408
    %v904 = vunpack.c.0.s8 %v903
    %v905 = vperm.slane %v899, %v904
    %v907 = vunpack.c.l.s4 1934713408
    %v908 = vunpack.c.0.s8 %v907
    %v909 = vperm.slane %v901, %v908
    %v910 = vrot.slane %v893, 4
    %v911 = vsel %vm168, 0.0, %v910
    %v912 = vrot.slane %v897, 4
    %v913 = vsel %vm168, 0.0, %v912
    %v914 = vrot.slane %v905, 4
    %v915 = vsel %vm168, 0.0, %v914
    %v916 = vrot.slane %v909, 4
    %v917 = vsel %vm168, 0.0, %v916
    %919 = vrot.lane.b32.xlu0 %v855, 16
    %v920 = vpop.permute.xlu0 %919
    %923 = vrot.lane.b32.xlu0 %v841, 32
    %v924 = vpop.permute.xlu0 %923
    %927 = vrot.lane.b32.xlu0 %v857, 48
    %v928 = vpop.permute.xlu0 %927
    %931 = vrot.lane.b32.xlu0 %v849, 64
    %v932 = vpop.permute.xlu0 %931
    %935 = vrot.lane.b32.xlu0 %v859, 80
    %v936 = vpop.permute.xlu0 %935
    %939 = vrot.lane.b32.xlu0 %v853, 96
    %v940 = vpop.permute.xlu0 %939
    %943 = vrot.lane.b32.xlu0 %v861, 112
    %v944 = vpop.permute.xlu0 %943
    %947 = vrot.lane.b32.xlu0 %v911, 16
    %v948 = vpop.permute.xlu0 %947
    %951 = vrot.lane.b32.xlu0 %v897, 32
    %v952 = vpop.permute.xlu0 %951
    %955 = vrot.lane.b32.xlu0 %v913, 48
    %v956 = vpop.permute.xlu0 %955
    %959 = vrot.lane.b32.xlu0 %v905, 64
    %v960 = vpop.permute.xlu0 %959
    %963 = vrot.lane.b32.xlu0 %v915, 80
    %v964 = vpop.permute.xlu0 %963
    %967 = vrot.lane.b32.xlu0 %v909, 96
    %v968 = vpop.permute.xlu0 %967
    %971 = vrot.lane.b32.xlu0 %v917, 112
    %v972 = vpop.permute.xlu0 %971
    %v974 = vsel %vm336, %v837, %v920
    %v975 = vsel %vm338, %v974, %v924
    %v976 = vsel %vm340, %v975, %v928
    %v977 = vsel %vm342, %v976, %v932
    %v978 = vsel %vm344, %v977, %v936
    %v979 = vsel %vm346, %v978, %v940
    %v980 = vsel %vm348, %v979, %v944
    %v981 = vsel %vm336, %v893, %v948
    %v982 = vsel %vm338, %v981, %v952
    %v983 = vsel %vm340, %v982, %v956
    %v984 = vsel %vm342, %v983, %v960
    %v985 = vsel %vm344, %v984, %v964
    %v986 = vsel %vm346, %v985, %v968
    %v987 = vsel %vm348, %v986, %v972
    %988 = vrot.lane.b32.xlu0 %v780, 127
    %v989 = vpop.permute.xlu0 %988
    %990 = vrot.lane.b32.xlu0 %v782, 127
    %v991 = vpop.permute.xlu0 %990
    %992 = vrot.lane.b32.xlu0 %v785, 127
    %v993 = vpop.permute.xlu0 %992
    %994 = vrot.lane.b32.xlu0 %v787, 127
    %v995 = vpop.permute.xlu0 %994
    %996 = vrot.lane.b32.xlu0 %v790, 127
    %v997 = vpop.permute.xlu0 %996
    %998 = vrot.lane.b32.xlu0 %v792, 127
    %v999 = vpop.permute.xlu0 %998
    %1000 = vrot.lane.b32.xlu0 %v795, 127
    %v1001 = vpop.permute.xlu0 %1000
    %1002 = vrot.lane.b32.xlu0 %v797, 127
    %v1003 = vpop.permute.xlu0 %1002
    %v1012 = vrot.slane %v997, 4
    %v1013 = vsel %vm168, %v1012, %v989
    %v1014 = vrot.slane %v989, 4
    %v1015 = vsel %vm168, %v997, %v1014
    %v1017 = vunpack.c.l.s4 1983009808
    %v1018 = vunpack.c.0.s8 %v1017
    %v1019 = vperm.slane %v1013, %v1018
    %v1021 = vunpack.c.l.s4 1983009808
    %v1022 = vunpack.c.0.s8 %v1021
    %v1023 = vperm.slane %v1015, %v1022
    %v1024 = vrot.slane %v1001, 4
    %v1025 = vsel %vm168, %v1024, %v993
    %v1026 = vrot.slane %v993, 4
    %v1027 = vsel %vm168, %v1001, %v1026
    %v1029 = vunpack.c.l.s4 1983009808
    %v1030 = vunpack.c.0.s8 %v1029
    %v1031 = vperm.slane %v1025, %v1030
    %v1033 = vunpack.c.l.s4 1983009808
    %v1034 = vunpack.c.0.s8 %v1033
    %v1035 = vperm.slane %v1027, %v1034
    %v1036 = vrot.slane %v1031, 4
    %v1037 = vsel %vm168, %v1036, %v1019
    %v1038 = vrot.slane %v1019, 4
    %v1039 = vsel %vm168, %v1031, %v1038
    %v1041 = vunpack.c.l.s4 1934713408
    %v1042 = vunpack.c.0.s8 %v1041
    %v1043 = vperm.slane %v1037, %v1042
    %v1045 = vunpack.c.l.s4 1934713408
    %v1046 = vunpack.c.0.s8 %v1045
    %v1047 = vperm.slane %v1039, %v1046
    %v1048 = vrot.slane %v1035, 4
    %v1049 = vsel %vm168, %v1048, %v1023
    %v1050 = vrot.slane %v1023, 4
    %v1051 = vsel %vm168, %v1035, %v1050
    %v1053 = vunpack.c.l.s4 1934713408
    %v1054 = vunpack.c.0.s8 %v1053
    %v1055 = vperm.slane %v1049, %v1054
    %v1057 = vunpack.c.l.s4 1934713408
    %v1058 = vunpack.c.0.s8 %v1057
    %v1059 = vperm.slane %v1051, %v1058
    %v1060 = vrot.slane %v1043, 4
    %v1061 = vsel %vm168, 0.0, %v1060
    %v1062 = vrot.slane %v1047, 4
    %v1063 = vsel %vm168, 0.0, %v1062
    %v1064 = vrot.slane %v1055, 4
    %v1065 = vsel %vm168, 0.0, %v1064
    %v1066 = vrot.slane %v1059, 4
    %v1067 = vsel %vm168, 0.0, %v1066
    %v1068 = vrot.slane %v999, 4
    %v1069 = vsel %vm168, %v1068, %v991
    %v1070 = vrot.slane %v991, 4
    %v1071 = vsel %vm168, %v999, %v1070
    %v1073 = vunpack.c.l.s4 1983009808
    %v1074 = vunpack.c.0.s8 %v1073
    %v1075 = vperm.slane %v1069, %v1074
    %v1077 = vunpack.c.l.s4 1983009808
    %v1078 = vunpack.c.0.s8 %v1077
    %v1079 = vperm.slane %v1071, %v1078
    %v1080 = vrot.slane %v1003, 4
    %v1081 = vsel %vm168, %v1080, %v995
    %v1082 = vrot.slane %v995, 4
    %v1083 = vsel %vm168, %v1003, %v1082
    %v1085 = vunpack.c.l.s4 1983009808
    %v1086 = vunpack.c.0.s8 %v1085
    %v1087 = vperm.slane %v1081, %v1086
    %v1089 = vunpack.c.l.s4 1983009808
    %v1090 = vunpack.c.0.s8 %v1089
    %v1091 = vperm.slane %v1083, %v1090
    %v1092 = vrot.slane %v1087, 4
    %v1093 = vsel %vm168, %v1092, %v1075
    %v1094 = vrot.slane %v1075, 4
    %v1095 = vsel %vm168, %v1087, %v1094
    %v1097 = vunpack.c.l.s4 1934713408
    %v1098 = vunpack.c.0.s8 %v1097
    %v1099 = vperm.slane %v1093, %v1098
    %v1101 = vunpack.c.l.s4 1934713408
    %v1102 = vunpack.c.0.s8 %v1101
    %v1103 = vperm.slane %v1095, %v1102
    %v1104 = vrot.slane %v1091, 4
    %v1105 = vsel %vm168, %v1104, %v1079
    %v1106 = vrot.slane %v1079, 4
    %v1107 = vsel %vm168, %v1091, %v1106
    %v1109 = vunpack.c.l.s4 1934713408
    %v1110 = vunpack.c.0.s8 %v1109
    %v1111 = vperm.slane %v1105, %v1110
    %v1113 = vunpack.c.l.s4 1934713408
    %v1114 = vunpack.c.0.s8 %v1113
    %v1115 = vperm.slane %v1107, %v1114
    %v1116 = vrot.slane %v1099, 4
    %v1117 = vsel %vm168, 0.0, %v1116
    %v1118 = vrot.slane %v1103, 4
    %v1119 = vsel %vm168, 0.0, %v1118
    %v1120 = vrot.slane %v1111, 4
    %v1121 = vsel %vm168, 0.0, %v1120
    %v1122 = vrot.slane %v1115, 4
    %v1123 = vsel %vm168, 0.0, %v1122
    %1125 = vrot.lane.b32.xlu0 %v1061, 16
    %v1126 = vpop.permute.xlu0 %1125
    %1129 = vrot.lane.b32.xlu0 %v1047, 32
    %v1130 = vpop.permute.xlu0 %1129
    %1133 = vrot.lane.b32.xlu0 %v1063, 48
    %v1134 = vpop.permute.xlu0 %1133
    %1137 = vrot.lane.b32.xlu0 %v1055, 64
    %v1138 = vpop.permute.xlu0 %1137
    %1141 = vrot.lane.b32.xlu0 %v1065, 80
    %v1142 = vpop.permute.xlu0 %1141
    %1145 = vrot.lane.b32.xlu0 %v1059, 96
    %v1146 = vpop.permute.xlu0 %1145
    %1149 = vrot.lane.b32.xlu0 %v1067, 112
    %v1150 = vpop.permute.xlu0 %1149
    %1153 = vrot.lane.b32.xlu0 %v1117, 16
    %v1154 = vpop.permute.xlu0 %1153
    %1157 = vrot.lane.b32.xlu0 %v1103, 32
    %v1158 = vpop.permute.xlu0 %1157
    %1161 = vrot.lane.b32.xlu0 %v1119, 48
    %v1162 = vpop.permute.xlu0 %1161
    %1165 = vrot.lane.b32.xlu0 %v1111, 64
    %v1166 = vpop.permute.xlu0 %1165
    %1169 = vrot.lane.b32.xlu0 %v1121, 80
    %v1170 = vpop.permute.xlu0 %1169
    %1173 = vrot.lane.b32.xlu0 %v1115, 96
    %v1174 = vpop.permute.xlu0 %1173
    %1177 = vrot.lane.b32.xlu0 %v1123, 112
    %v1178 = vpop.permute.xlu0 %1177
    %v1180 = vsel %vm336, %v1043, %v1126
    %v1181 = vsel %vm338, %v1180, %v1130
    %v1182 = vsel %vm340, %v1181, %v1134
    %v1183 = vsel %vm342, %v1182, %v1138
    %v1184 = vsel %vm344, %v1183, %v1142
    %v1185 = vsel %vm346, %v1184, %v1146
    %v1186 = vsel %vm348, %v1185, %v1150
    %v1187 = vsel %vm336, %v1099, %v1154
    %v1188 = vsel %vm338, %v1187, %v1158
    %v1189 = vsel %vm340, %v1188, %v1162
    %v1190 = vsel %vm342, %v1189, %v1166
    %v1191 = vsel %vm344, %v1190, %v1170
    %v1192 = vsel %vm346, %v1191, %v1174
    %v1193 = vsel %vm348, %v1192, %v1178
    %1194 = vrot.lane.b32.xlu0 %v780, 126
    %v1195 = vpop.permute.xlu0 %1194
    %1196 = vrot.lane.b32.xlu0 %v782, 126
    %v1197 = vpop.permute.xlu0 %1196
    %1198 = vrot.lane.b32.xlu0 %v785, 126
    %v1199 = vpop.permute.xlu0 %1198
    %1200 = vrot.lane.b32.xlu0 %v787, 126
    %v1201 = vpop.permute.xlu0 %1200
    %1202 = vrot.lane.b32.xlu0 %v790, 126
    %v1203 = vpop.permute.xlu0 %1202
    %1204 = vrot.lane.b32.xlu0 %v792, 126
    %v1205 = vpop.permute.xlu0 %1204
    %1206 = vrot.lane.b32.xlu0 %v795, 126
    %v1207 = vpop.permute.xlu0 %1206
    %1208 = vrot.lane.b32.xlu0 %v797, 126
    %v1209 = vpop.permute.xlu0 %1208
    %v1218 = vrot.slane %v1203, 4
    %v1219 = vsel %vm168, %v1218, %v1195
    %v1220 = vrot.slane %v1195, 4
    %v1221 = vsel %vm168, %v1203, %v1220
    %v1223 = vunpack.c.l.s4 1983009808
    %v1224 = vunpack.c.0.s8 %v1223
    %v1225 = vperm.slane %v1219, %v1224
    %v1227 = vunpack.c.l.s4 1983009808
    %v1228 = vunpack.c.0.s8 %v1227
    %v1229 = vperm.slane %v1221, %v1228
    %v1230 = vrot.slane %v1207, 4
    %v1231 = vsel %vm168, %v1230, %v1199
    %v1232 = vrot.slane %v1199, 4
    %v1233 = vsel %vm168, %v1207, %v1232
    %v1235 = vunpack.c.l.s4 1983009808
    %v1236 = vunpack.c.0.s8 %v1235
    %v1237 = vperm.slane %v1231, %v1236
    %v1239 = vunpack.c.l.s4 1983009808
    %v1240 = vunpack.c.0.s8 %v1239
    %v1241 = vperm.slane %v1233, %v1240
    %v1242 = vrot.slane %v1237, 4
    %v1243 = vsel %vm168, %v1242, %v1225
    %v1244 = vrot.slane %v1225, 4
    %v1245 = vsel %vm168, %v1237, %v1244
    %v1247 = vunpack.c.l.s4 1934713408
    %v1248 = vunpack.c.0.s8 %v1247
    %v1249 = vperm.slane %v1243, %v1248
    %v1251 = vunpack.c.l.s4 1934713408
    %v1252 = vunpack.c.0.s8 %v1251
    %v1253 = vperm.slane %v1245, %v1252
    %v1254 = vrot.slane %v1241, 4
    %v1255 = vsel %vm168, %v1254, %v1229
    %v1256 = vrot.slane %v1229, 4
    %v1257 = vsel %vm168, %v1241, %v1256
    %v1259 = vunpack.c.l.s4 1934713408
    %v1260 = vunpack.c.0.s8 %v1259
    %v1261 = vperm.slane %v1255, %v1260
    %v1263 = vunpack.c.l.s4 1934713408
    %v1264 = vunpack.c.0.s8 %v1263
    %v1265 = vperm.slane %v1257, %v1264
    %v1266 = vrot.slane %v1249, 4
    %v1267 = vsel %vm168, 0.0, %v1266
    %v1268 = vrot.slane %v1253, 4
    %v1269 = vsel %vm168, 0.0, %v1268
    %v1270 = vrot.slane %v1261, 4
    %v1271 = vsel %vm168, 0.0, %v1270
    %v1272 = vrot.slane %v1265, 4
    %v1273 = vsel %vm168, 0.0, %v1272
    %v1274 = vrot.slane %v1205, 4
    %v1275 = vsel %vm168, %v1274, %v1197
    %v1276 = vrot.slane %v1197, 4
    %v1277 = vsel %vm168, %v1205, %v1276
    %v1279 = vunpack.c.l.s4 1983009808
    %v1280 = vunpack.c.0.s8 %v1279
    %v1281 = vperm.slane %v1275, %v1280
    %v1283 = vunpack.c.l.s4 1983009808
    %v1284 = vunpack.c.0.s8 %v1283
    %v1285 = vperm.slane %v1277, %v1284
    %v1286 = vrot.slane %v1209, 4
    %v1287 = vsel %vm168, %v1286, %v1201
    %v1288 = vrot.slane %v1201, 4
    %v1289 = vsel %vm168, %v1209, %v1288
    %v1291 = vunpack.c.l.s4 1983009808
    %v1292 = vunpack.c.0.s8 %v1291
    %v1293 = vperm.slane %v1287, %v1292
    %v1295 = vunpack.c.l.s4 1983009808
    %v1296 = vunpack.c.0.s8 %v1295
    %v1297 = vperm.slane %v1289, %v1296
    %v1298 = vrot.slane %v1293, 4
    %v1299 = vsel %vm168, %v1298, %v1281
    %v1300 = vrot.slane %v1281, 4
    %v1301 = vsel %vm168, %v1293, %v1300
    %v1303 = vunpack.c.l.s4 1934713408
    %v1304 = vunpack.c.0.s8 %v1303
    %v1305 = vperm.slane %v1299, %v1304
    %v1307 = vunpack.c.l.s4 1934713408
    %v1308 = vunpack.c.0.s8 %v1307
    %v1309 = vperm.slane %v1301, %v1308
    %v1310 = vrot.slane %v1297, 4
    %v1311 = vsel %vm168, %v1310, %v1285
    %v1312 = vrot.slane %v1285, 4
    %v1313 = vsel %vm168, %v1297, %v1312
    %v1315 = vunpack.c.l.s4 1934713408
    %v1316 = vunpack.c.0.s8 %v1315
    %v1317 = vperm.slane %v1311, %v1316
    %v1319 = vunpack.c.l.s4 1934713408
    %v1320 = vunpack.c.0.s8 %v1319
    %v1321 = vperm.slane %v1313, %v1320
    %v1322 = vrot.slane %v1305, 4
    %v1323 = vsel %vm168, 0.0, %v1322
    %v1324 = vrot.slane %v1309, 4
    %v1325 = vsel %vm168, 0.0, %v1324
    %v1326 = vrot.slane %v1317, 4
    %v1327 = vsel %vm168, 0.0, %v1326
    %v1328 = vrot.slane %v1321, 4
    %v1329 = vsel %vm168, 0.0, %v1328
    %1331 = vrot.lane.b32.xlu0 %v1267, 16
    %v1332 = vpop.permute.xlu0 %1331
    %1335 = vrot.lane.b32.xlu0 %v1253, 32
    %v1336 = vpop.permute.xlu0 %1335
    %1339 = vrot.lane.b32.xlu0 %v1269, 48
    %v1340 = vpop.permute.xlu0 %1339
    %1343 = vrot.lane.b32.xlu0 %v1261, 64
    %v1344 = vpop.permute.xlu0 %1343
    %1347 = vrot.lane.b32.xlu0 %v1271, 80
    %v1348 = vpop.permute.xlu0 %1347
    %1351 = vrot.lane.b32.xlu0 %v1265, 96
    %v1352 = vpop.permute.xlu0 %1351
    %1355 = vrot.lane.b32.xlu0 %v1273, 112
    %v1356 = vpop.permute.xlu0 %1355
    %1359 = vrot.lane.b32.xlu0 %v1323, 16
    %v1360 = vpop.permute.xlu0 %1359
    %1363 = vrot.lane.b32.xlu0 %v1309, 32
    %v1364 = vpop.permute.xlu0 %1363
    %1367 = vrot.lane.b32.xlu0 %v1325, 48
    %v1368 = vpop.permute.xlu0 %1367
    %1371 = vrot.lane.b32.xlu0 %v1317, 64
    %v1372 = vpop.permute.xlu0 %1371
    %1375 = vrot.lane.b32.xlu0 %v1327, 80
    %v1376 = vpop.permute.xlu0 %1375
    %1379 = vrot.lane.b32.xlu0 %v1321, 96
    %v1380 = vpop.permute.xlu0 %1379
    %1383 = vrot.lane.b32.xlu0 %v1329, 112
    %v1384 = vpop.permute.xlu0 %1383
    %v1386 = vsel %vm336, %v1249, %v1332
    %v1387 = vsel %vm338, %v1386, %v1336
    %v1388 = vsel %vm340, %v1387, %v1340
    %v1389 = vsel %vm342, %v1388, %v1344
    %v1390 = vsel %vm344, %v1389, %v1348
    %v1391 = vsel %vm346, %v1390, %v1352
    %v1392 = vsel %vm348, %v1391, %v1356
    %v1393 = vsel %vm336, %v1305, %v1360
    %v1394 = vsel %vm338, %v1393, %v1364
    %v1395 = vsel %vm340, %v1394, %v1368
    %v1396 = vsel %vm342, %v1395, %v1372
    %v1397 = vsel %vm344, %v1396, %v1376
    %v1398 = vsel %vm346, %v1397, %v1380
    %v1399 = vsel %vm348, %v1398, %v1384
    %vm1400 = vcmask 1045504
    %v1401 = vrot.slane %v159, 2
    %v1402 = vrot.slane %v137, 2
    %v1403 = vsel %vm1400, %v1401, %v1402
    %v1404 = vrot.slane %v163, 2
    %v1405 = vsel %vm1400, %v1402, %v1404
    %v1406 = vrot.slane %v160, 2
    %v1407 = vrot.slane %v140, 2
    %v1408 = vsel %vm1400, %v1406, %v1407
    %v1409 = vrot.slane %v164, 2
    %v1410 = vsel %vm1400, %v1407, %v1409
    %v1411 = vrot.slane %v161, 2
    %v1412 = vrot.slane %v143, 2
    %v1413 = vsel %vm1400, %v1411, %v1412
    %v1414 = vrot.slane %v165, 2
    %v1415 = vsel %vm1400, %v1412, %v1414
    %v1416 = vrot.slane %v162, 2
    %v1417 = vrot.slane %v146, 2
    %v1418 = vsel %vm1400, %v1416, %v1417
    %v1419 = vrot.slane %v166, 2
    %v1420 = vsel %vm1400, %v1417, %v1419
    %v1429 = vrot.slane %v1413, 4
    %v1430 = vsel %vm168, %v1429, %v1403
    %v1431 = vrot.slane %v1403, 4
    %v1432 = vsel %vm168, %v1413, %v1431
    %v1434 = vunpack.c.l.s4 1983009808
    %v1435 = vunpack.c.0.s8 %v1434
    %v1436 = vperm.slane %v1430, %v1435
    %v1438 = vunpack.c.l.s4 1983009808
    %v1439 = vunpack.c.0.s8 %v1438
    %v1440 = vperm.slane %v1432, %v1439
    %v1441 = vrot.slane %v1418, 4
    %v1442 = vsel %vm168, %v1441, %v1408
    %v1443 = vrot.slane %v1408, 4
    %v1444 = vsel %vm168, %v1418, %v1443
    %v1446 = vunpack.c.l.s4 1983009808
    %v1447 = vunpack.c.0.s8 %v1446
    %v1448 = vperm.slane %v1442, %v1447
    %v1450 = vunpack.c.l.s4 1983009808
    %v1451 = vunpack.c.0.s8 %v1450
    %v1452 = vperm.slane %v1444, %v1451
    %v1453 = vrot.slane %v1448, 4
    %v1454 = vsel %vm168, %v1453, %v1436
    %v1455 = vrot.slane %v1436, 4
    %v1456 = vsel %vm168, %v1448, %v1455
    %v1458 = vunpack.c.l.s4 1934713408
    %v1459 = vunpack.c.0.s8 %v1458
    %v1460 = vperm.slane %v1454, %v1459
    %v1462 = vunpack.c.l.s4 1934713408
    %v1463 = vunpack.c.0.s8 %v1462
    %v1464 = vperm.slane %v1456, %v1463
    %v1465 = vrot.slane %v1452, 4
    %v1466 = vsel %vm168, %v1465, %v1440
    %v1467 = vrot.slane %v1440, 4
    %v1468 = vsel %vm168, %v1452, %v1467
    %v1470 = vunpack.c.l.s4 1934713408
    %v1471 = vunpack.c.0.s8 %v1470
    %v1472 = vperm.slane %v1466, %v1471
    %v1474 = vunpack.c.l.s4 1934713408
    %v1475 = vunpack.c.0.s8 %v1474
    %v1476 = vperm.slane %v1468, %v1475
    %v1477 = vrot.slane %v1460, 4
    %v1478 = vsel %vm168, 0.0, %v1477
    %v1479 = vrot.slane %v1464, 4
    %v1480 = vsel %vm168, 0.0, %v1479
    %v1481 = vrot.slane %v1472, 4
    %v1482 = vsel %vm168, 0.0, %v1481
    %v1483 = vrot.slane %v1476, 4
    %v1484 = vsel %vm168, 0.0, %v1483
    %v1485 = vrot.slane %v1415, 4
    %v1486 = vsel %vm168, %v1485, %v1405
    %v1487 = vrot.slane %v1405, 4
    %v1488 = vsel %vm168, %v1415, %v1487
    %v1490 = vunpack.c.l.s4 1983009808
    %v1491 = vunpack.c.0.s8 %v1490
    %v1492 = vperm.slane %v1486, %v1491
    %v1494 = vunpack.c.l.s4 1983009808
    %v1495 = vunpack.c.0.s8 %v1494
    %v1496 = vperm.slane %v1488, %v1495
    %v1497 = vrot.slane %v1420, 4
    %v1498 = vsel %vm168, %v1497, %v1410
    %v1499 = vrot.slane %v1410, 4
    %v1500 = vsel %vm168, %v1420, %v1499
    %v1502 = vunpack.c.l.s4 1983009808
    %v1503 = vunpack.c.0.s8 %v1502
    %v1504 = vperm.slane %v1498, %v1503
    %v1506 = vunpack.c.l.s4 1983009808
    %v1507 = vunpack.c.0.s8 %v1506
    %v1508 = vperm.slane %v1500, %v1507
    %v1509 = vrot.slane %v1504, 4
    %v1510 = vsel %vm168, %v1509, %v1492
    %v1511 = vrot.slane %v1492, 4
    %v1512 = vsel %vm168, %v1504, %v1511
    %v1514 = vunpack.c.l.s4 1934713408
    %v1515 = vunpack.c.0.s8 %v1514
    %v1516 = vperm.slane %v1510, %v1515
    %v1518 = vunpack.c.l.s4 1934713408
    %v1519 = vunpack.c.0.s8 %v1518
    %v1520 = vperm.slane %v1512, %v1519
    %v1521 = vrot.slane %v1508, 4
    %v1522 = vsel %vm168, %v1521, %v1496
    %v1523 = vrot.slane %v1496, 4
    %v1524 = vsel %vm168, %v1508, %v1523
    %v1526 = vunpack.c.l.s4 1934713408
    %v1527 = vunpack.c.0.s8 %v1526
    %v1528 = vperm.slane %v1522, %v1527
    %v1530 = vunpack.c.l.s4 1934713408
    %v1531 = vunpack.c.0.s8 %v1530
    %v1532 = vperm.slane %v1524, %v1531
    %v1533 = vrot.slane %v1516, 4
    %v1534 = vsel %vm168, 0.0, %v1533
    %v1535 = vrot.slane %v1520, 4
    %v1536 = vsel %vm168, 0.0, %v1535
    %v1537 = vrot.slane %v1528, 4
    %v1538 = vsel %vm168, 0.0, %v1537
    %v1539 = vrot.slane %v1532, 4
    %v1540 = vsel %vm168, 0.0, %v1539
    %1542 = vrot.lane.b32.xlu0 %v1478, 16
    %v1543 = vpop.permute.xlu0 %1542
    %1546 = vrot.lane.b32.xlu0 %v1464, 32
    %v1547 = vpop.permute.xlu0 %1546
    %1550 = vrot.lane.b32.xlu0 %v1480, 48
    %v1551 = vpop.permute.xlu0 %1550
    %1554 = vrot.lane.b32.xlu0 %v1472, 64
    %v1555 = vpop.permute.xlu0 %1554
    %1558 = vrot.lane.b32.xlu0 %v1482, 80
    %v1559 = vpop.permute.xlu0 %1558
    %1562 = vrot.lane.b32.xlu0 %v1476, 96
    %v1563 = vpop.permute.xlu0 %1562
    %1566 = vrot.lane.b32.xlu0 %v1484, 112
    %v1567 = vpop.permute.xlu0 %1566
    %1570 = vrot.lane.b32.xlu0 %v1534, 16
    %v1571 = vpop.permute.xlu0 %1570
    %1574 = vrot.lane.b32.xlu0 %v1520, 32
    %v1575 = vpop.permute.xlu0 %1574
    %1578 = vrot.lane.b32.xlu0 %v1536, 48
    %v1579 = vpop.permute.xlu0 %1578
    %1582 = vrot.lane.b32.xlu0 %v1528, 64
    %v1583 = vpop.permute.xlu0 %1582
    %1586 = vrot.lane.b32.xlu0 %v1538, 80
    %v1587 = vpop.permute.xlu0 %1586
    %1590 = vrot.lane.b32.xlu0 %v1532, 96
    %v1591 = vpop.permute.xlu0 %1590
    %1594 = vrot.lane.b32.xlu0 %v1540, 112
    %v1595 = vpop.permute.xlu0 %1594
    %v1597 = vsel %vm336, %v1460, %v1543
    %v1598 = vsel %vm338, %v1597, %v1547
    %v1599 = vsel %vm340, %v1598, %v1551
    %v1600 = vsel %vm342, %v1599, %v1555
    %v1601 = vsel %vm344, %v1600, %v1559
    %v1602 = vsel %vm346, %v1601, %v1563
    %v1603 = vsel %vm348, %v1602, %v1567
    %v1604 = vsel %vm336, %v1516, %v1571
    %v1605 = vsel %vm338, %v1604, %v1575
    %v1606 = vsel %vm340, %v1605, %v1579
    %v1607 = vsel %vm342, %v1606, %v1583
    %v1608 = vsel %vm344, %v1607, %v1587
    %v1609 = vsel %vm346, %v1608, %v1591
    %v1610 = vsel %vm348, %v1609, %v1595
    %1611 = vrot.lane.b32.xlu0 %v1403, 127
    %v1612 = vpop.permute.xlu0 %1611
    %1613 = vrot.lane.b32.xlu0 %v1405, 127
    %v1614 = vpop.permute.xlu0 %1613
    %1615 = vrot.lane.b32.xlu0 %v1408, 127
    %v1616 = vpop.permute.xlu0 %1615
    %1617 = vrot.lane.b32.xlu0 %v1410, 127
    %v1618 = vpop.permute.xlu0 %1617
    %1619 = vrot.lane.b32.xlu0 %v1413, 127
    %v1620 = vpop.permute.xlu0 %1619
    %1621 = vrot.lane.b32.xlu0 %v1415, 127
    %v1622 = vpop.permute.xlu0 %1621
    %1623 = vrot.lane.b32.xlu0 %v1418, 127
    %v1624 = vpop.permute.xlu0 %1623
    %1625 = vrot.lane.b32.xlu0 %v1420, 127
    %v1626 = vpop.permute.xlu0 %1625
    %v1635 = vrot.slane %v1620, 4
    %v1636 = vsel %vm168, %v1635, %v1612
    %v1637 = vrot.slane %v1612, 4
    %v1638 = vsel %vm168, %v1620, %v1637
    %v1640 = vunpack.c.l.s4 1983009808
    %v1641 = vunpack.c.0.s8 %v1640
    %v1642 = vperm.slane %v1636, %v1641
    %v1644 = vunpack.c.l.s4 1983009808
    %v1645 = vunpack.c.0.s8 %v1644
    %v1646 = vperm.slane %v1638, %v1645
    %v1647 = vrot.slane %v1624, 4
    %v1648 = vsel %vm168, %v1647, %v1616
    %v1649 = vrot.slane %v1616, 4
    %v1650 = vsel %vm168, %v1624, %v1649
    %v1652 = vunpack.c.l.s4 1983009808
    %v1653 = vunpack.c.0.s8 %v1652
    %v1654 = vperm.slane %v1648, %v1653
    %v1656 = vunpack.c.l.s4 1983009808
    %v1657 = vunpack.c.0.s8 %v1656
    %v1658 = vperm.slane %v1650, %v1657
    %v1659 = vrot.slane %v1654, 4
    %v1660 = vsel %vm168, %v1659, %v1642
    %v1661 = vrot.slane %v1642, 4
    %v1662 = vsel %vm168, %v1654, %v1661
    %v1664 = vunpack.c.l.s4 1934713408
    %v1665 = vunpack.c.0.s8 %v1664
    %v1666 = vperm.slane %v1660, %v1665
    %v1668 = vunpack.c.l.s4 1934713408
    %v1669 = vunpack.c.0.s8 %v1668
    %v1670 = vperm.slane %v1662, %v1669
    %v1671 = vrot.slane %v1658, 4
    %v1672 = vsel %vm168, %v1671, %v1646
    %v1673 = vrot.slane %v1646, 4
    %v1674 = vsel %vm168, %v1658, %v1673
    %v1676 = vunpack.c.l.s4 1934713408
    %v1677 = vunpack.c.0.s8 %v1676
    %v1678 = vperm.slane %v1672, %v1677
    %v1680 = vunpack.c.l.s4 1934713408
    %v1681 = vunpack.c.0.s8 %v1680
    %v1682 = vperm.slane %v1674, %v1681
    %v1683 = vrot.slane %v1666, 4
    %v1684 = vsel %vm168, 0.0, %v1683
    %v1685 = vrot.slane %v1670, 4
    %v1686 = vsel %vm168, 0.0, %v1685
    %v1687 = vrot.slane %v1678, 4
    %v1688 = vsel %vm168, 0.0, %v1687
    %v1689 = vrot.slane %v1682, 4
    %v1690 = vsel %vm168, 0.0, %v1689
    %v1691 = vrot.slane %v1622, 4
    %v1692 = vsel %vm168, %v1691, %v1614
    %v1693 = vrot.slane %v1614, 4
    %v1694 = vsel %vm168, %v1622, %v1693
    %v1696 = vunpack.c.l.s4 1983009808
    %v1697 = vunpack.c.0.s8 %v1696
    %v1698 = vperm.slane %v1692, %v1697
    %v1700 = vunpack.c.l.s4 1983009808
    %v1701 = vunpack.c.0.s8 %v1700
    %v1702 = vperm.slane %v1694, %v1701
    %v1703 = vrot.slane %v1626, 4
    %v1704 = vsel %vm168, %v1703, %v1618
    %v1705 = vrot.slane %v1618, 4
    %v1706 = vsel %vm168, %v1626, %v1705
    %v1708 = vunpack.c.l.s4 1983009808
    %v1709 = vunpack.c.0.s8 %v1708
    %v1710 = vperm.slane %v1704, %v1709
    %v1712 = vunpack.c.l.s4 1983009808
    %v1713 = vunpack.c.0.s8 %v1712
    %v1714 = vperm.slane %v1706, %v1713
    %v1715 = vrot.slane %v1710, 4
    %v1716 = vsel %vm168, %v1715, %v1698
    %v1717 = vrot.slane %v1698, 4
    %v1718 = vsel %vm168, %v1710, %v1717
    %v1720 = vunpack.c.l.s4 1934713408
    %v1721 = vunpack.c.0.s8 %v1720
    %v1722 = vperm.slane %v1716, %v1721
    %v1724 = vunpack.c.l.s4 1934713408
    %v1725 = vunpack.c.0.s8 %v1724
    %v1726 = vperm.slane %v1718, %v1725
    %v1727 = vrot.slane %v1714, 4
    %v1728 = vsel %vm168, %v1727, %v1702
    %v1729 = vrot.slane %v1702, 4
    %v1730 = vsel %vm168, %v1714, %v1729
    %v1732 = vunpack.c.l.s4 1934713408
    %v1733 = vunpack.c.0.s8 %v1732
    %v1734 = vperm.slane %v1728, %v1733
    %v1736 = vunpack.c.l.s4 1934713408
    %v1737 = vunpack.c.0.s8 %v1736
    %v1738 = vperm.slane %v1730, %v1737
    %v1739 = vrot.slane %v1722, 4
    %v1740 = vsel %vm168, 0.0, %v1739
    %v1741 = vrot.slane %v1726, 4
    %v1742 = vsel %vm168, 0.0, %v1741
    %v1743 = vrot.slane %v1734, 4
    %v1744 = vsel %vm168, 0.0, %v1743
    %v1745 = vrot.slane %v1738, 4
    %v1746 = vsel %vm168, 0.0, %v1745
    %1748 = vrot.lane.b32.xlu0 %v1684, 16
    %v1749 = vpop.permute.xlu0 %1748
    %1752 = vrot.lane.b32.xlu0 %v1670, 32
    %v1753 = vpop.permute.xlu0 %1752
    %1756 = vrot.lane.b32.xlu0 %v1686, 48
    %v1757 = vpop.permute.xlu0 %1756
    %1760 = vrot.lane.b32.xlu0 %v1678, 64
    %v1761 = vpop.permute.xlu0 %1760
    %1764 = vrot.lane.b32.xlu0 %v1688, 80
    %v1765 = vpop.permute.xlu0 %1764
    %1768 = vrot.lane.b32.xlu0 %v1682, 96
    %v1769 = vpop.permute.xlu0 %1768
    %1772 = vrot.lane.b32.xlu0 %v1690, 112
    %v1773 = vpop.permute.xlu0 %1772
    %1776 = vrot.lane.b32.xlu0 %v1740, 16
    %v1777 = vpop.permute.xlu0 %1776
    %1780 = vrot.lane.b32.xlu0 %v1726, 32
    %v1781 = vpop.permute.xlu0 %1780
    %1784 = vrot.lane.b32.xlu0 %v1742, 48
    %v1785 = vpop.permute.xlu0 %1784
    %1788 = vrot.lane.b32.xlu0 %v1734, 64
    %v1789 = vpop.permute.xlu0 %1788
    %1792 = vrot.lane.b32.xlu0 %v1744, 80
    %v1793 = vpop.permute.xlu0 %1792
    %1796 = vrot.lane.b32.xlu0 %v1738, 96
    %v1797 = vpop.permute.xlu0 %1796
    %1800 = vrot.lane.b32.xlu0 %v1746, 112
    %v1801 = vpop.permute.xlu0 %1800
    %v1803 = vsel %vm336, %v1666, %v1749
    %v1804 = vsel %vm338, %v1803, %v1753
    %v1805 = vsel %vm340, %v1804, %v1757
    %v1806 = vsel %vm342, %v1805, %v1761
    %v1807 = vsel %vm344, %v1806, %v1765
    %v1808 = vsel %vm346, %v1807, %v1769
    %v1809 = vsel %vm348, %v1808, %v1773
    %v1810 = vsel %vm336, %v1722, %v1777
    %v1811 = vsel %vm338, %v1810, %v1781
    %v1812 = vsel %vm340, %v1811, %v1785
    %v1813 = vsel %vm342, %v1812, %v1789
    %v1814 = vsel %vm344, %v1813, %v1793
    %v1815 = vsel %vm346, %v1814, %v1797
    %v1816 = vsel %vm348, %v1815, %v1801
    %1817 = vrot.lane.b32.xlu0 %v1403, 126
    %v1818 = vpop.permute.xlu0 %1817
    %1819 = vrot.lane.b32.xlu0 %v1405, 126
    %v1820 = vpop.permute.xlu0 %1819
    %1821 = vrot.lane.b32.xlu0 %v1408, 126
    %v1822 = vpop.permute.xlu0 %1821
    %1823 = vrot.lane.b32.xlu0 %v1410, 126
    %v1824 = vpop.permute.xlu0 %1823
    %1825 = vrot.lane.b32.xlu0 %v1413, 126
    %v1826 = vpop.permute.xlu0 %1825
    %1827 = vrot.lane.b32.xlu0 %v1415, 126
    %v1828 = vpop.permute.xlu0 %1827
    %1829 = vrot.lane.b32.xlu0 %v1418, 126
    %v1830 = vpop.permute.xlu0 %1829
    %1831 = vrot.lane.b32.xlu0 %v1420, 126
    %v1832 = vpop.permute.xlu0 %1831
    %v1841 = vrot.slane %v1826, 4
    %v1842 = vsel %vm168, %v1841, %v1818
    %v1843 = vrot.slane %v1818, 4
    %v1844 = vsel %vm168, %v1826, %v1843
    %v1846 = vunpack.c.l.s4 1983009808
    %v1847 = vunpack.c.0.s8 %v1846
    %v1848 = vperm.slane %v1842, %v1847
    %v1850 = vunpack.c.l.s4 1983009808
    %v1851 = vunpack.c.0.s8 %v1850
    %v1852 = vperm.slane %v1844, %v1851
    %v1853 = vrot.slane %v1830, 4
    %v1854 = vsel %vm168, %v1853, %v1822
    %v1855 = vrot.slane %v1822, 4
    %v1856 = vsel %vm168, %v1830, %v1855
    %v1858 = vunpack.c.l.s4 1983009808
    %v1859 = vunpack.c.0.s8 %v1858
    %v1860 = vperm.slane %v1854, %v1859
    %v1862 = vunpack.c.l.s4 1983009808
    %v1863 = vunpack.c.0.s8 %v1862
    %v1864 = vperm.slane %v1856, %v1863
    %v1865 = vrot.slane %v1860, 4
    %v1866 = vsel %vm168, %v1865, %v1848
    %v1867 = vrot.slane %v1848, 4
    %v1868 = vsel %vm168, %v1860, %v1867
    %v1870 = vunpack.c.l.s4 1934713408
    %v1871 = vunpack.c.0.s8 %v1870
    %v1872 = vperm.slane %v1866, %v1871
    %v1874 = vunpack.c.l.s4 1934713408
    %v1875 = vunpack.c.0.s8 %v1874
    %v1876 = vperm.slane %v1868, %v1875
    %v1877 = vrot.slane %v1864, 4
    %v1878 = vsel %vm168, %v1877, %v1852
    %v1879 = vrot.slane %v1852, 4
    %v1880 = vsel %vm168, %v1864, %v1879
    %v1882 = vunpack.c.l.s4 1934713408
    %v1883 = vunpack.c.0.s8 %v1882
    %v1884 = vperm.slane %v1878, %v1883
    %v1886 = vunpack.c.l.s4 1934713408
    %v1887 = vunpack.c.0.s8 %v1886
    %v1888 = vperm.slane %v1880, %v1887
    %v1889 = vrot.slane %v1872, 4
    %v1890 = vsel %vm168, 0.0, %v1889
    %v1891 = vrot.slane %v1876, 4
    %v1892 = vsel %vm168, 0.0, %v1891
    %v1893 = vrot.slane %v1884, 4
    %v1894 = vsel %vm168, 0.0, %v1893
    %v1895 = vrot.slane %v1888, 4
    %v1896 = vsel %vm168, 0.0, %v1895
    %v1897 = vrot.slane %v1828, 4
    %v1898 = vsel %vm168, %v1897, %v1820
    %v1899 = vrot.slane %v1820, 4
    %v1900 = vsel %vm168, %v1828, %v1899
    %v1902 = vunpack.c.l.s4 1983009808
    %v1903 = vunpack.c.0.s8 %v1902
    %v1904 = vperm.slane %v1898, %v1903
    %v1906 = vunpack.c.l.s4 1983009808
    %v1907 = vunpack.c.0.s8 %v1906
    %v1908 = vperm.slane %v1900, %v1907
    %v1909 = vrot.slane %v1832, 4
    %v1910 = vsel %vm168, %v1909, %v1824
    %v1911 = vrot.slane %v1824, 4
    %v1912 = vsel %vm168, %v1832, %v1911
    %v1914 = vunpack.c.l.s4 1983009808
    %v1915 = vunpack.c.0.s8 %v1914
    %v1916 = vperm.slane %v1910, %v1915
    %v1918 = vunpack.c.l.s4 1983009808
    %v1919 = vunpack.c.0.s8 %v1918
    %v1920 = vperm.slane %v1912, %v1919
    %v1921 = vrot.slane %v1916, 4
    %v1922 = vsel %vm168, %v1921, %v1904
    %v1923 = vrot.slane %v1904, 4
    %v1924 = vsel %vm168, %v1916, %v1923
    %v1926 = vunpack.c.l.s4 1934713408
    %v1927 = vunpack.c.0.s8 %v1926
    %v1928 = vperm.slane %v1922, %v1927
    %v1930 = vunpack.c.l.s4 1934713408
    %v1931 = vunpack.c.0.s8 %v1930
    %v1932 = vperm.slane %v1924, %v1931
    %v1933 = vrot.slane %v1920, 4
    %v1934 = vsel %vm168, %v1933, %v1908
    %v1935 = vrot.slane %v1908, 4
    %v1936 = vsel %vm168, %v1920, %v1935
    %v1938 = vunpack.c.l.s4 1934713408
    %v1939 = vunpack.c.0.s8 %v1938
    %v1940 = vperm.slane %v1934, %v1939
    %v1942 = vunpack.c.l.s4 1934713408
    %v1943 = vunpack.c.0.s8 %v1942
    %v1944 = vperm.slane %v1936, %v1943
    %v1945 = vrot.slane %v1928, 4
    %v1946 = vsel %vm168, 0.0, %v1945
    %v1947 = vrot.slane %v1932, 4
    %v1948 = vsel %vm168, 0.0, %v1947
    %v1949 = vrot.slane %v1940, 4
    %v1950 = vsel %vm168, 0.0, %v1949
    %v1951 = vrot.slane %v1944, 4
    %v1952 = vsel %vm168, 0.0, %v1951
    %1954 = vrot.lane.b32.xlu0 %v1890, 16
    %v1955 = vpop.permute.xlu0 %1954
    %1958 = vrot.lane.b32.xlu0 %v1876, 32
    %v1959 = vpop.permute.xlu0 %1958
    %1962 = vrot.lane.b32.xlu0 %v1892, 48
    %v1963 = vpop.permute.xlu0 %1962
    %1966 = vrot.lane.b32.xlu0 %v1884, 64
    %v1967 = vpop.permute.xlu0 %1966
    %1970 = vrot.lane.b32.xlu0 %v1894, 80
    %v1971 = vpop.permute.xlu0 %1970
    %1974 = vrot.lane.b32.xlu0 %v1888, 96
    %v1975 = vpop.permute.xlu0 %1974
    %1978 = vrot.lane.b32.xlu0 %v1896, 112
    %v1979 = vpop.permute.xlu0 %1978
    %1982 = vrot.lane.b32.xlu0 %v1946, 16
    %v1983 = vpop.permute.xlu0 %1982
    %1986 = vrot.lane.b32.xlu0 %v1932, 32
    %v1987 = vpop.permute.xlu0 %1986
    %1990 = vrot.lane.b32.xlu0 %v1948, 48
    %v1991 = vpop.permute.xlu0 %1990
    %1994 = vrot.lane.b32.xlu0 %v1940, 64
    %v1995 = vpop.permute.xlu0 %1994
    %1998 = vrot.lane.b32.xlu0 %v1950, 80
    %v1999 = vpop.permute.xlu0 %1998
    %2002 = vrot.lane.b32.xlu0 %v1944, 96
    %v2003 = vpop.permute.xlu0 %2002
    %2006 = vrot.lane.b32.xlu0 %v1952, 112
    %v2007 = vpop.permute.xlu0 %2006
    %v2009 = vsel %vm336, %v1872, %v1955
    %v2010 = vsel %vm338, %v2009, %v1959
    %v2011 = vsel %vm340, %v2010, %v1963
    %v2012 = vsel %vm342, %v2011, %v1967
    %v2013 = vsel %vm344, %v2012, %v1971
    %v2014 = vsel %vm346, %v2013, %v1975
    %v2015 = vsel %vm348, %v2014, %v1979
    %v2016 = vsel %vm336, %v1928, %v1983
    %v2017 = vsel %vm338, %v2016, %v1987
    %v2018 = vsel %vm340, %v2017, %v1991
    %v2019 = vsel %vm342, %v2018, %v1995
    %v2020 = vsel %vm344, %v2019, %v1999
    %v2021 = vsel %vm346, %v2020, %v2003
    %v2022 = vsel %vm348, %v2021, %v2007
    %v2025 = vrot.slane %v559, 4
    %v2026 = vrot.slane %v566, 4
    %v2031 = vrot.slane %v980, 4
    %v2032 = vrot.slane %v987, 4
    %v2037 = vrot.slane %v1392, 4
    %v2038 = vrot.slane %v1399, 4
    %v2043 = vrot.slane %v1809, 4
    %v2044 = vrot.slane %v1816, 4
    %vm2047 = vcmask 1043456
    %v2048 = vsel %vm2047, %v349, %v2025
    %v2049 = vsel %vm2047, %v356, %v2026
    %v2050 = vsel %vm2047, %v765, %v2031
    %v2051 = vsel %vm2047, %v772, %v2032
    %v2052 = vsel %vm2047, %v1186, %v2037
    %v2053 = vsel %vm2047, %v1193, %v2038
    %v2054 = vsel %vm2047, %v1603, %v2043
    %v2055 = vsel %vm2047, %v1610, %v2044
    %2057 = vset.pattern.permute.xlu0 0
    %2058 = vperm.xlu0 %2057, %v51
    %v2059 = vpop.permute.xlu0 %2058
    %vm2061 = vcmask 293888
    %v2063 = vsel %vm2061, %v50, 0
    %v2066 = vsel %vm2047, %v2015, 0
    %v2069 = vsel %vm2047, %v2022, 0
    %2071 = vmatpush.msra.mxu0 0.0
    %2072 = vmatpush.msra.mxu0 0.0
    %2073 = vmatpush.msra.mxu0 0.0
    %2074 = vmatpush.msra.mxu0 0.0
    %2075 = vmatpush.msra.mxu0 0.0
    %2076 = vmatpush.msra.mxu0 0.0
    %2077 = vmatpush.msra.mxu0 0.0
    %2078 = vmatpush.msra.mxu0 0.0
    %2079 = vmatpush.msra.mxu0 0.0
    %2080 = vmatpush.msra.mxu0 0.0
    %2081 = vmatpush.msra.mxu0 0.0
    %2082 = vmatpush.msra.mxu0 %v2066
    %2083 = vmatpush.msra.mxu0 %v2054
    %2084 = vmatpush.msra.mxu0 %v2052
    %2085 = vmatpush.msra.mxu0 %v2050
    %2086 = vmatpush.msra.mxu0 %v2048
    %2087 = vmatmul.f32.gmra.mxu0 %v2063
    %v2088 = vpop.f32.mrf.mxu0
    %v2089 = vadd.f32 %v2059, %v2088
    %2090 = vdwg.mxu0
    %2091 = vmatpush.msra.mxu0 0.0
    %2092 = vmatpush.msra.mxu0 0.0
    %2093 = vmatpush.msra.mxu0 0.0
    %2094 = vmatpush.msra.mxu0 0.0
    %2095 = vmatpush.msra.mxu0 0.0
    %2096 = vmatpush.msra.mxu0 0.0
    %2097 = vmatpush.msra.mxu0 0.0
    %2098 = vmatpush.msra.mxu0 0.0
    %2099 = vmatpush.msra.mxu0 0.0
    %2100 = vmatpush.msra.mxu0 0.0
    %2101 = vmatpush.msra.mxu0 0.0
    %2102 = vmatpush.msra.mxu0 %v2069
    %2103 = vmatpush.msra.mxu0 %v2055
    %2104 = vmatpush.msra.mxu0 %v2053
    %2105 = vmatpush.msra.mxu0 %v2051
    %2106 = vmatpush.msra.mxu0 %v2049
    %2107 = vmatmul.f32.gmra.mxu0 %v2063
    %v2108 = vpop.f32.mrf.mxu0
    %v2109 = vadd.f32 %v2059, %v2108
    %2110 = vdwg.mxu0
    %v2111 = vadd.f32 %v2089, %v2109
    %2112 = vadd.xlane.f32.xlu0 %v2111
    %v2113 = vpop.xlane.xlu0 %2112
    %v2114 = vmul.f32 %v2089, %v2089
    %v2115 = vmul.f32 %v2109, %v2109
    %v2116 = vadd.f32 %v2114, %v2115
    %2117 = vadd.xlane.f32.xlu0 %v2116
    %v2118 = vpop.xlane.xlu0 %2117
    %v2119 = vmul.f32 %v2113, 0.00390625
    %v2120 = vmul.f32 %v2118, 0.00390625
    %v2121 = vmul.f32 %v2119, %v2119
    %v2122 = vsub.f32 %v2120, %v2121
    %v2123 = vmax.f32 %v2122, 0.0
    %v2124 = vadd.f32 %v2123, 1e-05
    %v2125 = vrsqrt.pop %v2124
    %v2126 = vmul.f32 %v2125, %v2124
    %v2127 = vmul.f32 %v2126, %v2125
    %v2128 = vmul.f32 0.5, %v2127
    %v2129 = vsub.f32 1.5, %v2128
    %v2130 = vmul.f32 %v2125, %v2129
    %vm2131 = vweird.f32 %v2124
    %vm2132 = vweird.f32 %v2125
    %vm2133 = vmor %vm2131, %vm2132
    %v2134 = vsel %vm2133, %v2125, %v2130
    %v2135 = vsub.f32 0.0, %v2119
    %v2136 = vmul.f32 %v2135, %v2134
    %v2137 = vmul.f32 %v2089, %v2134
    %v2138 = vmul.f32 %v2109, %v2134
    %v2139 = vadd.f32 %v2137, %v2136
    %v2140 = vadd.f32 %v2138, %v2136
    %v2141 = vmax.f32 %v2139, 0.0
    %v2142 = vmax.f32 %v2140, 0.0
    %2143 = vst [vmem:[#allocation7] sm:$0xff] %v2141
    %2144 = vst [vmem:[#allocation7 + $0x8] sm:$0xff] %v2142
    %s2145 = scalar_lea.vmem [#allocation2], 64
    %v2146 = vld [vmem:[%s2145] sm:$0xff]
    %v2147 = vld [vmem:[%s2145 + $0x8] sm:$0xff]
    %v2148 = vld [vmem:[%s2145 + $0x10] sm:$0xff]
    %v2149 = vld [vmem:[%s2145 + $0x18] sm:$0xff]
    %v2150 = vld [vmem:[%s2145 + $0x20] sm:$0xff]
    %v2151 = vld [vmem:[%s2145 + $0x28] sm:$0xff]
    %v2152 = vld [vmem:[%s2145 + $0x30] sm:$0xff]
    %v2153 = vld [vmem:[%s2145 + $0x38] sm:$0xff]
    %s2154 = scalar_lea.vmem [#allocation5], 64
    %v2155 = vld [vmem:[%s2154] sm:$0xff]
    %v2156 = vld [vmem:[%s2154 + $0x8] sm:$0xff]
    %v2157 = vld [vmem:[%s2154 + $0x10] sm:$0xff]
    %v2158 = vld [vmem:[%s2154 + $0x18] sm:$0xff]
    %v2159 = vld [vmem:[%s2154 + $0x20] sm:$0xff]
    %v2160 = vld [vmem:[%s2154 + $0x28] sm:$0xff]
    %v2161 = vld [vmem:[%s2154 + $0x30] sm:$0xff]
    %v2162 = vld [vmem:[%s2154 + $0x38] sm:$0xff]
    %v2163 = vadd.f32 %v2146, %v2155
    %v2164 = vadd.f32 %v2147, %v2156
    %v2165 = vadd.f32 %v2148, %v2157
    %v2166 = vadd.f32 %v2149, %v2158
    %v2167 = vadd.f32 %v2150, %v2159
    %v2168 = vadd.f32 %v2151, %v2160
    %v2169 = vadd.f32 %v2152, %v2161
    %v2170 = vadd.f32 %v2153, %v2162
    %2179 = vrot.lane.b32.xlu0 %v2163, 1
    %v2180 = vpop.permute.xlu0 %2179
    %2181 = vrot.lane.b32.xlu0 %v2164, 1
    %v2182 = vpop.permute.xlu0 %2181
    %2183 = vrot.lane.b32.xlu0 %v2165, 1
    %v2184 = vpop.permute.xlu0 %2183
    %2185 = vrot.lane.b32.xlu0 %v2166, 1
    %v2186 = vpop.permute.xlu0 %2185
    %2187 = vrot.lane.b32.xlu0 %v2167, 1
    %v2188 = vpop.permute.xlu0 %2187
    %2189 = vrot.lane.b32.xlu0 %v2168, 1
    %v2190 = vpop.permute.xlu0 %2189
    %2191 = vrot.lane.b32.xlu0 %v2169, 1
    %v2192 = vpop.permute.xlu0 %2191
    %2193 = vrot.lane.b32.xlu0 %v2170, 1
    %v2194 = vpop.permute.xlu0 %2193
    %v2203 = vsel %vm108, 0.0, %v2180
    %v2204 = vsel %vm108, 0.0, %v2182
    %v2205 = vsel %vm108, 0.0, %v2184
    %v2206 = vsel %vm108, 0.0, %v2186
    %v2207 = vsel %vm108, 0.0, %v2188
    %v2208 = vsel %vm108, 0.0, %v2190
    %v2209 = vsel %vm108, 0.0, %v2192
    %v2210 = vsel %vm108, 0.0, %v2194
    %v2211 = vsel %vm117, %v2203, 0.0
    %v2212 = vsel %vm117, %v2204, 0.0
    %v2213 = vsel %vm117, %v2205, 0.0
    %v2214 = vsel %vm117, %v2206, 0.0
    %v2215 = vsel %vm117, %v2207, 0.0
    %v2216 = vsel %vm117, %v2208, 0.0
    %v2217 = vsel %vm117, %v2209, 0.0
    %v2218 = vsel %vm117, %v2210, 0.0
    %v2227 = vrot.slane %v2211, 7
    %v2228 = vrot.slane %v2212, 7
    %v2229 = vsel %vm134, %v2227, %v2228
    %v2230 = vrot.slane %v2213, 7
    %v2231 = vrot.slane %v2214, 7
    %v2232 = vsel %vm134, %v2230, %v2231
    %v2233 = vrot.slane %v2215, 7
    %v2234 = vrot.slane %v2216, 7
    %v2235 = vsel %vm134, %v2233, %v2234
    %v2236 = vrot.slane %v2217, 7
    %v2237 = vrot.slane %v2218, 7
    %v2238 = vsel %vm134, %v2236, %v2237
    %v2251 = vsel %vm134, 0.0, %v2227
    %v2252 = vsel %vm134, 0.0, %v2230
    %v2253 = vsel %vm134, 0.0, %v2233
    %v2254 = vsel %vm134, 0.0, %v2236
    %v2255 = vsel %vm134, %v2228, 0.0
    %v2256 = vsel %vm134, %v2231, 0.0
    %v2257 = vsel %vm134, %v2234, 0.0
    %v2258 = vsel %vm134, %v2237, 0.0
    %v2259 = vrot.slane %v2253, 4
    %v2260 = vsel %vm168, %v2259, %v2251
    %v2261 = vrot.slane %v2251, 4
    %v2262 = vsel %vm168, %v2253, %v2261
    %v2264 = vunpack.c.l.s4 1983009808
    %v2265 = vunpack.c.0.s8 %v2264
    %v2266 = vperm.slane %v2260, %v2265
    %v2268 = vunpack.c.l.s4 1983009808
    %v2269 = vunpack.c.0.s8 %v2268
    %v2270 = vperm.slane %v2262, %v2269
    %v2271 = vrot.slane %v2254, 4
    %v2272 = vsel %vm168, %v2271, %v2252
    %v2273 = vrot.slane %v2252, 4
    %v2274 = vsel %vm168, %v2254, %v2273
    %v2276 = vunpack.c.l.s4 1983009808
    %v2277 = vunpack.c.0.s8 %v2276
    %v2278 = vperm.slane %v2272, %v2277
    %v2280 = vunpack.c.l.s4 1983009808
    %v2281 = vunpack.c.0.s8 %v2280
    %v2282 = vperm.slane %v2274, %v2281
    %v2283 = vrot.slane %v2278, 4
    %v2284 = vsel %vm168, %v2283, %v2266
    %v2285 = vrot.slane %v2266, 4
    %v2286 = vsel %vm168, %v2278, %v2285
    %v2288 = vunpack.c.l.s4 1934713408
    %v2289 = vunpack.c.0.s8 %v2288
    %v2290 = vperm.slane %v2284, %v2289
    %v2292 = vunpack.c.l.s4 1934713408
    %v2293 = vunpack.c.0.s8 %v2292
    %v2294 = vperm.slane %v2286, %v2293
    %v2295 = vrot.slane %v2282, 4
    %v2296 = vsel %vm168, %v2295, %v2270
    %v2297 = vrot.slane %v2270, 4
    %v2298 = vsel %vm168, %v2282, %v2297
    %v2300 = vunpack.c.l.s4 1934713408
    %v2301 = vunpack.c.0.s8 %v2300
    %v2302 = vperm.slane %v2296, %v2301
    %v2304 = vunpack.c.l.s4 1934713408
    %v2305 = vunpack.c.0.s8 %v2304
    %v2306 = vperm.slane %v2298, %v2305
    %v2307 = vrot.slane %v2290, 4
    %v2308 = vsel %vm168, 0.0, %v2307
    %v2309 = vrot.slane %v2294, 4
    %v2310 = vsel %vm168, 0.0, %v2309
    %v2311 = vrot.slane %v2302, 4
    %v2312 = vsel %vm168, 0.0, %v2311
    %v2313 = vrot.slane %v2306, 4
    %v2314 = vsel %vm168, 0.0, %v2313
    %v2315 = vrot.slane %v2235, 4
    %v2316 = vsel %vm168, %v2315, %v2229
    %v2317 = vrot.slane %v2229, 4
    %v2318 = vsel %vm168, %v2235, %v2317
    %v2320 = vunpack.c.l.s4 1983009808
    %v2321 = vunpack.c.0.s8 %v2320
    %v2322 = vperm.slane %v2316, %v2321
    %v2324 = vunpack.c.l.s4 1983009808
    %v2325 = vunpack.c.0.s8 %v2324
    %v2326 = vperm.slane %v2318, %v2325
    %v2327 = vrot.slane %v2238, 4
    %v2328 = vsel %vm168, %v2327, %v2232
    %v2329 = vrot.slane %v2232, 4
    %v2330 = vsel %vm168, %v2238, %v2329
    %v2332 = vunpack.c.l.s4 1983009808
    %v2333 = vunpack.c.0.s8 %v2332
    %v2334 = vperm.slane %v2328, %v2333
    %v2336 = vunpack.c.l.s4 1983009808
    %v2337 = vunpack.c.0.s8 %v2336
    %v2338 = vperm.slane %v2330, %v2337
    %v2339 = vrot.slane %v2334, 4
    %v2340 = vsel %vm168, %v2339, %v2322
    %v2341 = vrot.slane %v2322, 4
    %v2342 = vsel %vm168, %v2334, %v2341
    %v2344 = vunpack.c.l.s4 1934713408
    %v2345 = vunpack.c.0.s8 %v2344
    %v2346 = vperm.slane %v2340, %v2345
    %v2348 = vunpack.c.l.s4 1934713408
    %v2349 = vunpack.c.0.s8 %v2348
    %v2350 = vperm.slane %v2342, %v2349
    %v2351 = vrot.slane %v2338, 4
    %v2352 = vsel %vm168, %v2351, %v2326
    %v2353 = vrot.slane %v2326, 4
    %v2354 = vsel %vm168, %v2338, %v2353
    %v2356 = vunpack.c.l.s4 1934713408
    %v2357 = vunpack.c.0.s8 %v2356
    %v2358 = vperm.slane %v2352, %v2357
    %v2360 = vunpack.c.l.s4 1934713408
    %v2361 = vunpack.c.0.s8 %v2360
    %v2362 = vperm.slane %v2354, %v2361
    %v2363 = vrot.slane %v2346, 4
    %v2364 = vsel %vm168, 0.0, %v2363
    %v2365 = vrot.slane %v2350, 4
    %v2366 = vsel %vm168, 0.0, %v2365
    %v2367 = vrot.slane %v2358, 4
    %v2368 = vsel %vm168, 0.0, %v2367
    %v2369 = vrot.slane %v2362, 4
    %v2370 = vsel %vm168, 0.0, %v2369
    %2372 = vrot.lane.b32.xlu0 %v2308, 16
    %v2373 = vpop.permute.xlu0 %2372
    %2376 = vrot.lane.b32.xlu0 %v2294, 32
    %v2377 = vpop.permute.xlu0 %2376
    %2380 = vrot.lane.b32.xlu0 %v2310, 48
    %v2381 = vpop.permute.xlu0 %2380
    %2384 = vrot.lane.b32.xlu0 %v2302, 64
    %v2385 = vpop.permute.xlu0 %2384
    %2388 = vrot.lane.b32.xlu0 %v2312, 80
    %v2389 = vpop.permute.xlu0 %2388
    %2392 = vrot.lane.b32.xlu0 %v2306, 96
    %v2393 = vpop.permute.xlu0 %2392
    %2396 = vrot.lane.b32.xlu0 %v2314, 112
    %v2397 = vpop.permute.xlu0 %2396
    %2400 = vrot.lane.b32.xlu0 %v2364, 16
    %v2401 = vpop.permute.xlu0 %2400
    %2404 = vrot.lane.b32.xlu0 %v2350, 32
    %v2405 = vpop.permute.xlu0 %2404
    %2408 = vrot.lane.b32.xlu0 %v2366, 48
    %v2409 = vpop.permute.xlu0 %2408
    %2412 = vrot.lane.b32.xlu0 %v2358, 64
    %v2413 = vpop.permute.xlu0 %2412
    %2416 = vrot.lane.b32.xlu0 %v2368, 80
    %v2417 = vpop.permute.xlu0 %2416
    %2420 = vrot.lane.b32.xlu0 %v2362, 96
    %v2421 = vpop.permute.xlu0 %2420
    %2424 = vrot.lane.b32.xlu0 %v2370, 112
    %v2425 = vpop.permute.xlu0 %2424
    %v2427 = vsel %vm336, %v2290, %v2373
    %v2428 = vsel %vm338, %v2427, %v2377
    %v2429 = vsel %vm340, %v2428, %v2381
    %v2430 = vsel %vm342, %v2429, %v2385
    %v2431 = vsel %vm344, %v2430, %v2389
    %v2432 = vsel %vm346, %v2431, %v2393
    %v2433 = vsel %vm348, %v2432, %v2397
    %v2434 = vsel %vm336, %v2346, %v2401
    %v2435 = vsel %vm338, %v2434, %v2405
    %v2436 = vsel %vm340, %v2435, %v2409
    %v2437 = vsel %vm342, %v2436, %v2413
    %v2438 = vsel %vm344, %v2437, %v2417
    %v2439 = vsel %vm346, %v2438, %v2421
    %v2440 = vsel %vm348, %v2439, %v2425
    %2445 = vrot.lane.b32.xlu0 %v2251, 127
    %v2446 = vpop.permute.xlu0 %2445
    %2447 = vrot.lane.b32.xlu0 %v2229, 127
    %v2448 = vpop.permute.xlu0 %2447
    %2449 = vrot.lane.b32.xlu0 %v2252, 127
    %v2450 = vpop.permute.xlu0 %2449
    %2451 = vrot.lane.b32.xlu0 %v2232, 127
    %v2452 = vpop.permute.xlu0 %2451
    %2453 = vrot.lane.b32.xlu0 %v2253, 127
    %v2454 = vpop.permute.xlu0 %2453
    %2455 = vrot.lane.b32.xlu0 %v2235, 127
    %v2456 = vpop.permute.xlu0 %2455
    %2457 = vrot.lane.b32.xlu0 %v2254, 127
    %v2458 = vpop.permute.xlu0 %2457
    %2459 = vrot.lane.b32.xlu0 %v2238, 127
    %v2460 = vpop.permute.xlu0 %2459
    %v2469 = vrot.slane %v2454, 4
    %v2470 = vsel %vm168, %v2469, %v2446
    %v2471 = vrot.slane %v2446, 4
    %v2472 = vsel %vm168, %v2454, %v2471
    %v2474 = vunpack.c.l.s4 1983009808
    %v2475 = vunpack.c.0.s8 %v2474
    %v2476 = vperm.slane %v2470, %v2475
    %v2478 = vunpack.c.l.s4 1983009808
    %v2479 = vunpack.c.0.s8 %v2478
    %v2480 = vperm.slane %v2472, %v2479
    %v2481 = vrot.slane %v2458, 4
    %v2482 = vsel %vm168, %v2481, %v2450
    %v2483 = vrot.slane %v2450, 4
    %v2484 = vsel %vm168, %v2458, %v2483
    %v2486 = vunpack.c.l.s4 1983009808
    %v2487 = vunpack.c.0.s8 %v2486
    %v2488 = vperm.slane %v2482, %v2487
    %v2490 = vunpack.c.l.s4 1983009808
    %v2491 = vunpack.c.0.s8 %v2490
    %v2492 = vperm.slane %v2484, %v2491
    %v2493 = vrot.slane %v2488, 4
    %v2494 = vsel %vm168, %v2493, %v2476
    %v2495 = vrot.slane %v2476, 4
    %v2496 = vsel %vm168, %v2488, %v2495
    %v2498 = vunpack.c.l.s4 1934713408
    %v2499 = vunpack.c.0.s8 %v2498
    %v2500 = vperm.slane %v2494, %v2499
    %v2502 = vunpack.c.l.s4 1934713408
    %v2503 = vunpack.c.0.s8 %v2502
    %v2504 = vperm.slane %v2496, %v2503
    %v2505 = vrot.slane %v2492, 4
    %v2506 = vsel %vm168, %v2505, %v2480
    %v2507 = vrot.slane %v2480, 4
    %v2508 = vsel %vm168, %v2492, %v2507
    %v2510 = vunpack.c.l.s4 1934713408
    %v2511 = vunpack.c.0.s8 %v2510
    %v2512 = vperm.slane %v2506, %v2511
    %v2514 = vunpack.c.l.s4 1934713408
    %v2515 = vunpack.c.0.s8 %v2514
    %v2516 = vperm.slane %v2508, %v2515
    %v2517 = vrot.slane %v2500, 4
    %v2518 = vsel %vm168, 0.0, %v2517
    %v2519 = vrot.slane %v2504, 4
    %v2520 = vsel %vm168, 0.0, %v2519
    %v2521 = vrot.slane %v2512, 4
    %v2522 = vsel %vm168, 0.0, %v2521
    %v2523 = vrot.slane %v2516, 4
    %v2524 = vsel %vm168, 0.0, %v2523
    %v2525 = vrot.slane %v2456, 4
    %v2526 = vsel %vm168, %v2525, %v2448
    %v2527 = vrot.slane %v2448, 4
    %v2528 = vsel %vm168, %v2456, %v2527
    %v2530 = vunpack.c.l.s4 1983009808
    %v2531 = vunpack.c.0.s8 %v2530
    %v2532 = vperm.slane %v2526, %v2531
    %v2534 = vunpack.c.l.s4 1983009808
    %v2535 = vunpack.c.0.s8 %v2534
    %v2536 = vperm.slane %v2528, %v2535
    %v2537 = vrot.slane %v2460, 4
    %v2538 = vsel %vm168, %v2537, %v2452
    %v2539 = vrot.slane %v2452, 4
    %v2540 = vsel %vm168, %v2460, %v2539
    %v2542 = vunpack.c.l.s4 1983009808
    %v2543 = vunpack.c.0.s8 %v2542
    %v2544 = vperm.slane %v2538, %v2543
    %v2546 = vunpack.c.l.s4 1983009808
    %v2547 = vunpack.c.0.s8 %v2546
    %v2548 = vperm.slane %v2540, %v2547
    %v2549 = vrot.slane %v2544, 4
    %v2550 = vsel %vm168, %v2549, %v2532
    %v2551 = vrot.slane %v2532, 4
    %v2552 = vsel %vm168, %v2544, %v2551
    %v2554 = vunpack.c.l.s4 1934713408
    %v2555 = vunpack.c.0.s8 %v2554
    %v2556 = vperm.slane %v2550, %v2555
    %v2558 = vunpack.c.l.s4 1934713408
    %v2559 = vunpack.c.0.s8 %v2558
    %v2560 = vperm.slane %v2552, %v2559
    %v2561 = vrot.slane %v2548, 4
    %v2562 = vsel %vm168, %v2561, %v2536
    %v2563 = vrot.slane %v2536, 4
    %v2564 = vsel %vm168, %v2548, %v2563
    %v2566 = vunpack.c.l.s4 1934713408
    %v2567 = vunpack.c.0.s8 %v2566
    %v2568 = vperm.slane %v2562, %v2567
    %v2570 = vunpack.c.l.s4 1934713408
    %v2571 = vunpack.c.0.s8 %v2570
    %v2572 = vperm.slane %v2564, %v2571
    %v2573 = vrot.slane %v2556, 4
    %v2574 = vsel %vm168, 0.0, %v2573
    %v2575 = vrot.slane %v2560, 4
    %v2576 = vsel %vm168, 0.0, %v2575
    %v2577 = vrot.slane %v2568, 4
    %v2578 = vsel %vm168, 0.0, %v2577
    %v2579 = vrot.slane %v2572, 4
    %v2580 = vsel %vm168, 0.0, %v2579
    %2582 = vrot.lane.b32.xlu0 %v2518, 16
    %v2583 = vpop.permute.xlu0 %2582
    %2586 = vrot.lane.b32.xlu0 %v2504, 32
    %v2587 = vpop.permute.xlu0 %2586
    %2590 = vrot.lane.b32.xlu0 %v2520, 48
    %v2591 = vpop.permute.xlu0 %2590
    %2594 = vrot.lane.b32.xlu0 %v2512, 64
    %v2595 = vpop.permute.xlu0 %2594
    %2598 = vrot.lane.b32.xlu0 %v2522, 80
    %v2599 = vpop.permute.xlu0 %2598
    %2602 = vrot.lane.b32.xlu0 %v2516, 96
    %v2603 = vpop.permute.xlu0 %2602
    %2606 = vrot.lane.b32.xlu0 %v2524, 112
    %v2607 = vpop.permute.xlu0 %2606
    %2610 = vrot.lane.b32.xlu0 %v2574, 16
    %v2611 = vpop.permute.xlu0 %2610
    %2614 = vrot.lane.b32.xlu0 %v2560, 32
    %v2615 = vpop.permute.xlu0 %2614
    %2618 = vrot.lane.b32.xlu0 %v2576, 48
    %v2619 = vpop.permute.xlu0 %2618
    %2622 = vrot.lane.b32.xlu0 %v2568, 64
    %v2623 = vpop.permute.xlu0 %2622
    %2626 = vrot.lane.b32.xlu0 %v2578, 80
    %v2627 = vpop.permute.xlu0 %2626
    %2630 = vrot.lane.b32.xlu0 %v2572, 96
    %v2631 = vpop.permute.xlu0 %2630
    %2634 = vrot.lane.b32.xlu0 %v2580, 112
    %v2635 = vpop.permute.xlu0 %2634
    %v2637 = vsel %vm336, %v2500, %v2583
    %v2638 = vsel %vm338, %v2637, %v2587
    %v2639 = vsel %vm340, %v2638, %v2591
    %v2640 = vsel %vm342, %v2639, %v2595
    %v2641 = vsel %vm344, %v2640, %v2599
    %v2642 = vsel %vm346, %v2641, %v2603
    %v2643 = vsel %vm348, %v2642, %v2607
    %v2644 = vsel %vm336, %v2556, %v2611
    %v2645 = vsel %vm338, %v2644, %v2615
    %v2646 = vsel %vm340, %v2645, %v2619
    %v2647 = vsel %vm342, %v2646, %v2623
    %v2648 = vsel %vm344, %v2647, %v2627
    %v2649 = vsel %vm346, %v2648, %v2631
    %v2650 = vsel %vm348, %v2649, %v2635
    %2651 = vrot.lane.b32.xlu0 %v2251, 126
    %v2652 = vpop.permute.xlu0 %2651
    %2653 = vrot.lane.b32.xlu0 %v2229, 126
    %v2654 = vpop.permute.xlu0 %2653
    %2655 = vrot.lane.b32.xlu0 %v2252, 126
    %v2656 = vpop.permute.xlu0 %2655
    %2657 = vrot.lane.b32.xlu0 %v2232, 126
    %v2658 = vpop.permute.xlu0 %2657
    %2659 = vrot.lane.b32.xlu0 %v2253, 126
    %v2660 = vpop.permute.xlu0 %2659
    %2661 = vrot.lane.b32.xlu0 %v2235, 126
    %v2662 = vpop.permute.xlu0 %2661
    %2663 = vrot.lane.b32.xlu0 %v2254, 126
    %v2664 = vpop.permute.xlu0 %2663
    %2665 = vrot.lane.b32.xlu0 %v2238, 126
    %v2666 = vpop.permute.xlu0 %2665
    %v2675 = vrot.slane %v2660, 4
    %v2676 = vsel %vm168, %v2675, %v2652
    %v2677 = vrot.slane %v2652, 4
    %v2678 = vsel %vm168, %v2660, %v2677
    %v2680 = vunpack.c.l.s4 1983009808
    %v2681 = vunpack.c.0.s8 %v2680
    %v2682 = vperm.slane %v2676, %v2681
    %v2684 = vunpack.c.l.s4 1983009808
    %v2685 = vunpack.c.0.s8 %v2684
    %v2686 = vperm.slane %v2678, %v2685
    %v2687 = vrot.slane %v2664, 4
    %v2688 = vsel %vm168, %v2687, %v2656
    %v2689 = vrot.slane %v2656, 4
    %v2690 = vsel %vm168, %v2664, %v2689
    %v2692 = vunpack.c.l.s4 1983009808
    %v2693 = vunpack.c.0.s8 %v2692
    %v2694 = vperm.slane %v2688, %v2693
    %v2696 = vunpack.c.l.s4 1983009808
    %v2697 = vunpack.c.0.s8 %v2696
    %v2698 = vperm.slane %v2690, %v2697
    %v2699 = vrot.slane %v2694, 4
    %v2700 = vsel %vm168, %v2699, %v2682
    %v2701 = vrot.slane %v2682, 4
    %v2702 = vsel %vm168, %v2694, %v2701
    %v2704 = vunpack.c.l.s4 1934713408
    %v2705 = vunpack.c.0.s8 %v2704
    %v2706 = vperm.slane %v2700, %v2705
    %v2708 = vunpack.c.l.s4 1934713408
    %v2709 = vunpack.c.0.s8 %v2708
    %v2710 = vperm.slane %v2702, %v2709
    %v2711 = vrot.slane %v2698, 4
    %v2712 = vsel %vm168, %v2711, %v2686
    %v2713 = vrot.slane %v2686, 4
    %v2714 = vsel %vm168, %v2698, %v2713
    %v2716 = vunpack.c.l.s4 1934713408
    %v2717 = vunpack.c.0.s8 %v2716
    %v2718 = vperm.slane %v2712, %v2717
    %v2720 = vunpack.c.l.s4 1934713408
    %v2721 = vunpack.c.0.s8 %v2720
    %v2722 = vperm.slane %v2714, %v2721
    %v2723 = vrot.slane %v2706, 4
    %v2724 = vsel %vm168, 0.0, %v2723
    %v2725 = vrot.slane %v2710, 4
    %v2726 = vsel %vm168, 0.0, %v2725
    %v2727 = vrot.slane %v2718, 4
    %v2728 = vsel %vm168, 0.0, %v2727
    %v2729 = vrot.slane %v2722, 4
    %v2730 = vsel %vm168, 0.0, %v2729
    %v2731 = vrot.slane %v2662, 4
    %v2732 = vsel %vm168, %v2731, %v2654
    %v2733 = vrot.slane %v2654, 4
    %v2734 = vsel %vm168, %v2662, %v2733
    %v2736 = vunpack.c.l.s4 1983009808
    %v2737 = vunpack.c.0.s8 %v2736
    %v2738 = vperm.slane %v2732, %v2737
    %v2740 = vunpack.c.l.s4 1983009808
    %v2741 = vunpack.c.0.s8 %v2740
    %v2742 = vperm.slane %v2734, %v2741
    %v2743 = vrot.slane %v2666, 4
    %v2744 = vsel %vm168, %v2743, %v2658
    %v2745 = vrot.slane %v2658, 4
    %v2746 = vsel %vm168, %v2666, %v2745
    %v2748 = vunpack.c.l.s4 1983009808
    %v2749 = vunpack.c.0.s8 %v2748
    %v2750 = vperm.slane %v2744, %v2749
    %v2752 = vunpack.c.l.s4 1983009808
    %v2753 = vunpack.c.0.s8 %v2752
    %v2754 = vperm.slane %v2746, %v2753
    %v2755 = vrot.slane %v2750, 4
    %v2756 = vsel %vm168, %v2755, %v2738
    %v2757 = vrot.slane %v2738, 4
    %v2758 = vsel %vm168, %v2750, %v2757
    %v2760 = vunpack.c.l.s4 1934713408
    %v2761 = vunpack.c.0.s8 %v2760
    %v2762 = vperm.slane %v2756, %v2761
    %v2764 = vunpack.c.l.s4 1934713408
    %v2765 = vunpack.c.0.s8 %v2764
    %v2766 = vperm.slane %v2758, %v2765
    %v2767 = vrot.slane %v2754, 4
    %v2768 = vsel %vm168, %v2767, %v2742
    %v2769 = vrot.slane %v2742, 4
    %v2770 = vsel %vm168, %v2754, %v2769
    %v2772 = vunpack.c.l.s4 1934713408
    %v2773 = vunpack.c.0.s8 %v2772
    %v2774 = vperm.slane %v2768, %v2773
    %v2776 = vunpack.c.l.s4 1934713408
    %v2777 = vunpack.c.0.s8 %v2776
    %v2778 = vperm.slane %v2770, %v2777
    %v2779 = vrot.slane %v2762, 4
    %v2780 = vsel %vm168, 0.0, %v2779
    %v2781 = vrot.slane %v2766, 4
    %v2782 = vsel %vm168, 0.0, %v2781
    %v2783 = vrot.slane %v2774, 4
    %v2784 = vsel %vm168, 0.0, %v2783
    %v2785 = vrot.slane %v2778, 4
    %v2786 = vsel %vm168, 0.0, %v2785
    %2788 = vrot.lane.b32.xlu0 %v2724, 16
    %v2789 = vpop.permute.xlu0 %2788
    %2792 = vrot.lane.b32.xlu0 %v2710, 32
    %v2793 = vpop.permute.xlu0 %2792
    %2796 = vrot.lane.b32.xlu0 %v2726, 48
    %v2797 = vpop.permute.xlu0 %2796
    %2800 = vrot.lane.b32.xlu0 %v2718, 64
    %v2801 = vpop.permute.xlu0 %2800
    %2804 = vrot.lane.b32.xlu0 %v2728, 80
    %v2805 = vpop.permute.xlu0 %2804
    %2808 = vrot.lane.b32.xlu0 %v2722, 96
    %v2809 = vpop.permute.xlu0 %2808
    %2812 = vrot.lane.b32.xlu0 %v2730, 112
    %v2813 = vpop.permute.xlu0 %2812
    %2816 = vrot.lane.b32.xlu0 %v2780, 16
    %v2817 = vpop.permute.xlu0 %2816
    %2820 = vrot.lane.b32.xlu0 %v2766, 32
    %v2821 = vpop.permute.xlu0 %2820
    %2824 = vrot.lane.b32.xlu0 %v2782, 48
    %v2825 = vpop.permute.xlu0 %2824
    %2828 = vrot.lane.b32.xlu0 %v2774, 64
    %v2829 = vpop.permute.xlu0 %2828
    %2832 = vrot.lane.b32.xlu0 %v2784, 80
    %v2833 = vpop.permute.xlu0 %2832
    %2836 = vrot.lane.b32.xlu0 %v2778, 96
    %v2837 = vpop.permute.xlu0 %2836
    %2840 = vrot.lane.b32.xlu0 %v2786, 112
    %v2841 = vpop.permute.xlu0 %2840
    %v2843 = vsel %vm336, %v2706, %v2789
    %v2844 = vsel %vm338, %v2843, %v2793
    %v2845 = vsel %vm340, %v2844, %v2797
    %v2846 = vsel %vm342, %v2845, %v2801
    %v2847 = vsel %vm344, %v2846, %v2805
    %v2848 = vsel %vm346, %v2847, %v2809
    %v2849 = vsel %vm348, %v2848, %v2813
    %v2850 = vsel %vm336, %v2762, %v2817
    %v2851 = vsel %vm338, %v2850, %v2821
    %v2852 = vsel %vm340, %v2851, %v2825
    %v2853 = vsel %vm342, %v2852, %v2829
    %v2854 = vsel %vm344, %v2853, %v2833
    %v2855 = vsel %vm346, %v2854, %v2837
    %v2856 = vsel %vm348, %v2855, %v2841
    %v2861 = vrot.slane %v2251, 1
    %v2862 = vrot.slane %v2229, 1
    %v2863 = vsel %vm777, %v2861, %v2862
    %v2864 = vrot.slane %v2255, 1
    %v2865 = vsel %vm777, %v2862, %v2864
    %v2866 = vrot.slane %v2252, 1
    %v2867 = vrot.slane %v2232, 1
    %v2868 = vsel %vm777, %v2866, %v2867
    %v2869 = vrot.slane %v2256, 1
    %v2870 = vsel %vm777, %v2867, %v2869
    %v2871 = vrot.slane %v2253, 1
    %v2872 = vrot.slane %v2235, 1
    %v2873 = vsel %vm777, %v2871, %v2872
    %v2874 = vrot.slane %v2257, 1
    %v2875 = vsel %vm777, %v2872, %v2874
    %v2876 = vrot.slane %v2254, 1
    %v2877 = vrot.slane %v2238, 1
    %v2878 = vsel %vm777, %v2876, %v2877
    %v2879 = vrot.slane %v2258, 1
    %v2880 = vsel %vm777, %v2877, %v2879
    %v2889 = vrot.slane %v2873, 4
    %v2890 = vsel %vm168, %v2889, %v2863
    %v2891 = vrot.slane %v2863, 4
    %v2892 = vsel %vm168, %v2873, %v2891
    %v2894 = vunpack.c.l.s4 1983009808
    %v2895 = vunpack.c.0.s8 %v2894
    %v2896 = vperm.slane %v2890, %v2895
    %v2898 = vunpack.c.l.s4 1983009808
    %v2899 = vunpack.c.0.s8 %v2898
    %v2900 = vperm.slane %v2892, %v2899
    %v2901 = vrot.slane %v2878, 4
    %v2902 = vsel %vm168, %v2901, %v2868
    %v2903 = vrot.slane %v2868, 4
    %v2904 = vsel %vm168, %v2878, %v2903
    %v2906 = vunpack.c.l.s4 1983009808
    %v2907 = vunpack.c.0.s8 %v2906
    %v2908 = vperm.slane %v2902, %v2907
    %v2910 = vunpack.c.l.s4 1983009808
    %v2911 = vunpack.c.0.s8 %v2910
    %v2912 = vperm.slane %v2904, %v2911
    %v2913 = vrot.slane %v2908, 4
    %v2914 = vsel %vm168, %v2913, %v2896
    %v2915 = vrot.slane %v2896, 4
    %v2916 = vsel %vm168, %v2908, %v2915
    %v2918 = vunpack.c.l.s4 1934713408
    %v2919 = vunpack.c.0.s8 %v2918
    %v2920 = vperm.slane %v2914, %v2919
    %v2922 = vunpack.c.l.s4 1934713408
    %v2923 = vunpack.c.0.s8 %v2922
    %v2924 = vperm.slane %v2916, %v2923
    %v2925 = vrot.slane %v2912, 4
    %v2926 = vsel %vm168, %v2925, %v2900
    %v2927 = vrot.slane %v2900, 4
    %v2928 = vsel %vm168, %v2912, %v2927
    %v2930 = vunpack.c.l.s4 1934713408
    %v2931 = vunpack.c.0.s8 %v2930
    %v2932 = vperm.slane %v2926, %v2931
    %v2934 = vunpack.c.l.s4 1934713408
    %v2935 = vunpack.c.0.s8 %v2934
    %v2936 = vperm.slane %v2928, %v2935
    %v2937 = vrot.slane %v2920, 4
    %v2938 = vsel %vm168, 0.0, %v2937
    %v2939 = vrot.slane %v2924, 4
    %v2940 = vsel %vm168, 0.0, %v2939
    %v2941 = vrot.slane %v2932, 4
    %v2942 = vsel %vm168, 0.0, %v2941
    %v2943 = vrot.slane %v2936, 4
    %v2944 = vsel %vm168, 0.0, %v2943
    %v2945 = vrot.slane %v2875, 4
    %v2946 = vsel %vm168, %v2945, %v2865
    %v2947 = vrot.slane %v2865, 4
    %v2948 = vsel %vm168, %v2875, %v2947
    %v2950 = vunpack.c.l.s4 1983009808
    %v2951 = vunpack.c.0.s8 %v2950
    %v2952 = vperm.slane %v2946, %v2951
    %v2954 = vunpack.c.l.s4 1983009808
    %v2955 = vunpack.c.0.s8 %v2954
    %v2956 = vperm.slane %v2948, %v2955
    %v2957 = vrot.slane %v2880, 4
    %v2958 = vsel %vm168, %v2957, %v2870
    %v2959 = vrot.slane %v2870, 4
    %v2960 = vsel %vm168, %v2880, %v2959
    %v2962 = vunpack.c.l.s4 1983009808
    %v2963 = vunpack.c.0.s8 %v2962
    %v2964 = vperm.slane %v2958, %v2963
    %v2966 = vunpack.c.l.s4 1983009808
    %v2967 = vunpack.c.0.s8 %v2966
    %v2968 = vperm.slane %v2960, %v2967
    %v2969 = vrot.slane %v2964, 4
    %v2970 = vsel %vm168, %v2969, %v2952
    %v2971 = vrot.slane %v2952, 4
    %v2972 = vsel %vm168, %v2964, %v2971
    %v2974 = vunpack.c.l.s4 1934713408
    %v2975 = vunpack.c.0.s8 %v2974
    %v2976 = vperm.slane %v2970, %v2975
    %v2978 = vunpack.c.l.s4 1934713408
    %v2979 = vunpack.c.0.s8 %v2978
    %v2980 = vperm.slane %v2972, %v2979
    %v2981 = vrot.slane %v2968, 4
    %v2982 = vsel %vm168, %v2981, %v2956
    %v2983 = vrot.slane %v2956, 4
    %v2984 = vsel %vm168, %v2968, %v2983
    %v2986 = vunpack.c.l.s4 1934713408
    %v2987 = vunpack.c.0.s8 %v2986
    %v2988 = vperm.slane %v2982, %v2987
    %v2990 = vunpack.c.l.s4 1934713408
    %v2991 = vunpack.c.0.s8 %v2990
    %v2992 = vperm.slane %v2984, %v2991
    %v2993 = vrot.slane %v2976, 4
    %v2994 = vsel %vm168, 0.0, %v2993
    %v2995 = vrot.slane %v2980, 4
    %v2996 = vsel %vm168, 0.0, %v2995
    %v2997 = vrot.slane %v2988, 4
    %v2998 = vsel %vm168, 0.0, %v2997
    %v2999 = vrot.slane %v2992, 4
    %v3000 = vsel %vm168, 0.0, %v2999
    %3002 = vrot.lane.b32.xlu0 %v2938, 16
    %v3003 = vpop.permute.xlu0 %3002
    %3006 = vrot.lane.b32.xlu0 %v2924, 32
    %v3007 = vpop.permute.xlu0 %3006
    %3010 = vrot.lane.b32.xlu0 %v2940, 48
    %v3011 = vpop.permute.xlu0 %3010
    %3014 = vrot.lane.b32.xlu0 %v2932, 64
    %v3015 = vpop.permute.xlu0 %3014
    %3018 = vrot.lane.b32.xlu0 %v2942, 80
    %v3019 = vpop.permute.xlu0 %3018
    %3022 = vrot.lane.b32.xlu0 %v2936, 96
    %v3023 = vpop.permute.xlu0 %3022
    %3026 = vrot.lane.b32.xlu0 %v2944, 112
    %v3027 = vpop.permute.xlu0 %3026
    %3030 = vrot.lane.b32.xlu0 %v2994, 16
    %v3031 = vpop.permute.xlu0 %3030
    %3034 = vrot.lane.b32.xlu0 %v2980, 32
    %v3035 = vpop.permute.xlu0 %3034
    %3038 = vrot.lane.b32.xlu0 %v2996, 48
    %v3039 = vpop.permute.xlu0 %3038
    %3042 = vrot.lane.b32.xlu0 %v2988, 64
    %v3043 = vpop.permute.xlu0 %3042
    %3046 = vrot.lane.b32.xlu0 %v2998, 80
    %v3047 = vpop.permute.xlu0 %3046
    %3050 = vrot.lane.b32.xlu0 %v2992, 96
    %v3051 = vpop.permute.xlu0 %3050
    %3054 = vrot.lane.b32.xlu0 %v3000, 112
    %v3055 = vpop.permute.xlu0 %3054
    %v3057 = vsel %vm336, %v2920, %v3003
    %v3058 = vsel %vm338, %v3057, %v3007
    %v3059 = vsel %vm340, %v3058, %v3011
    %v3060 = vsel %vm342, %v3059, %v3015
    %v3061 = vsel %vm344, %v3060, %v3019
    %v3062 = vsel %vm346, %v3061, %v3023
    %v3063 = vsel %vm348, %v3062, %v3027
    %v3064 = vsel %vm336, %v2976, %v3031
    %v3065 = vsel %vm338, %v3064, %v3035
    %v3066 = vsel %vm340, %v3065, %v3039
    %v3067 = vsel %vm342, %v3066, %v3043
    %v3068 = vsel %vm344, %v3067, %v3047
    %v3069 = vsel %vm346, %v3068, %v3051
    %v3070 = vsel %vm348, %v3069, %v3055
    %3071 = vrot.lane.b32.xlu0 %v2863, 127
    %v3072 = vpop.permute.xlu0 %3071
    %3073 = vrot.lane.b32.xlu0 %v2865, 127
    %v3074 = vpop.permute.xlu0 %3073
    %3075 = vrot.lane.b32.xlu0 %v2868, 127
    %v3076 = vpop.permute.xlu0 %3075
    %3077 = vrot.lane.b32.xlu0 %v2870, 127
    %v3078 = vpop.permute.xlu0 %3077
    %3079 = vrot.lane.b32.xlu0 %v2873, 127
    %v3080 = vpop.permute.xlu0 %3079
    %3081 = vrot.lane.b32.xlu0 %v2875, 127
    %v3082 = vpop.permute.xlu0 %3081
    %3083 = vrot.lane.b32.xlu0 %v2878, 127
    %v3084 = vpop.permute.xlu0 %3083
    %3085 = vrot.lane.b32.xlu0 %v2880, 127
    %v3086 = vpop.permute.xlu0 %3085
    %v3095 = vrot.slane %v3080, 4
    %v3096 = vsel %vm168, %v3095, %v3072
    %v3097 = vrot.slane %v3072, 4
    %v3098 = vsel %vm168, %v3080, %v3097
    %v3100 = vunpack.c.l.s4 1983009808
    %v3101 = vunpack.c.0.s8 %v3100
    %v3102 = vperm.slane %v3096, %v3101
    %v3104 = vunpack.c.l.s4 1983009808
    %v3105 = vunpack.c.0.s8 %v3104
    %v3106 = vperm.slane %v3098, %v3105
    %v3107 = vrot.slane %v3084, 4
    %v3108 = vsel %vm168, %v3107, %v3076
    %v3109 = vrot.slane %v3076, 4
    %v3110 = vsel %vm168, %v3084, %v3109
    %v3112 = vunpack.c.l.s4 1983009808
    %v3113 = vunpack.c.0.s8 %v3112
    %v3114 = vperm.slane %v3108, %v3113
    %v3116 = vunpack.c.l.s4 1983009808
    %v3117 = vunpack.c.0.s8 %v3116
    %v3118 = vperm.slane %v3110, %v3117
    %v3119 = vrot.slane %v3114, 4
    %v3120 = vsel %vm168, %v3119, %v3102
    %v3121 = vrot.slane %v3102, 4
    %v3122 = vsel %vm168, %v3114, %v3121
    %v3124 = vunpack.c.l.s4 1934713408
    %v3125 = vunpack.c.0.s8 %v3124
    %v3126 = vperm.slane %v3120, %v3125
    %v3128 = vunpack.c.l.s4 1934713408
    %v3129 = vunpack.c.0.s8 %v3128
    %v3130 = vperm.slane %v3122, %v3129
    %v3131 = vrot.slane %v3118, 4
    %v3132 = vsel %vm168, %v3131, %v3106
    %v3133 = vrot.slane %v3106, 4
    %v3134 = vsel %vm168, %v3118, %v3133
    %v3136 = vunpack.c.l.s4 1934713408
    %v3137 = vunpack.c.0.s8 %v3136
    %v3138 = vperm.slane %v3132, %v3137
    %v3140 = vunpack.c.l.s4 1934713408
    %v3141 = vunpack.c.0.s8 %v3140
    %v3142 = vperm.slane %v3134, %v3141
    %v3143 = vrot.slane %v3126, 4
    %v3144 = vsel %vm168, 0.0, %v3143
    %v3145 = vrot.slane %v3130, 4
    %v3146 = vsel %vm168, 0.0, %v3145
    %v3147 = vrot.slane %v3138, 4
    %v3148 = vsel %vm168, 0.0, %v3147
    %v3149 = vrot.slane %v3142, 4
    %v3150 = vsel %vm168, 0.0, %v3149
    %v3151 = vrot.slane %v3082, 4
    %v3152 = vsel %vm168, %v3151, %v3074
    %v3153 = vrot.slane %v3074, 4
    %v3154 = vsel %vm168, %v3082, %v3153
    %v3156 = vunpack.c.l.s4 1983009808
    %v3157 = vunpack.c.0.s8 %v3156
    %v3158 = vperm.slane %v3152, %v3157
    %v3160 = vunpack.c.l.s4 1983009808
    %v3161 = vunpack.c.0.s8 %v3160
    %v3162 = vperm.slane %v3154, %v3161
    %v3163 = vrot.slane %v3086, 4
    %v3164 = vsel %vm168, %v3163, %v3078
    %v3165 = vrot.slane %v3078, 4
    %v3166 = vsel %vm168, %v3086, %v3165
    %v3168 = vunpack.c.l.s4 1983009808
    %v3169 = vunpack.c.0.s8 %v3168
    %v3170 = vperm.slane %v3164, %v3169
    %v3172 = vunpack.c.l.s4 1983009808
    %v3173 = vunpack.c.0.s8 %v3172
    %v3174 = vperm.slane %v3166, %v3173
    %v3175 = vrot.slane %v3170, 4
    %v3176 = vsel %vm168, %v3175, %v3158
    %v3177 = vrot.slane %v3158, 4
    %v3178 = vsel %vm168, %v3170, %v3177
    %v3180 = vunpack.c.l.s4 1934713408
    %v3181 = vunpack.c.0.s8 %v3180
    %v3182 = vperm.slane %v3176, %v3181
    %v3184 = vunpack.c.l.s4 1934713408
    %v3185 = vunpack.c.0.s8 %v3184
    %v3186 = vperm.slane %v3178, %v3185
    %v3187 = vrot.slane %v3174, 4
    %v3188 = vsel %vm168, %v3187, %v3162
    %v3189 = vrot.slane %v3162, 4
    %v3190 = vsel %vm168, %v3174, %v3189
    %v3192 = vunpack.c.l.s4 1934713408
    %v3193 = vunpack.c.0.s8 %v3192
    %v3194 = vperm.slane %v3188, %v3193
    %v3196 = vunpack.c.l.s4 1934713408
    %v3197 = vunpack.c.0.s8 %v3196
    %v3198 = vperm.slane %v3190, %v3197
    %v3199 = vrot.slane %v3182, 4
    %v3200 = vsel %vm168, 0.0, %v3199
    %v3201 = vrot.slane %v3186, 4
    %v3202 = vsel %vm168, 0.0, %v3201
    %v3203 = vrot.slane %v3194, 4
    %v3204 = vsel %vm168, 0.0, %v3203
    %v3205 = vrot.slane %v3198, 4
    %v3206 = vsel %vm168, 0.0, %v3205
    %3208 = vrot.lane.b32.xlu0 %v3144, 16
    %v3209 = vpop.permute.xlu0 %3208
    %3212 = vrot.lane.b32.xlu0 %v3130, 32
    %v3213 = vpop.permute.xlu0 %3212
    %3216 = vrot.lane.b32.xlu0 %v3146, 48
    %v3217 = vpop.permute.xlu0 %3216
    %3220 = vrot.lane.b32.xlu0 %v3138, 64
    %v3221 = vpop.permute.xlu0 %3220
    %3224 = vrot.lane.b32.xlu0 %v3148, 80
    %v3225 = vpop.permute.xlu0 %3224
    %3228 = vrot.lane.b32.xlu0 %v3142, 96
    %v3229 = vpop.permute.xlu0 %3228
    %3232 = vrot.lane.b32.xlu0 %v3150, 112
    %v3233 = vpop.permute.xlu0 %3232
    %3236 = vrot.lane.b32.xlu0 %v3200, 16
    %v3237 = vpop.permute.xlu0 %3236
    %3240 = vrot.lane.b32.xlu0 %v3186, 32
    %v3241 = vpop.permute.xlu0 %3240
    %3244 = vrot.lane.b32.xlu0 %v3202, 48
    %v3245 = vpop.permute.xlu0 %3244
    %3248 = vrot.lane.b32.xlu0 %v3194, 64
    %v3249 = vpop.permute.xlu0 %3248
    %3252 = vrot.lane.b32.xlu0 %v3204, 80
    %v3253 = vpop.permute.xlu0 %3252
    %3256 = vrot.lane.b32.xlu0 %v3198, 96
    %v3257 = vpop.permute.xlu0 %3256
    %3260 = vrot.lane.b32.xlu0 %v3206, 112
    %v3261 = vpop.permute.xlu0 %3260
    %v3263 = vsel %vm336, %v3126, %v3209
    %v3264 = vsel %vm338, %v3263, %v3213
    %v3265 = vsel %vm340, %v3264, %v3217
    %v3266 = vsel %vm342, %v3265, %v3221
    %v3267 = vsel %vm344, %v3266, %v3225
    %v3268 = vsel %vm346, %v3267, %v3229
    %v3269 = vsel %vm348, %v3268, %v3233
    %v3270 = vsel %vm336, %v3182, %v3237
    %v3271 = vsel %vm338, %v3270, %v3241
    %v3272 = vsel %vm340, %v3271, %v3245
    %v3273 = vsel %vm342, %v3272, %v3249
    %v3274 = vsel %vm344, %v3273, %v3253
    %v3275 = vsel %vm346, %v3274, %v3257
    %v3276 = vsel %vm348, %v3275, %v3261
    %3277 = vrot.lane.b32.xlu0 %v2863, 126
    %v3278 = vpop.permute.xlu0 %3277
    %3279 = vrot.lane.b32.xlu0 %v2865, 126
    %v3280 = vpop.permute.xlu0 %3279
    %3281 = vrot.lane.b32.xlu0 %v2868, 126
    %v3282 = vpop.permute.xlu0 %3281
    %3283 = vrot.lane.b32.xlu0 %v2870, 126
    %v3284 = vpop.permute.xlu0 %3283
    %3285 = vrot.lane.b32.xlu0 %v2873, 126
    %v3286 = vpop.permute.xlu0 %3285
    %3287 = vrot.lane.b32.xlu0 %v2875, 126
    %v3288 = vpop.permute.xlu0 %3287
    %3289 = vrot.lane.b32.xlu0 %v2878, 126
    %v3290 = vpop.permute.xlu0 %3289
    %3291 = vrot.lane.b32.xlu0 %v2880, 126
    %v3292 = vpop.permute.xlu0 %3291
    %v3301 = vrot.slane %v3286, 4
    %v3302 = vsel %vm168, %v3301, %v3278
    %v3303 = vrot.slane %v3278, 4
    %v3304 = vsel %vm168, %v3286, %v3303
    %v3306 = vunpack.c.l.s4 1983009808
    %v3307 = vunpack.c.0.s8 %v3306
    %v3308 = vperm.slane %v3302, %v3307
    %v3310 = vunpack.c.l.s4 1983009808
    %v3311 = vunpack.c.0.s8 %v3310
    %v3312 = vperm.slane %v3304, %v3311
    %v3313 = vrot.slane %v3290, 4
    %v3314 = vsel %vm168, %v3313, %v3282
    %v3315 = vrot.slane %v3282, 4
    %v3316 = vsel %vm168, %v3290, %v3315
    %v3318 = vunpack.c.l.s4 1983009808
    %v3319 = vunpack.c.0.s8 %v3318
    %v3320 = vperm.slane %v3314, %v3319
    %v3322 = vunpack.c.l.s4 1983009808
    %v3323 = vunpack.c.0.s8 %v3322
    %v3324 = vperm.slane %v3316, %v3323
    %v3325 = vrot.slane %v3320, 4
    %v3326 = vsel %vm168, %v3325, %v3308
    %v3327 = vrot.slane %v3308, 4
    %v3328 = vsel %vm168, %v3320, %v3327
    %v3330 = vunpack.c.l.s4 1934713408
    %v3331 = vunpack.c.0.s8 %v3330
    %v3332 = vperm.slane %v3326, %v3331
    %v3334 = vunpack.c.l.s4 1934713408
    %v3335 = vunpack.c.0.s8 %v3334
    %v3336 = vperm.slane %v3328, %v3335
    %v3337 = vrot.slane %v3324, 4
    %v3338 = vsel %vm168, %v3337, %v3312
    %v3339 = vrot.slane %v3312, 4
    %v3340 = vsel %vm168, %v3324, %v3339
    %v3342 = vunpack.c.l.s4 1934713408
    %v3343 = vunpack.c.0.s8 %v3342
    %v3344 = vperm.slane %v3338, %v3343
    %v3346 = vunpack.c.l.s4 1934713408
    %v3347 = vunpack.c.0.s8 %v3346
    %v3348 = vperm.slane %v3340, %v3347
    %v3349 = vrot.slane %v3332, 4
    %v3350 = vsel %vm168, 0.0, %v3349
    %v3351 = vrot.slane %v3336, 4
    %v3352 = vsel %vm168, 0.0, %v3351
    %v3353 = vrot.slane %v3344, 4
    %v3354 = vsel %vm168, 0.0, %v3353
    %v3355 = vrot.slane %v3348, 4
    %v3356 = vsel %vm168, 0.0, %v3355
    %v3357 = vrot.slane %v3288, 4
    %v3358 = vsel %vm168, %v3357, %v3280
    %v3359 = vrot.slane %v3280, 4
    %v3360 = vsel %vm168, %v3288, %v3359
    %v3362 = vunpack.c.l.s4 1983009808
    %v3363 = vunpack.c.0.s8 %v3362
    %v3364 = vperm.slane %v3358, %v3363
    %v3366 = vunpack.c.l.s4 1983009808
    %v3367 = vunpack.c.0.s8 %v3366
    %v3368 = vperm.slane %v3360, %v3367
    %v3369 = vrot.slane %v3292, 4
    %v3370 = vsel %vm168, %v3369, %v3284
    %v3371 = vrot.slane %v3284, 4
    %v3372 = vsel %vm168, %v3292, %v3371
    %v3374 = vunpack.c.l.s4 1983009808
    %v3375 = vunpack.c.0.s8 %v3374
    %v3376 = vperm.slane %v3370, %v3375
    %v3378 = vunpack.c.l.s4 1983009808
    %v3379 = vunpack.c.0.s8 %v3378
    %v3380 = vperm.slane %v3372, %v3379
    %v3381 = vrot.slane %v3376, 4
    %v3382 = vsel %vm168, %v3381, %v3364
    %v3383 = vrot.slane %v3364, 4
    %v3384 = vsel %vm168, %v3376, %v3383
    %v3386 = vunpack.c.l.s4 1934713408
    %v3387 = vunpack.c.0.s8 %v3386
    %v3388 = vperm.slane %v3382, %v3387
    %v3390 = vunpack.c.l.s4 1934713408
    %v3391 = vunpack.c.0.s8 %v3390
    %v3392 = vperm.slane %v3384, %v3391
    %v3393 = vrot.slane %v3380, 4
    %v3394 = vsel %vm168, %v3393, %v3368
    %v3395 = vrot.slane %v3368, 4
    %v3396 = vsel %vm168, %v3380, %v3395
    %v3398 = vunpack.c.l.s4 1934713408
    %v3399 = vunpack.c.0.s8 %v3398
    %v3400 = vperm.slane %v3394, %v3399
    %v3402 = vunpack.c.l.s4 1934713408
    %v3403 = vunpack.c.0.s8 %v3402
    %v3404 = vperm.slane %v3396, %v3403
    %v3405 = vrot.slane %v3388, 4
    %v3406 = vsel %vm168, 0.0, %v3405
    %v3407 = vrot.slane %v3392, 4
    %v3408 = vsel %vm168, 0.0, %v3407
    %v3409 = vrot.slane %v3400, 4
    %v3410 = vsel %vm168, 0.0, %v3409
    %v3411 = vrot.slane %v3404, 4
    %v3412 = vsel %vm168, 0.0, %v3411
    %3414 = vrot.lane.b32.xlu0 %v3350, 16
    %v3415 = vpop.permute.xlu0 %3414
    %3418 = vrot.lane.b32.xlu0 %v3336, 32
    %v3419 = vpop.permute.xlu0 %3418
    %3422 = vrot.lane.b32.xlu0 %v3352, 48
    %v3423 = vpop.permute.xlu0 %3422
    %3426 = vrot.lane.b32.xlu0 %v3344, 64
    %v3427 = vpop.permute.xlu0 %3426
    %3430 = vrot.lane.b32.xlu0 %v3354, 80
    %v3431 = vpop.permute.xlu0 %3430
    %3434 = vrot.lane.b32.xlu0 %v3348, 96
    %v3435 = vpop.permute.xlu0 %3434
    %3438 = vrot.lane.b32.xlu0 %v3356, 112
    %v3439 = vpop.permute.xlu0 %3438
    %3442 = vrot.lane.b32.xlu0 %v3406, 16
    %v3443 = vpop.permute.xlu0 %3442
    %3446 = vrot.lane.b32.xlu0 %v3392, 32
    %v3447 = vpop.permute.xlu0 %3446
    %3450 = vrot.lane.b32.xlu0 %v3408, 48
    %v3451 = vpop.permute.xlu0 %3450
    %3454 = vrot.lane.b32.xlu0 %v3400, 64
    %v3455 = vpop.permute.xlu0 %3454
    %3458 = vrot.lane.b32.xlu0 %v3410, 80
    %v3459 = vpop.permute.xlu0 %3458
    %3462 = vrot.lane.b32.xlu0 %v3404, 96
    %v3463 = vpop.permute.xlu0 %3462
    %3466 = vrot.lane.b32.xlu0 %v3412, 112
    %v3467 = vpop.permute.xlu0 %3466
    %v3469 = vsel %vm336, %v3332, %v3415
    %v3470 = vsel %vm338, %v3469, %v3419
    %v3471 = vsel %vm340, %v3470, %v3423
    %v3472 = vsel %vm342, %v3471, %v3427
    %v3473 = vsel %vm344, %v3472, %v3431
    %v3474 = vsel %vm346, %v3473, %v3435
    %v3475 = vsel %vm348, %v3474, %v3439
    %v3476 = vsel %vm336, %v3388, %v3443
    %v3477 = vsel %vm338, %v3476, %v3447
    %v3478 = vsel %vm340, %v3477, %v3451
    %v3479 = vsel %vm342, %v3478, %v3455
    %v3480 = vsel %vm344, %v3479, %v3459
    %v3481 = vsel %vm346, %v3480, %v3463
    %v3482 = vsel %vm348, %v3481, %v3467
    %v3483 = vrot.slane %v2251, 2
    %v3484 = vrot.slane %v2229, 2
    %v3485 = vsel %vm1400, %v3483, %v3484
    %v3486 = vrot.slane %v2255, 2
    %v3487 = vsel %vm1400, %v3484, %v3486
    %v3488 = vrot.slane %v2252, 2
    %v3489 = vrot.slane %v2232, 2
    %v3490 = vsel %vm1400, %v3488, %v3489
    %v3491 = vrot.slane %v2256, 2
    %v3492 = vsel %vm1400, %v3489, %v3491
    %v3493 = vrot.slane %v2253, 2
    %v3494 = vrot.slane %v2235, 2
    %v3495 = vsel %vm1400, %v3493, %v3494
    %v3496 = vrot.slane %v2257, 2
    %v3497 = vsel %vm1400, %v3494, %v3496
    %v3498 = vrot.slane %v2254, 2
    %v3499 = vrot.slane %v2238, 2
    %v3500 = vsel %vm1400, %v3498, %v3499
    %v3501 = vrot.slane %v2258, 2
    %v3502 = vsel %vm1400, %v3499, %v3501
    %v3511 = vrot.slane %v3495, 4
    %v3512 = vsel %vm168, %v3511, %v3485
    %v3513 = vrot.slane %v3485, 4
    %v3514 = vsel %vm168, %v3495, %v3513
    %v3516 = vunpack.c.l.s4 1983009808
    %v3517 = vunpack.c.0.s8 %v3516
    %v3518 = vperm.slane %v3512, %v3517
    %v3520 = vunpack.c.l.s4 1983009808
    %v3521 = vunpack.c.0.s8 %v3520
    %v3522 = vperm.slane %v3514, %v3521
    %v3523 = vrot.slane %v3500, 4
    %v3524 = vsel %vm168, %v3523, %v3490
    %v3525 = vrot.slane %v3490, 4
    %v3526 = vsel %vm168, %v3500, %v3525
    %v3528 = vunpack.c.l.s4 1983009808
    %v3529 = vunpack.c.0.s8 %v3528
    %v3530 = vperm.slane %v3524, %v3529
    %v3532 = vunpack.c.l.s4 1983009808
    %v3533 = vunpack.c.0.s8 %v3532
    %v3534 = vperm.slane %v3526, %v3533
    %v3535 = vrot.slane %v3530, 4
    %v3536 = vsel %vm168, %v3535, %v3518
    %v3537 = vrot.slane %v3518, 4
    %v3538 = vsel %vm168, %v3530, %v3537
    %v3540 = vunpack.c.l.s4 1934713408
    %v3541 = vunpack.c.0.s8 %v3540
    %v3542 = vperm.slane %v3536, %v3541
    %v3544 = vunpack.c.l.s4 1934713408
    %v3545 = vunpack.c.0.s8 %v3544
    %v3546 = vperm.slane %v3538, %v3545
    %v3547 = vrot.slane %v3534, 4
    %v3548 = vsel %vm168, %v3547, %v3522
    %v3549 = vrot.slane %v3522, 4
    %v3550 = vsel %vm168, %v3534, %v3549
    %v3552 = vunpack.c.l.s4 1934713408
    %v3553 = vunpack.c.0.s8 %v3552
    %v3554 = vperm.slane %v3548, %v3553
    %v3556 = vunpack.c.l.s4 1934713408
    %v3557 = vunpack.c.0.s8 %v3556
    %v3558 = vperm.slane %v3550, %v3557
    %v3559 = vrot.slane %v3542, 4
    %v3560 = vsel %vm168, 0.0, %v3559
    %v3561 = vrot.slane %v3546, 4
    %v3562 = vsel %vm168, 0.0, %v3561
    %v3563 = vrot.slane %v3554, 4
    %v3564 = vsel %vm168, 0.0, %v3563
    %v3565 = vrot.slane %v3558, 4
    %v3566 = vsel %vm168, 0.0, %v3565
    %v3567 = vrot.slane %v3497, 4
    %v3568 = vsel %vm168, %v3567, %v3487
    %v3569 = vrot.slane %v3487, 4
    %v3570 = vsel %vm168, %v3497, %v3569
    %v3572 = vunpack.c.l.s4 1983009808
    %v3573 = vunpack.c.0.s8 %v3572
    %v3574 = vperm.slane %v3568, %v3573
    %v3576 = vunpack.c.l.s4 1983009808
    %v3577 = vunpack.c.0.s8 %v3576
    %v3578 = vperm.slane %v3570, %v3577
    %v3579 = vrot.slane %v3502, 4
    %v3580 = vsel %vm168, %v3579, %v3492
    %v3581 = vrot.slane %v3492, 4
    %v3582 = vsel %vm168, %v3502, %v3581
    %v3584 = vunpack.c.l.s4 1983009808
    %v3585 = vunpack.c.0.s8 %v3584
    %v3586 = vperm.slane %v3580, %v3585
    %v3588 = vunpack.c.l.s4 1983009808
    %v3589 = vunpack.c.0.s8 %v3588
    %v3590 = vperm.slane %v3582, %v3589
    %v3591 = vrot.slane %v3586, 4
    %v3592 = vsel %vm168, %v3591, %v3574
    %v3593 = vrot.slane %v3574, 4
    %v3594 = vsel %vm168, %v3586, %v3593
    %v3596 = vunpack.c.l.s4 1934713408
    %v3597 = vunpack.c.0.s8 %v3596
    %v3598 = vperm.slane %v3592, %v3597
    %v3600 = vunpack.c.l.s4 1934713408
    %v3601 = vunpack.c.0.s8 %v3600
    %v3602 = vperm.slane %v3594, %v3601
    %v3603 = vrot.slane %v3590, 4
    %v3604 = vsel %vm168, %v3603, %v3578
    %v3605 = vrot.slane %v3578, 4
    %v3606 = vsel %vm168, %v3590, %v3605
    %v3608 = vunpack.c.l.s4 1934713408
    %v3609 = vunpack.c.0.s8 %v3608
    %v3610 = vperm.slane %v3604, %v3609
    %v3612 = vunpack.c.l.s4 1934713408
    %v3613 = vunpack.c.0.s8 %v3612
    %v3614 = vperm.slane %v3606, %v3613
    %v3615 = vrot.slane %v3598, 4
    %v3616 = vsel %vm168, 0.0, %v3615
    %v3617 = vrot.slane %v3602, 4
    %v3618 = vsel %vm168, 0.0, %v3617
    %v3619 = vrot.slane %v3610, 4
    %v3620 = vsel %vm168, 0.0, %v3619
    %v3621 = vrot.slane %v3614, 4
    %v3622 = vsel %vm168, 0.0, %v3621
    %3624 = vrot.lane.b32.xlu0 %v3560, 16
    %v3625 = vpop.permute.xlu0 %3624
    %3628 = vrot.lane.b32.xlu0 %v3546, 32
    %v3629 = vpop.permute.xlu0 %3628
    %3632 = vrot.lane.b32.xlu0 %v3562, 48
    %v3633 = vpop.permute.xlu0 %3632
    %3636 = vrot.lane.b32.xlu0 %v3554, 64
    %v3637 = vpop.permute.xlu0 %3636
    %3640 = vrot.lane.b32.xlu0 %v3564, 80
    %v3641 = vpop.permute.xlu0 %3640
    %3644 = vrot.lane.b32.xlu0 %v3558, 96
    %v3645 = vpop.permute.xlu0 %3644
    %3648 = vrot.lane.b32.xlu0 %v3566, 112
    %v3649 = vpop.permute.xlu0 %3648
    %3652 = vrot.lane.b32.xlu0 %v3616, 16
    %v3653 = vpop.permute.xlu0 %3652
    %3656 = vrot.lane.b32.xlu0 %v3602, 32
    %v3657 = vpop.permute.xlu0 %3656
    %3660 = vrot.lane.b32.xlu0 %v3618, 48
    %v3661 = vpop.permute.xlu0 %3660
    %3664 = vrot.lane.b32.xlu0 %v3610, 64
    %v3665 = vpop.permute.xlu0 %3664
    %3668 = vrot.lane.b32.xlu0 %v3620, 80
    %v3669 = vpop.permute.xlu0 %3668
    %3672 = vrot.lane.b32.xlu0 %v3614, 96
    %v3673 = vpop.permute.xlu0 %3672
    %3676 = vrot.lane.b32.xlu0 %v3622, 112
    %v3677 = vpop.permute.xlu0 %3676
    %v3679 = vsel %vm336, %v3542, %v3625
    %v3680 = vsel %vm338, %v3679, %v3629
    %v3681 = vsel %vm340, %v3680, %v3633
    %v3682 = vsel %vm342, %v3681, %v3637
    %v3683 = vsel %vm344, %v3682, %v3641
    %v3684 = vsel %vm346, %v3683, %v3645
    %v3685 = vsel %vm348, %v3684, %v3649
    %v3686 = vsel %vm336, %v3598, %v3653
    %v3687 = vsel %vm338, %v3686, %v3657
    %v3688 = vsel %vm340, %v3687, %v3661
    %v3689 = vsel %vm342, %v3688, %v3665
    %v3690 = vsel %vm344, %v3689, %v3669
    %v3691 = vsel %vm346, %v3690, %v3673
    %v3692 = vsel %vm348, %v3691, %v3677
    %3693 = vrot.lane.b32.xlu0 %v3485, 127
    %v3694 = vpop.permute.xlu0 %3693
    %3695 = vrot.lane.b32.xlu0 %v3487, 127
    %v3696 = vpop.permute.xlu0 %3695
    %3697 = vrot.lane.b32.xlu0 %v3490, 127
    %v3698 = vpop.permute.xlu0 %3697
    %3699 = vrot.lane.b32.xlu0 %v3492, 127
    %v3700 = vpop.permute.xlu0 %3699
    %3701 = vrot.lane.b32.xlu0 %v3495, 127
    %v3702 = vpop.permute.xlu0 %3701
    %3703 = vrot.lane.b32.xlu0 %v3497, 127
    %v3704 = vpop.permute.xlu0 %3703
    %3705 = vrot.lane.b32.xlu0 %v3500, 127
    %v3706 = vpop.permute.xlu0 %3705
    %3707 = vrot.lane.b32.xlu0 %v3502, 127
    %v3708 = vpop.permute.xlu0 %3707
    %v3717 = vrot.slane %v3702, 4
    %v3718 = vsel %vm168, %v3717, %v3694
    %v3719 = vrot.slane %v3694, 4
    %v3720 = vsel %vm168, %v3702, %v3719
    %v3722 = vunpack.c.l.s4 1983009808
    %v3723 = vunpack.c.0.s8 %v3722
    %v3724 = vperm.slane %v3718, %v3723
    %v3726 = vunpack.c.l.s4 1983009808
    %v3727 = vunpack.c.0.s8 %v3726
    %v3728 = vperm.slane %v3720, %v3727
    %v3729 = vrot.slane %v3706, 4
    %v3730 = vsel %vm168, %v3729, %v3698
    %v3731 = vrot.slane %v3698, 4
    %v3732 = vsel %vm168, %v3706, %v3731
    %v3734 = vunpack.c.l.s4 1983009808
    %v3735 = vunpack.c.0.s8 %v3734
    %v3736 = vperm.slane %v3730, %v3735
    %v3738 = vunpack.c.l.s4 1983009808
    %v3739 = vunpack.c.0.s8 %v3738
    %v3740 = vperm.slane %v3732, %v3739
    %v3741 = vrot.slane %v3736, 4
    %v3742 = vsel %vm168, %v3741, %v3724
    %v3743 = vrot.slane %v3724, 4
    %v3744 = vsel %vm168, %v3736, %v3743
    %v3746 = vunpack.c.l.s4 1934713408
    %v3747 = vunpack.c.0.s8 %v3746
    %v3748 = vperm.slane %v3742, %v3747
    %v3750 = vunpack.c.l.s4 1934713408
    %v3751 = vunpack.c.0.s8 %v3750
    %v3752 = vperm.slane %v3744, %v3751
    %v3753 = vrot.slane %v3740, 4
    %v3754 = vsel %vm168, %v3753, %v3728
    %v3755 = vrot.slane %v3728, 4
    %v3756 = vsel %vm168, %v3740, %v3755
    %v3758 = vunpack.c.l.s4 1934713408
    %v3759 = vunpack.c.0.s8 %v3758
    %v3760 = vperm.slane %v3754, %v3759
    %v3762 = vunpack.c.l.s4 1934713408
    %v3763 = vunpack.c.0.s8 %v3762
    %v3764 = vperm.slane %v3756, %v3763
    %v3765 = vrot.slane %v3748, 4
    %v3766 = vsel %vm168, 0.0, %v3765
    %v3767 = vrot.slane %v3752, 4
    %v3768 = vsel %vm168, 0.0, %v3767
    %v3769 = vrot.slane %v3760, 4
    %v3770 = vsel %vm168, 0.0, %v3769
    %v3771 = vrot.slane %v3764, 4
    %v3772 = vsel %vm168, 0.0, %v3771
    %v3773 = vrot.slane %v3704, 4
    %v3774 = vsel %vm168, %v3773, %v3696
    %v3775 = vrot.slane %v3696, 4
    %v3776 = vsel %vm168, %v3704, %v3775
    %v3778 = vunpack.c.l.s4 1983009808
    %v3779 = vunpack.c.0.s8 %v3778
    %v3780 = vperm.slane %v3774, %v3779
    %v3782 = vunpack.c.l.s4 1983009808
    %v3783 = vunpack.c.0.s8 %v3782
    %v3784 = vperm.slane %v3776, %v3783
    %v3785 = vrot.slane %v3708, 4
    %v3786 = vsel %vm168, %v3785, %v3700
    %v3787 = vrot.slane %v3700, 4
    %v3788 = vsel %vm168, %v3708, %v3787
    %v3790 = vunpack.c.l.s4 1983009808
    %v3791 = vunpack.c.0.s8 %v3790
    %v3792 = vperm.slane %v3786, %v3791
    %v3794 = vunpack.c.l.s4 1983009808
    %v3795 = vunpack.c.0.s8 %v3794
    %v3796 = vperm.slane %v3788, %v3795
    %v3797 = vrot.slane %v3792, 4
    %v3798 = vsel %vm168, %v3797, %v3780
    %v3799 = vrot.slane %v3780, 4
    %v3800 = vsel %vm168, %v3792, %v3799
    %v3802 = vunpack.c.l.s4 1934713408
    %v3803 = vunpack.c.0.s8 %v3802
    %v3804 = vperm.slane %v3798, %v3803
    %v3806 = vunpack.c.l.s4 1934713408
    %v3807 = vunpack.c.0.s8 %v3806
    %v3808 = vperm.slane %v3800, %v3807
    %v3809 = vrot.slane %v3796, 4
    %v3810 = vsel %vm168, %v3809, %v3784
    %v3811 = vrot.slane %v3784, 4
    %v3812 = vsel %vm168, %v3796, %v3811
    %v3814 = vunpack.c.l.s4 1934713408
    %v3815 = vunpack.c.0.s8 %v3814
    %v3816 = vperm.slane %v3810, %v3815
    %v3818 = vunpack.c.l.s4 1934713408
    %v3819 = vunpack.c.0.s8 %v3818
    %v3820 = vperm.slane %v3812, %v3819
    %v3821 = vrot.slane %v3804, 4
    %v3822 = vsel %vm168, 0.0, %v3821
    %v3823 = vrot.slane %v3808, 4
    %v3824 = vsel %vm168, 0.0, %v3823
    %v3825 = vrot.slane %v3816, 4
    %v3826 = vsel %vm168, 0.0, %v3825
    %v3827 = vrot.slane %v3820, 4
    %v3828 = vsel %vm168, 0.0, %v3827
    %3830 = vrot.lane.b32.xlu0 %v3766, 16
    %v3831 = vpop.permute.xlu0 %3830
    %3834 = vrot.lane.b32.xlu0 %v3752, 32
    %v3835 = vpop.permute.xlu0 %3834
    %3838 = vrot.lane.b32.xlu0 %v3768, 48
    %v3839 = vpop.permute.xlu0 %3838
    %3842 = vrot.lane.b32.xlu0 %v3760, 64
    %v3843 = vpop.permute.xlu0 %3842
    %3846 = vrot.lane.b32.xlu0 %v3770, 80
    %v3847 = vpop.permute.xlu0 %3846
    %3850 = vrot.lane.b32.xlu0 %v3764, 96
    %v3851 = vpop.permute.xlu0 %3850
    %3854 = vrot.lane.b32.xlu0 %v3772, 112
    %v3855 = vpop.permute.xlu0 %3854
    %3858 = vrot.lane.b32.xlu0 %v3822, 16
    %v3859 = vpop.permute.xlu0 %3858
    %3862 = vrot.lane.b32.xlu0 %v3808, 32
    %v3863 = vpop.permute.xlu0 %3862
    %3866 = vrot.lane.b32.xlu0 %v3824, 48
    %v3867 = vpop.permute.xlu0 %3866
    %3870 = vrot.lane.b32.xlu0 %v3816, 64
    %v3871 = vpop.permute.xlu0 %3870
    %3874 = vrot.lane.b32.xlu0 %v3826, 80
    %v3875 = vpop.permute.xlu0 %3874
    %3878 = vrot.lane.b32.xlu0 %v3820, 96
    %v3879 = vpop.permute.xlu0 %3878
    %3882 = vrot.lane.b32.xlu0 %v3828, 112
    %v3883 = vpop.permute.xlu0 %3882
    %v3885 = vsel %vm336, %v3748, %v3831
    %v3886 = vsel %vm338, %v3885, %v3835
    %v3887 = vsel %vm340, %v3886, %v3839
    %v3888 = vsel %vm342, %v3887, %v3843
    %v3889 = vsel %vm344, %v3888, %v3847
    %v3890 = vsel %vm346, %v3889, %v3851
    %v3891 = vsel %vm348, %v3890, %v3855
    %v3892 = vsel %vm336, %v3804, %v3859
    %v3893 = vsel %vm338, %v3892, %v3863
    %v3894 = vsel %vm340, %v3893, %v3867
    %v3895 = vsel %vm342, %v3894, %v3871
    %v3896 = vsel %vm344, %v3895, %v3875
    %v3897 = vsel %vm346, %v3896, %v3879
    %v3898 = vsel %vm348, %v3897, %v3883
    %3899 = vrot.lane.b32.xlu0 %v3485, 126
    %v3900 = vpop.permute.xlu0 %3899
    %3901 = vrot.lane.b32.xlu0 %v3487, 126
    %v3902 = vpop.permute.xlu0 %3901
    %3903 = vrot.lane.b32.xlu0 %v3490, 126
    %v3904 = vpop.permute.xlu0 %3903
    %3905 = vrot.lane.b32.xlu0 %v3492, 126
    %v3906 = vpop.permute.xlu0 %3905
    %3907 = vrot.lane.b32.xlu0 %v3495, 126
    %v3908 = vpop.permute.xlu0 %3907
    %3909 = vrot.lane.b32.xlu0 %v3497, 126
    %v3910 = vpop.permute.xlu0 %3909
    %3911 = vrot.lane.b32.xlu0 %v3500, 126
    %v3912 = vpop.permute.xlu0 %3911
    %3913 = vrot.lane.b32.xlu0 %v3502, 126
    %v3914 = vpop.permute.xlu0 %3913
    %v3923 = vrot.slane %v3908, 4
    %v3924 = vsel %vm168, %v3923, %v3900
    %v3925 = vrot.slane %v3900, 4
    %v3926 = vsel %vm168, %v3908, %v3925
    %v3928 = vunpack.c.l.s4 1983009808
    %v3929 = vunpack.c.0.s8 %v3928
    %v3930 = vperm.slane %v3924, %v3929
    %v3932 = vunpack.c.l.s4 1983009808
    %v3933 = vunpack.c.0.s8 %v3932
    %v3934 = vperm.slane %v3926, %v3933
    %v3935 = vrot.slane %v3912, 4
    %v3936 = vsel %vm168, %v3935, %v3904
    %v3937 = vrot.slane %v3904, 4
    %v3938 = vsel %vm168, %v3912, %v3937
    %v3940 = vunpack.c.l.s4 1983009808
    %v3941 = vunpack.c.0.s8 %v3940
    %v3942 = vperm.slane %v3936, %v3941
    %v3944 = vunpack.c.l.s4 1983009808
    %v3945 = vunpack.c.0.s8 %v3944
    %v3946 = vperm.slane %v3938, %v3945
    %v3947 = vrot.slane %v3942, 4
    %v3948 = vsel %vm168, %v3947, %v3930
    %v3949 = vrot.slane %v3930, 4
    %v3950 = vsel %vm168, %v3942, %v3949
    %v3952 = vunpack.c.l.s4 1934713408
    %v3953 = vunpack.c.0.s8 %v3952
    %v3954 = vperm.slane %v3948, %v3953
    %v3956 = vunpack.c.l.s4 1934713408
    %v3957 = vunpack.c.0.s8 %v3956
    %v3958 = vperm.slane %v3950, %v3957
    %v3959 = vrot.slane %v3946, 4
    %v3960 = vsel %vm168, %v3959, %v3934
    %v3961 = vrot.slane %v3934, 4
    %v3962 = vsel %vm168, %v3946, %v3961
    %v3964 = vunpack.c.l.s4 1934713408
    %v3965 = vunpack.c.0.s8 %v3964
    %v3966 = vperm.slane %v3960, %v3965
    %v3968 = vunpack.c.l.s4 1934713408
    %v3969 = vunpack.c.0.s8 %v3968
    %v3970 = vperm.slane %v3962, %v3969
    %v3971 = vrot.slane %v3954, 4
    %v3972 = vsel %vm168, 0.0, %v3971
    %v3973 = vrot.slane %v3958, 4
    %v3974 = vsel %vm168, 0.0, %v3973
    %v3975 = vrot.slane %v3966, 4
    %v3976 = vsel %vm168, 0.0, %v3975
    %v3977 = vrot.slane %v3970, 4
    %v3978 = vsel %vm168, 0.0, %v3977
    %v3979 = vrot.slane %v3910, 4
    %v3980 = vsel %vm168, %v3979, %v3902
    %v3981 = vrot.slane %v3902, 4
    %v3982 = vsel %vm168, %v3910, %v3981
    %v3984 = vunpack.c.l.s4 1983009808
    %v3985 = vunpack.c.0.s8 %v3984
    %v3986 = vperm.slane %v3980, %v3985
    %v3988 = vunpack.c.l.s4 1983009808
    %v3989 = vunpack.c.0.s8 %v3988
    %v3990 = vperm.slane %v3982, %v3989
    %v3991 = vrot.slane %v3914, 4
    %v3992 = vsel %vm168, %v3991, %v3906
    %v3993 = vrot.slane %v3906, 4
    %v3994 = vsel %vm168, %v3914, %v3993
    %v3996 = vunpack.c.l.s4 1983009808
    %v3997 = vunpack.c.0.s8 %v3996
    %v3998 = vperm.slane %v3992, %v3997
    %v4000 = vunpack.c.l.s4 1983009808
    %v4001 = vunpack.c.0.s8 %v4000
    %v4002 = vperm.slane %v3994, %v4001
    %v4003 = vrot.slane %v3998, 4
    %v4004 = vsel %vm168, %v4003, %v3986
    %v4005 = vrot.slane %v3986, 4
    %v4006 = vsel %vm168, %v3998, %v4005
    %v4008 = vunpack.c.l.s4 1934713408
    %v4009 = vunpack.c.0.s8 %v4008
    %v4010 = vperm.slane %v4004, %v4009
    %v4012 = vunpack.c.l.s4 1934713408
    %v4013 = vunpack.c.0.s8 %v4012
    %v4014 = vperm.slane %v4006, %v4013
    %v4015 = vrot.slane %v4002, 4
    %v4016 = vsel %vm168, %v4015, %v3990
    %v4017 = vrot.slane %v3990, 4
    %v4018 = vsel %vm168, %v4002, %v4017
    %v4020 = vunpack.c.l.s4 1934713408
    %v4021 = vunpack.c.0.s8 %v4020
    %v4022 = vperm.slane %v4016, %v4021
    %v4024 = vunpack.c.l.s4 1934713408
    %v4025 = vunpack.c.0.s8 %v4024
    %v4026 = vperm.slane %v4018, %v4025
    %v4027 = vrot.slane %v4010, 4
    %v4028 = vsel %vm168, 0.0, %v4027
    %v4029 = vrot.slane %v4014, 4
    %v4030 = vsel %vm168, 0.0, %v4029
    %v4031 = vrot.slane %v4022, 4
    %v4032 = vsel %vm168, 0.0, %v4031
    %v4033 = vrot.slane %v4026, 4
    %v4034 = vsel %vm168, 0.0, %v4033
    %4036 = vrot.lane.b32.xlu0 %v3972, 16
    %v4037 = vpop.permute.xlu0 %4036
    %4040 = vrot.lane.b32.xlu0 %v3958, 32
    %v4041 = vpop.permute.xlu0 %4040
    %4044 = vrot.lane.b32.xlu0 %v3974, 48
    %v4045 = vpop.permute.xlu0 %4044
    %4048 = vrot.lane.b32.xlu0 %v3966, 64
    %v4049 = vpop.permute.xlu0 %4048
    %4052 = vrot.lane.b32.xlu0 %v3976, 80
    %v4053 = vpop.permute.xlu0 %4052
    %4056 = vrot.lane.b32.xlu0 %v3970, 96
    %v4057 = vpop.permute.xlu0 %4056
    %4060 = vrot.lane.b32.xlu0 %v3978, 112
    %v4061 = vpop.permute.xlu0 %4060
    %4064 = vrot.lane.b32.xlu0 %v4028, 16
    %v4065 = vpop.permute.xlu0 %4064
    %4068 = vrot.lane.b32.xlu0 %v4014, 32
    %v4069 = vpop.permute.xlu0 %4068
    %4072 = vrot.lane.b32.xlu0 %v4030, 48
    %v4073 = vpop.permute.xlu0 %4072
    %4076 = vrot.lane.b32.xlu0 %v4022, 64
    %v4077 = vpop.permute.xlu0 %4076
    %4080 = vrot.lane.b32.xlu0 %v4032, 80
    %v4081 = vpop.permute.xlu0 %4080
    %4084 = vrot.lane.b32.xlu0 %v4026, 96
    %v4085 = vpop.permute.xlu0 %4084
    %4088 = vrot.lane.b32.xlu0 %v4034, 112
    %v4089 = vpop.permute.xlu0 %4088
    %v4091 = vsel %vm336, %v3954, %v4037
    %v4092 = vsel %vm338, %v4091, %v4041
    %v4093 = vsel %vm340, %v4092, %v4045
    %v4094 = vsel %vm342, %v4093, %v4049
    %v4095 = vsel %vm344, %v4094, %v4053
    %v4096 = vsel %vm346, %v4095, %v4057
    %v4097 = vsel %vm348, %v4096, %v4061
    %v4098 = vsel %vm336, %v4010, %v4065
    %v4099 = vsel %vm338, %v4098, %v4069
    %v4100 = vsel %vm340, %v4099, %v4073
    %v4101 = vsel %vm342, %v4100, %v4077
    %v4102 = vsel %vm344, %v4101, %v4081
    %v4103 = vsel %vm346, %v4102, %v4085
    %v4104 = vsel %vm348, %v4103, %v4089
    %v4107 = vrot.slane %v2643, 4
    %v4108 = vrot.slane %v2650, 4
    %v4113 = vrot.slane %v3063, 4
    %v4114 = vrot.slane %v3070, 4
    %v4119 = vrot.slane %v3475, 4
    %v4120 = vrot.slane %v3482, 4
    %v4125 = vrot.slane %v3891, 4
    %v4126 = vrot.slane %v3898, 4
    %v4129 = vsel %vm2047, %v2433, %v4107
    %v4130 = vsel %vm2047, %v2440, %v4108
    %v4131 = vsel %vm2047, %v2849, %v4113
    %v4132 = vsel %vm2047, %v2856, %v4114
    %v4133 = vsel %vm2047, %v3269, %v4119
    %v4134 = vsel %vm2047, %v3276, %v4120
    %v4135 = vsel %vm2047, %v3685, %v4125
    %v4136 = vsel %vm2047, %v3692, %v4126
    %v4138 = vsel %vm2047, %v4097, 0
    %v4141 = vsel %vm2047, %v4104, 0
    %4143 = vmatpush.msra.mxu0 0.0
    %4144 = vmatpush.msra.mxu0 0.0
    %4145 = vmatpush.msra.mxu0 0.0
    %4146 = vmatpush.msra.mxu0 0.0
    %4147 = vmatpush.msra.mxu0 0.0
    %4148 = vmatpush.msra.mxu0 0.0
    %4149 = vmatpush.msra.mxu0 0.0
    %4150 = vmatpush.msra.mxu0 0.0
    %4151 = vmatpush.msra.mxu0 0.0
    %4152 = vmatpush.msra.mxu0 0.0
    %4153 = vmatpush.msra.mxu0 0.0
    %4154 = vmatpush.msra.mxu0 %v4138
    %4155 = vmatpush.msra.mxu0 %v4135
    %4156 = vmatpush.msra.mxu0 %v4133
    %4157 = vmatpush.msra.mxu0 %v4131
    %4158 = vmatpush.msra.mxu0 %v4129
    %4159 = vmatmul.f32.gmra.mxu0 %v2063
    %v4160 = vpop.f32.mrf.mxu0
    %v4161 = vadd.f32 %v2059, %v4160
    %4162 = vdwg.mxu0
    %4163 = vmatpush.msra.mxu0 0.0
    %4164 = vmatpush.msra.mxu0 0.0
    %4165 = vmatpush.msra.mxu0 0.0
    %4166 = vmatpush.msra.mxu0 0.0
    %4167 = vmatpush.msra.mxu0 0.0
    %4168 = vmatpush.msra.mxu0 0.0
    %4169 = vmatpush.msra.mxu0 0.0
    %4170 = vmatpush.msra.mxu0 0.0
    %4171 = vmatpush.msra.mxu0 0.0
    %4172 = vmatpush.msra.mxu0 0.0
    %4173 = vmatpush.msra.mxu0 0.0
    %4174 = vmatpush.msra.mxu0 %v4141
    %4175 = vmatpush.msra.mxu0 %v4136
    %4176 = vmatpush.msra.mxu0 %v4134
    %4177 = vmatpush.msra.mxu0 %v4132
    %4178 = vmatpush.msra.mxu0 %v4130
    %4179 = vmatmul.f32.gmra.mxu0 %v2063
    %v4180 = vpop.f32.mrf.mxu0
    %v4181 = vadd.f32 %v2059, %v4180
    %4182 = vdwg.mxu0
    %v4183 = vadd.f32 %v4161, %v4181
    %4184 = vadd.xlane.f32.xlu0 %v4183
    %v4185 = vpop.xlane.xlu0 %4184
    %v4186 = vmul.f32 %v4161, %v4161
    %v4187 = vmul.f32 %v4181, %v4181
    %v4188 = vadd.f32 %v4186, %v4187
    %4189 = vadd.xlane.f32.xlu0 %v4188
    %v4190 = vpop.xlane.xlu0 %4189
    %v4191 = vmul.f32 %v4185, 0.00390625
    %v4192 = vmul.f32 %v4190, 0.00390625
    %v4193 = vmul.f32 %v4191, %v4191
    %v4194 = vsub.f32 %v4192, %v4193
    %v4195 = vmax.f32 %v4194, 0.0
    %v4196 = vadd.f32 %v4195, 1e-05
    %v4197 = vrsqrt.pop %v4196
    %v4198 = vmul.f32 %v4197, %v4196
    %v4199 = vmul.f32 %v4198, %v4197
    %v4200 = vmul.f32 0.5, %v4199
    %v4201 = vsub.f32 1.5, %v4200
    %v4202 = vmul.f32 %v4197, %v4201
    %vm4203 = vweird.f32 %v4196
    %vm4204 = vweird.f32 %v4197
    %vm4205 = vmor %vm4203, %vm4204
    %v4206 = vsel %vm4205, %v4197, %v4202
    %v4207 = vsub.f32 0.0, %v4191
    %v4208 = vmul.f32 %v4207, %v4206
    %v4209 = vmul.f32 %v4161, %v4206
    %v4210 = vmul.f32 %v4181, %v4206
    %v4211 = vadd.f32 %v4209, %v4208
    %v4212 = vadd.f32 %v4210, %v4208
    %v4213 = vmax.f32 %v4211, 0.0
    %v4214 = vmax.f32 %v4212, 0.0
    %s4215 = scalar_lea.vmem [#allocation7], 16
    %4216 = vst [vmem:[%s4215] sm:$0xff] %v4213
    %4217 = vst [vmem:[%s4215 + $0x8] sm:$0xff] %v4214
    // Predicated region
    $region26: #{tpu_custom_call.1} parent=1 // pred_check
      _
    $region27: #{tpu_custom_call.1} parent=1 // pred_check_branch
      %4219 = sbr.rel (0) target = $region29
    $region28: #{tpu_custom_call.1} parent=1 // pred_region
      %4221 = vsyncadd [#allocation4], 0
      %s4222 = sshll.u32 [#allocation7], 4
      %s4223 = int_to_ptr.vmem [resolvable:$true] %s4222
      %s4224 = sshll.u32 %s4, 4
      %s4225 = int_to_ptr.hbm [resolvable:$true] %s4224
      %4230 = dma.vmem_to_hbm [thread:$0]  %s4223, 512, %s4225, [#allocation4], 256, 256, 16
    $region29: #{tpu_custom_call.1} parent=1 // pred_fallthru
      _
    // Predicated region
    $region30: #{tpu_custom_call.1} parent=1 // pred_check
      _
    $region31: #{tpu_custom_call.1} parent=1 // pred_check_branch
      %4232 = sbr.rel (0) target = $region33
    $region32: #{tpu_custom_call.1} parent=1 // pred_region
      %4234 = dma.done [#allocation4], 512
    $region33: #{tpu_custom_call.1} parent=1 // pred_fallthru
      _
    %4235 = vsyncpa [#allocation3], 1
    %4236 = vsyncpa [#allocation6], 1
    %4237 = vsyncpa [#allocation4], 1

</llo_original>
